<compile_context>
chip_gen: v7x
topology: tpu7x:2x2x1
jax: 0.10.0
libtpu: 0.0.40
codegen_flags: <defaults>
</compile_context>

<pallas_src>
import jax
import jax.numpy as jnp
from jax import lax
from jax.experimental import pallas as pl
from jax.experimental.pallas import tpu as pltpu

Z_DIM = 16
DIM_RNN = 128
FEAT_DIM = 512      # Lipreading feature dim (mlp_x_gx input is Linear(512, 256))
DENSE_X_GX = 256


def _row_block(n):
    """Largest convenient row tile that evenly divides n (else full array)."""
    for blk in (512, 256, 128, 64, 32, 16, 8):
        if n % blk == 0:
            return blk
    return n


# -----------------------------------------------------------------------------
# Kernels
# -----------------------------------------------------------------------------
def _frontend_kernel(v_ref, wx_ref, bx_ref, wih_ref, bih_ref, o_ref):
    # x_g = tanh(v @ Wxgx + b);  gates_pre = x_g @ Wih + b_lstm   (one MXU pass)
    xg = jnp.tanh(
        jnp.dot(v_ref[...], wx_ref[...], preferred_element_type=jnp.float32)
        + bx_ref[...])
    o_ref[...] = (
        jnp.dot(xg, wih_ref[...], preferred_element_type=jnp.float32)
        + bih_ref[...])


def _recurrent_kernel(gates_ref, eps_ref, whh_ref,
                      w1, b1, w2, b2, w3, b3,          # mlp_ztm1_g : 16->32->64->128 (tanh)
                      wg1, bg1, wg2, bg2,              # mlp_g_z    : 128->64->32 (tanh)
                      wmv, bmv,                        # fused [inf_mean | inf_logvar] : 32->32
                      zpack_ref,                       # (T, B, 4*Z_DIM): [z | z_tm1 | z_mean | z_logvar]
                      g_sc):
    t_len, bsz, _ = gates_ref.shape
    hid = whh_ref.shape[0]
    whh = whh_ref[...]

    # ---- backward LSTM (torch.flip folded into the index: t = T-1-i) --------
    def lstm_step(i, carry):
        h, c = carry
        t = t_len - 1 - i
        gates = gates_ref[t] + jnp.dot(h, whh, preferred_element_type=jnp.float32)
        ig = jax.nn.sigmoid(gates[:, 0:hid])
        fg = jax.nn.sigmoid(gates[:, hid:2 * hid])
        gg = jnp.tanh(gates[:, 2 * hid:3 * hid])
        og = jax.nn.sigmoid(gates[:, 3 * hid:4 * hid])
        c_new = fg * c + ig * gg
        h_new = og * jnp.tanh(c_new)
        g_sc[t] = h_new                       # already at un-flipped position
        return (h_new, c_new)

    h0 = jnp.zeros((bsz, hid), jnp.float32)
    c0 = jnp.zeros((bsz, hid), jnp.float32)
    lax.fori_loop(0, t_len, lstm_step, (h0, c0))

    # ---- forward DKF inference recurrence -----------------------------------
    w1v, w2v, w3v = w1[...], w2[...], w3[...]
    b1v, b2v, b3v = b1[...], b2[...], b3[...]
    wg1v, wg2v = wg1[...], wg2[...]
    bg1v, bg2v = bg1[...], bg2[...]
    wmvv, bmvv = wmv[...], bmv[...]

    def inf_step(t, z_t):
        h = jnp.tanh(jnp.dot(z_t, w1v, preferred_element_type=jnp.float32) + b1v)
        h = jnp.tanh(jnp.dot(h, w2v, preferred_element_type=jnp.float32) + b2v)
        h = jnp.tanh(jnp.dot(h, w3v, preferred_element_type=jnp.float32) + b3v)
        g_t = (h + g_sc[t]) * 0.5                                   # (ztm1_g + g_t) / 2
        gz = jnp.tanh(jnp.dot(g_t, wg1v, preferred_element_type=jnp.float32) + bg1v)
        gz = jnp.tanh(jnp.dot(gz, wg2v, preferred_element_type=jnp.float32) + bg2v)
        mv = jnp.dot(gz, wmvv, preferred_element_type=jnp.float32) + bmvv   # [mean|logvar]
        zm = mv[:, :Z_DIM]
        zlv = mv[:, Z_DIM:]
        z_new = zm + eps_ref[t] * jnp.exp(0.5 * zlv)                # reparameterization
        # single lane-packed store: [z, z_{t-1}, z_mean, z_logvar]  (z_{-1} = 0)
        zpack_ref[t] = jnp.concatenate([z_new, z_t, mv], axis=-1)
        return z_new

    z0 = jnp.zeros((bsz, Z_DIM), jnp.float32)
    lax.fori_loop(0, t_len, inf_step, z0)


def _generation_kernel(z_ref, ztm1_ref,
                       zg_w0, zg_b0,                    # fused [gate_l1 | prop_l1 | prior_mean]
                       gw2, gb2, pw2, pb2,              # gate l2 (sigmoid), prop l2
                       plw, plb,                        # prior_logvar (ReLU->Linear->Softplus)
                       xw1, xb1, xw2, xb2, xw3, xb3, xw4, xb4,  # mlp_z_x
                       ow, ob,                          # gen_logvar
                       y_ref, zp_ref):
    # ---- generation_z on z_{t-1} --------------------------------------------
    ztm1 = ztm1_ref[...]
    h0 = jnp.dot(ztm1, zg_w0[...], preferred_element_type=jnp.float32) + zg_b0[...]
    gate_h = jax.nn.relu(h0[:, 0:Z_DIM])
    prop_h = jax.nn.relu(h0[:, Z_DIM:2 * Z_DIM])
    prior_m = h0[:, 2 * Z_DIM:3 * Z_DIM]
    gate = jax.nn.sigmoid(
        jnp.dot(gate_h, gw2[...], preferred_element_type=jnp.float32) + gb2[...])
    z_prop = jnp.dot(prop_h, pw2[...], preferred_element_type=jnp.float32) + pb2[...]
    zmp = (1.0 - gate) * prior_m + gate * z_prop
    z_var_p = jax.nn.softplus(
        jnp.dot(jax.nn.relu(z_prop), plw[...], preferred_element_type=jnp.float32)
        + plb[...])
    # floor avoids -inf when softplus underflows (torch would produce -inf)
    zlvp = jnp.log(jnp.maximum(z_var_p, 1e-37))
    zp_ref[...] = jnp.concatenate([zmp, zlvp], axis=-1)   # [z_mean_p | z_logvar_p]

    # ---- generation_x on z ---------------------------------------------------
    z = z_ref[...]
    h = jnp.tanh(jnp.dot(z, xw1[...], preferred_element_type=jnp.float32) + xb1[...])
    h = jnp.tanh(jnp.dot(h, xw2[...], preferred_element_type=jnp.float32) + xb2[...])
    h = jnp.tanh(jnp.dot(h, xw3[...], preferred_element_type=jnp.float32) + xb3[...])
    h = jnp.tanh(jnp.dot(h, xw4[...], preferred_element_type=jnp.float32) + xb4[...])
    y_ref[...] = jnp.exp(
        jnp.dot(h, ow[...], preferred_element_type=jnp.float32) + ob[...])


# -----------------------------------------------------------------------------
# Wrappers
# -----------------------------------------------------------------------------
def frontend(v_flat, p):
    n = v_flat.shape[0]
    tb = _row_block(n)
    return pl.pallas_call(
        _frontend_kernel,
        grid=(n // tb,),
        in_specs=[
            pl.BlockSpec((tb, FEAT_DIM), lambda i: (i, 0)),
            pl.BlockSpec(p['xgx_w'].shape, lambda i: (0, 0)),
            pl.BlockSpec(p['xgx_b'].shape, lambda i: (0, 0)),
            pl.BlockSpec(p['lstm_wih'].shape, lambda i: (0, 0)),
            pl.BlockSpec(p['lstm_b'].shape, lambda i: (0, 0)),
        ],
        out_specs=pl.BlockSpec((tb, 4 * DIM_RNN), lambda i: (i, 0)),
        out_shape=jax.ShapeDtypeStruct((n, 4 * DIM_RNN), jnp.float32),
        compiler_params=pltpu.CompilerParams(dimension_semantics=("parallel",)),
    )(v_flat, p['xgx_w'], p['xgx_b'], p['lstm_wih'], p['lstm_b'])


def recurrent(gates_pre, eps, p):
    # TODO(synk): for very long sequences (T*B >~ 30k) chunk T with an outer
    #             "arbitrary" grid axis to stay within v7x's 64 MiB VMEM.
    t_len, bsz, _ = gates_pre.shape
    # fuse inf_mean / inf_logvar into one 32->32 matmul on the serial path
    wmv = jnp.concatenate([p['infm_w'], p['infv_w']], axis=1)
    bmv = jnp.concatenate([p['infm_b'], p['infv_b']], axis=1)
    weights = [p['lstm_whh'],
               p['ztm1_w1'], p['ztm1_b1'], p['ztm1_w2'], p['ztm1_b2'],
               p['ztm1_w3'], p['ztm1_b3'],
               p['gz_w1'], p['gz_b1'], p['gz_w2'], p['gz_b2'],
               wmv, bmv]
    packed = pl.pallas_call(
        _recurrent_kernel,
        out_shape=jax.ShapeDtypeStruct((t_len, bsz, 4 * Z_DIM), jnp.float32),
        scratch_shapes=[pltpu.VMEM((t_len, bsz, DIM_RNN), jnp.float32)],
    )(gates_pre, eps, *weights)
    z = packed[..., 0 * Z_DIM:1 * Z_DIM]
    z_tm1 = packed[..., 1 * Z_DIM:2 * Z_DIM]
    z_mean = packed[..., 2 * Z_DIM:3 * Z_DIM]
    z_logvar = packed[..., 3 * Z_DIM:4 * Z_DIM]
    return z, z_tm1, z_mean, z_logvar


def generation(z_flat, z_tm1_flat, p):
    n = z_flat.shape[0]
    tb = _row_block(n)
    y_dim = p['gen_w'].shape[1]
    # fuse the three first-layer projections of z_{t-1} into one matmul
    zg_w0 = jnp.concatenate([p['gate_w1'], p['prop_w1'], p['pm_w']], axis=1)
    zg_b0 = jnp.concatenate([p['gate_b1'], p['prop_b1'], p['pm_b']], axis=1)
    weights = [zg_w0, zg_b0,
               p['gate_w2'], p['gate_b2'], p['prop_w2'], p['prop_b2'],
               p['plv_w'], p['plv_b'],
               p['zx_w1'], p['zx_b1'], p['zx_w2'], p['zx_b2'],
               p['zx_w3'], p['zx_b3'], p['zx_w4'], p['zx_b4'],
               p['gen_w'], p['gen_b']]
    w_specs = [pl.BlockSpec(w.shape, lambda i: (0, 0)) for w in weights]
    row_z = pl.BlockSpec((tb, Z_DIM), lambda i: (i, 0))
    y, zp = pl.pallas_call(
        _generation_kernel,
        grid=(n // tb,),
        in_specs=[row_z, row_z] + w_specs,
        out_specs=(pl.BlockSpec((tb, y_dim), lambda i: (i, 0)),
                   pl.BlockSpec((tb, 2 * Z_DIM), lambda i: (i, 0))),
        out_shape=(jax.ShapeDtypeStruct((n, y_dim), jnp.float32),
                   jax.ShapeDtypeStruct((n, 2 * Z_DIM), jnp.float32)),
        compiler_params=pltpu.CompilerParams(dimension_semantics=("parallel",)),
    )(z_flat, z_tm1_flat, *weights)
    return y, zp[:, :Z_DIM], zp[:, Z_DIM:]


# -----------------------------------------------------------------------------
# Parameter init (deterministic, PyTorch-Linear-like uniform init)
# -----------------------------------------------------------------------------
def _linear(key, fan_in, fan_out):
    k1, k2 = jax.random.split(key)
    bound = 1.0 / (fan_in ** 0.5)
    w = jax.random.uniform(k1, (fan_in, fan_out), jnp.float32, -bound, bound)
    b = jax.random.uniform(k2, (1, fan_out), jnp.float32, -bound, bound)
    return w, b


def init_params(key, x_dim):
    keys = iter(jax.random.split(key, 32))
    p = {}
    # mlp_x_gx : Linear(512, 256) + tanh
    p['xgx_w'], p['xgx_b'] = _linear(next(keys), FEAT_DIM, DENSE_X_GX)
    # rnn_gx : LSTM(256 -> 128), 1 layer, unidirectional.  PyTorch gate order i,f,g,o.
    k1, k2, k3, k4 = jax.random.split(next(keys), 4)
    bd = 1.0 / (DIM_RNN ** 0.5)
    p['lstm_wih'] = jax.random.uniform(k1, (DENSE_X_GX, 4 * DIM_RNN), jnp.float32, -bd, bd)
    p['lstm_whh'] = jax.random.uniform(k2, (DIM_RNN, 4 * DIM_RNN), jnp.float32, -bd, bd)
    # b = b_ih + b_hh (sum of two independent uniforms, as in PyTorch)
    p['lstm_b'] = (jax.random.uniform(k3, (1, 4 * DIM_RNN), jnp.float32, -bd, bd)
                   + jax.random.uniform(k4, (1, 4 * DIM_RNN), jnp.float32, -bd, bd))
    # mlp_ztm1_g : 16 -> 32 -> 64 -> 128 (tanh)
    p['ztm1_w1'], p['ztm1_b1'] = _linear(next(keys), Z_DIM, 32)
    p['ztm1_w2'], p['ztm1_b2'] = _linear(next(keys), 32, 64)
    p['ztm1_w3'], p['ztm1_b3'] = _linear(next(keys), 64, DIM_RNN)
    # mlp_g_z : 128 -> 64 -> 32 (tanh)
    p['gz_w1'], p['gz_b1'] = _linear(next(keys), DIM_RNN, 64)
    p['gz_w2'], p['gz_b2'] = _linear(next(keys), 64, 32)
    # inf_mean / inf_logvar : 32 -> 16
    p['infm_w'], p['infm_b'] = _linear(next(keys), 32, Z_DIM)
    p['infv_w'], p['infv_b'] = _linear(next(keys), 32, Z_DIM)
    # mlp_gate / mlp_z_prop / prior_mean / prior_logvar
    p['gate_w1'], p['gate_b1'] = _linear(next(keys), Z_DIM, Z_DIM)
    p['gate_w2'], p['gate_b2'] = _linear(next(keys), Z_DIM, Z_DIM)
    p['prop_w1'], p['prop_b1'] = _linear(next(keys), Z_DIM, Z_DIM)
    p['prop_w2'], p['prop_b2'] = _linear(next(keys), Z_DIM, Z_DIM)
    p['pm_w'], p['pm_b'] = _linear(next(keys), Z_DIM, Z_DIM)
    p['plv_w'], p['plv_b'] = _linear(next(keys), Z_DIM, Z_DIM)
    # mlp_z_x : 16 -> 32 -> 64 -> 128 -> 256 (tanh), gen_logvar : 256 -> x_dim
    p['zx_w1'], p['zx_b1'] = _linear(next(keys), Z_DIM, 32)
    p['zx_w2'], p['zx_b2'] = _linear(next(keys), 32, 64)
    p['zx_w3'], p['zx_b3'] = _linear(next(keys), 64, 128)
    p['zx_w4'], p['zx_b4'] = _linear(next(keys), 128, 256)
    p['gen_w'], p['gen_b'] = _linear(next(keys), 256, x_dim)
    return p


# -----------------------------------------------------------------------------
# Forward (mirrors DKF_V.forward with compute_loss=False)
# -----------------------------------------------------------------------------
def dkf_v_forward(x, v_feat, params, rng_key):
    # x       : (B, x_dim, T)  -- only used for shapes when compute_loss=False
    # v_feat  : (T, B, 512)    -- Lipreading output, already permuted time-major
    del x
    t_len, bsz, _ = v_feat.shape
    n = t_len * bsz

    # inference: fused mlp_x_gx + LSTM input projection (batched, one matmul)
    gates_pre = frontend(v_feat.reshape(n, FEAT_DIM), params)
    gates_pre = gates_pre.reshape(t_len, bsz, 4 * DIM_RNN)

    # backward LSTM (flip folded into kernel index) + DKF inference recurrence
    eps = jax.random.normal(rng_key, (t_len, bsz, Z_DIM), jnp.float32)
    z, z_tm1, z_mean, z_logvar = recurrent(gates_pre, eps, params)

    # fused generation_z(z_{t-1}) + generation_x(z), batched over all rows
    y, z_mean_p, z_logvar_p = generation(z.reshape(n, Z_DIM),
                                         z_tm1.reshape(n, Z_DIM), params)
    y = y.reshape(t_len, bsz, -1)
    z_mean_p = z_mean_p.reshape(t_len, bsz, Z_DIM)
    z_logvar_p = z_logvar_p.reshape(t_len, bsz, Z_DIM)

    # y.permute(1, -1, 0).squeeze()  ->  (B, y_dim, T)
    y_out = jnp.squeeze(jnp.transpose(y, (1, 2, 0)))
    aux = {
        'z': jnp.squeeze(jnp.transpose(z, (1, 2, 0))),
        'z_mean': jnp.squeeze(jnp.transpose(z_mean, (1, 2, 0))),
        'z_logvar': jnp.squeeze(jnp.transpose(z_logvar, (1, 2, 0))),
        'z_mean_p': jnp.squeeze(jnp.transpose(z_mean_p, (1, 2, 0))),
        'z_logvar_p': jnp.squeeze(jnp.transpose(z_logvar_p, (1, 2, 0))),
    }
    return y_out, aux


if __name__ == "__main__":
    B, T, X_DIM = 2, 8, 64
    key = jax.random.PRNGKey(0)
    kx, kv, kp, ke = jax.random.split(key, 4)

    x = jax.random.normal(kx, (B, X_DIM, T), jnp.float32)
    # Synthetic Lipreading visual features (the external backbone is not reproducible here).
    v_feat = jax.random.normal(kv, (T, B, FEAT_DIM), jnp.float32)
    params = init_params(kp, X_DIM)

    fwd = jax.jit(dkf_v_forward)
    y, aux = fwd(x, v_feat, params, ke)
    jax.block_until_ready((y, aux))
    assert y.shape == (B, X_DIM, T)
    assert aux['z'].shape == (B, Z_DIM, T)
    assert bool(jnp.all(jnp.isfinite(y)))
    print("KERNEL_OK")
</pallas_src>

<mosaic_0001>
module attributes {stable_mosaic.version = 11 : i64} {
  func.func @_frontend_kernel(%arg0: i32, %arg1: memref<16x512xf32, #tpu.memory_space<vmem>>, %arg2: memref<512x256xf32, #tpu.memory_space<vmem>>, %arg3: memref<1x256xf32, #tpu.memory_space<vmem>>, %arg4: memref<256x512xf32, #tpu.memory_space<vmem>>, %arg5: memref<1x512xf32, #tpu.memory_space<vmem>>, %arg6: memref<16x512xf32, #tpu.memory_space<vmem>>) attributes {dimension_semantics = [#tpu.dimension_semantics<parallel>], iteration_bounds = array<i64: 1>, scalar_prefetch = 0 : i64, scratch_operands = 0 : i64, tpu.core_type = #tpu.core_type<tc>, window_params = [{transform_indices = @transform_0, window_bounds = array<i64: 16, 512>}, {pipeline_mode = #tpu.pipeline_mode<synchronous>, transform_indices = @transform_1, window_bounds = array<i64: 512, 256>}, {pipeline_mode = #tpu.pipeline_mode<synchronous>, transform_indices = @transform_2, window_bounds = array<i64: 1, 256>}, {pipeline_mode = #tpu.pipeline_mode<synchronous>, transform_indices = @transform_3, window_bounds = array<i64: 256, 512>}, {pipeline_mode = #tpu.pipeline_mode<synchronous>, transform_indices = @transform_4, window_bounds = array<i64: 1, 512>}, {transform_indices = @transform_5, window_bounds = array<i64: 16, 512>}]} {
    %c0 = arith.constant 0 : index
    %c0_0 = arith.constant 0 : index
    %0 = vector.load %arg1[%c0, %c0_0] : memref<16x512xf32, #tpu.memory_space<vmem>>, vector<16x512xf32>
    %c0_1 = arith.constant 0 : index
    %c0_2 = arith.constant 0 : index
    %1 = vector.load %arg2[%c0_1, %c0_2] : memref<512x256xf32, #tpu.memory_space<vmem>>, vector<512x256xf32>
    %cst = arith.constant dense<0.000000e+00> : vector<16x256xf32>
    %2 = tpu.matmul %0, %1, %cst {dimension_numbers = #tpu.dot_dimension_numbers<[1], [0], [0], [1], [0, 0, 1, 1], [], []>} : vector<16x512xf32>, vector<512x256xf32>, vector<16x256xf32> -> vector<16x256xf32>
    %c0_3 = arith.constant 0 : index
    %c0_4 = arith.constant 0 : index
    %3 = vector.load %arg3[%c0_3, %c0_4] : memref<1x256xf32, #tpu.memory_space<vmem>>, vector<1x256xf32>
    %4 = vector.broadcast %3 : vector<1x256xf32> to vector<16x256xf32>
    %5 = arith.addf %2, %4 : vector<16x256xf32>
    %6 = math.tanh %5 : vector<16x256xf32>
    %c0_5 = arith.constant 0 : index
    %c0_6 = arith.constant 0 : index
    %7 = vector.load %arg4[%c0_5, %c0_6] : memref<256x512xf32, #tpu.memory_space<vmem>>, vector<256x512xf32>
    %cst_7 = arith.constant dense<0.000000e+00> : vector<16x512xf32>
    %8 = tpu.matmul %6, %7, %cst_7 {dimension_numbers = #tpu.dot_dimension_numbers<[1], [0], [0], [1], [0, 0, 1, 1], [], []>} : vector<16x256xf32>, vector<256x512xf32>, vector<16x512xf32> -> vector<16x512xf32>
    %c0_8 = arith.constant 0 : index
    %c0_9 = arith.constant 0 : index
    %9 = vector.load %arg5[%c0_8, %c0_9] : memref<1x512xf32, #tpu.memory_space<vmem>>, vector<1x512xf32>
    %10 = vector.broadcast %9 : vector<1x512xf32> to vector<16x512xf32>
    %11 = arith.addf %8, %10 : vector<16x512xf32>
    %c0_10 = arith.constant 0 : index
    %c0_11 = arith.constant 0 : index
    %12 = vector.load %arg6[%c0_10, %c0_11] : memref<16x512xf32, #tpu.memory_space<vmem>>, vector<16x512xf32>
    tpu.vector_store %arg6[%c0_10, %c0_11], %11 {strides = array<i32>} : memref<16x512xf32, #tpu.memory_space<vmem>>, vector<16x512xf32>,
    return
  }
  func.func @transform_0(%arg0: i32) -> (i32, i32) {
    %c0_i32 = arith.constant 0 : i32
    %c0_i32_0 = arith.constant 0 : i32
    return %arg0, %c0_i32 : i32, i32
  }
  func.func @transform_1(%arg0: i32) -> (i32, i32) {
    %c0_i32 = arith.constant 0 : i32
    %c0_i32_0 = arith.constant 0 : i32
    %c0_i32_1 = arith.constant 0 : i32
    return %c0_i32, %c0_i32_0 : i32, i32
  }
  func.func @transform_2(%arg0: i32) -> (i32, i32) {
    %c0_i32 = arith.constant 0 : i32
    %c0_i32_0 = arith.constant 0 : i32
    %c0_i32_1 = arith.constant 0 : i32
    return %c0_i32, %c0_i32_0 : i32, i32
  }
  func.func @transform_3(%arg0: i32) -> (i32, i32) {
    %c0_i32 = arith.constant 0 : i32
    %c0_i32_0 = arith.constant 0 : i32
    %c0_i32_1 = arith.constant 0 : i32
    return %c0_i32, %c0_i32_0 : i32, i32
  }
  func.func @transform_4(%arg0: i32) -> (i32, i32) {
    %c0_i32 = arith.constant 0 : i32
    %c0_i32_0 = arith.constant 0 : i32
    %c0_i32_1 = arith.constant 0 : i32
    return %c0_i32, %c0_i32_0 : i32, i32
  }
  func.func @transform_5(%arg0: i32) -> (i32, i32) {
    %c0_i32 = arith.constant 0 : i32
    %c0_i32_0 = arith.constant 0 : i32
    return %arg0, %c0_i32 : i32, i32
  }
}

module attributes {stable_mosaic.version = 11 : i64} {
  func.func @_recurrent_kernel(%arg0: memref<8x2x512xf32, #tpu.memory_space<vmem>>, %arg1: memref<8x2x16xf32, #tpu.memory_space<vmem>>, %arg2: memref<128x512xf32, #tpu.memory_space<vmem>>, %arg3: memref<16x32xf32, #tpu.memory_space<vmem>>, %arg4: memref<1x32xf32, #tpu.memory_space<vmem>>, %arg5: memref<32x64xf32, #tpu.memory_space<vmem>>, %arg6: memref<1x64xf32, #tpu.memory_space<vmem>>, %arg7: memref<64x128xf32, #tpu.memory_space<vmem>>, %arg8: memref<1x128xf32, #tpu.memory_space<vmem>>, %arg9: memref<128x64xf32, #tpu.memory_space<vmem>>, %arg10: memref<1x64xf32, #tpu.memory_space<vmem>>, %arg11: memref<64x32xf32, #tpu.memory_space<vmem>>, %arg12: memref<1x32xf32, #tpu.memory_space<vmem>>, %arg13: memref<32x32xf32, #tpu.memory_space<vmem>>, %arg14: memref<1x32xf32, #tpu.memory_space<vmem>>, %arg15: memref<8x2x64xf32, #tpu.memory_space<vmem>>, %arg16: memref<8x2x128xf32, #tpu.memory_space<vmem>>) attributes {dimension_semantics = [], scalar_prefetch = 0 : i64, scratch_operands = 1 : i64, tpu.core_type = #tpu.core_type<tc>} {
    %c0 = arith.constant 0 : index
    %c0_0 = arith.constant 0 : index
    %0 = vector.load %arg2[%c0, %c0_0] : memref<128x512xf32, #tpu.memory_space<vmem>>, vector<128x512xf32>
    %cst = arith.constant 0.000000e+00 : f32
    %1 = vector.broadcast %cst : f32 to vector<2x128xf32>
    %cst_1 = arith.constant 0.000000e+00 : f32
    %2 = vector.broadcast %cst_1 : f32 to vector<2x128xf32>
    %c0_i32 = arith.constant 0 : i32
    %c8_i32 = arith.constant 8 : i32
    %3 = arith.addi %c0_i32, %c8_i32 : i32
    %c1_i32 = arith.constant 1 : i32
    %4:2 = scf.for %arg17 = %c0_i32 to %3 step %c1_i32 iter_args(%arg18 = %1, %arg19 = %2) -> (vector<2x128xf32>, vector<2x128xf32>)  : i32 {
      %c7_i32 = arith.constant 7 : i32
      %20 = arith.subi %c7_i32, %arg17 : i32
      %21 = arith.index_cast %20 : i32 to index
      %c0_32 = arith.constant 0 : index
      %c0_33 = arith.constant 0 : index
      %22 = vector.load %arg0[%21, %c0_32, %c0_33] : memref<8x2x512xf32, #tpu.memory_space<vmem>>, vector<1x2x512xf32>
      %23 = vector.shape_cast %22 : vector<1x2x512xf32> to vector<2x512xf32>
      %cst_34 = arith.constant dense<0.000000e+00> : vector<2x512xf32>
      %24 = tpu.matmul %arg18, %0, %cst_34 {dimension_numbers = #tpu.dot_dimension_numbers<[1], [0], [0], [1], [0, 0, 1, 1], [], []>} : vector<2x128xf32>, vector<128x512xf32>, vector<2x512xf32> -> vector<2x512xf32>
      %25 = arith.addf %23, %24 : vector<2x512xf32>
      %26 = vector.extract_strided_slice %25 {offsets = [0, 0], sizes = [2, 128], strides = [1, 1]} : vector<2x512xf32> to vector<2x128xf32>
      %27 = arith.negf %26 : vector<2x128xf32>
      %28 = math.exp %27 : vector<2x128xf32>
      %cst_35 = arith.constant 1.000000e+00 : f32
      %29 = vector.broadcast %cst_35 : f32 to vector<2x128xf32>
      %30 = arith.addf %29, %28 : vector<2x128xf32>
      %31 = arith.divf %29, %30 : vector<2x128xf32>
      %32 = vector.extract_strided_slice %25 {offsets = [0, 128], sizes = [2, 128], strides = [1, 1]} : vector<2x512xf32> to vector<2x128xf32>
      %33 = arith.negf %32 : vector<2x128xf32>
      %34 = math.exp %33 : vector<2x128xf32>
      %cst_36 = arith.constant 1.000000e+00 : f32
      %35 = vector.broadcast %cst_36 : f32 to vector<2x128xf32>
      %36 = arith.addf %35, %34 : vector<2x128xf32>
      %37 = arith.divf %35, %36 : vector<2x128xf32>
      %38 = vector.extract_strided_slice %25 {offsets = [0, 256], sizes = [2, 128], strides = [1, 1]} : vector<2x512xf32> to vector<2x128xf32>
      %39 = math.tanh %38 : vector<2x128xf32>
      %40 = vector.extract_strided_slice %25 {offsets = [0, 384], sizes = [2, 128], strides = [1, 1]} : vector<2x512xf32> to vector<2x128xf32>
      %41 = arith.negf %40 : vector<2x128xf32>
      %42 = math.exp %41 : vector<2x128xf32>
      %cst_37 = arith.constant 1.000000e+00 : f32
      %43 = vector.broadcast %cst_37 : f32 to vector<2x128xf32>
      %44 = arith.addf %43, %42 : vector<2x128xf32>
      %45 = arith.divf %43, %44 : vector<2x128xf32>
      %46 = arith.mulf %37, %arg19 : vector<2x128xf32>
      %47 = arith.mulf %31, %39 : vector<2x128xf32>
      %48 = arith.addf %46, %47 : vector<2x128xf32>
      %49 = math.tanh %48 : vector<2x128xf32>
      %50 = arith.mulf %45, %49 : vector<2x128xf32>
      %51 = arith.index_cast %20 : i32 to index
      %c0_38 = arith.constant 0 : index
      %c0_39 = arith.constant 0 : index
      %52 = vector.load %arg16[%51, %c0_38, %c0_39] : memref<8x2x128xf32, #tpu.memory_space<vmem>>, vector<1x2x128xf32>
      %53 = vector.shape_cast %52 : vector<1x2x128xf32> to vector<2x128xf32>
      %54 = vector.shape_cast %50 : vector<2x128xf32> to vector<1x2x128xf32>
      tpu.vector_store %arg16[%51, %c0_38, %c0_39], %54 {strides = array<i32>} : memref<8x2x128xf32, #tpu.memory_space<vmem>>, vector<1x2x128xf32>,
      scf.yield %50, %48 : vector<2x128xf32>, vector<2x128xf32>
    }
    %c8_i32_2 = arith.constant 8 : i32
    %c0_3 = arith.constant 0 : index
    %c0_4 = arith.constant 0 : index
    %5 = vector.load %arg3[%c0_3, %c0_4] : memref<16x32xf32, #tpu.memory_space<vmem>>, vector<16x32xf32>
    %c0_5 = arith.constant 0 : index
    %c0_6 = arith.constant 0 : index
    %6 = vector.load %arg5[%c0_5, %c0_6] : memref<32x64xf32, #tpu.memory_space<vmem>>, vector<32x64xf32>
    %c0_7 = arith.constant 0 : index
    %c0_8 = arith.constant 0 : index
    %7 = vector.load %arg7[%c0_7, %c0_8] : memref<64x128xf32, #tpu.memory_space<vmem>>, vector<64x128xf32>
    %c0_9 = arith.constant 0 : index
    %c0_10 = arith.constant 0 : index
    %8 = vector.load %arg4[%c0_9, %c0_10] : memref<1x32xf32, #tpu.memory_space<vmem>>, vector<1x32xf32>
    %c0_11 = arith.constant 0 : index
    %c0_12 = arith.constant 0 : index
    %9 = vector.load %arg6[%c0_11, %c0_12] : memref<1x64xf32, #tpu.memory_space<vmem>>, vector<1x64xf32>
    %c0_13 = arith.constant 0 : index
    %c0_14 = arith.constant 0 : index
    %10 = vector.load %arg8[%c0_13, %c0_14] : memref<1x128xf32, #tpu.memory_space<vmem>>, vector<1x128xf32>
    %c0_15 = arith.constant 0 : index
    %c0_16 = arith.constant 0 : index
    %11 = vector.load %arg9[%c0_15, %c0_16] : memref<128x64xf32, #tpu.memory_space<vmem>>, vector<128x64xf32>
    %c0_17 = arith.constant 0 : index
    %c0_18 = arith.constant 0 : index
    %12 = vector.load %arg11[%c0_17, %c0_18] : memref<64x32xf32, #tpu.memory_space<vmem>>, vector<64x32xf32>
    %c0_19 = arith.constant 0 : index
    %c0_20 = arith.constant 0 : index
    %13 = vector.load %arg10[%c0_19, %c0_20] : memref<1x64xf32, #tpu.memory_space<vmem>>, vector<1x64xf32>
    %c0_21 = arith.constant 0 : index
    %c0_22 = arith.constant 0 : index
    %14 = vector.load %arg12[%c0_21, %c0_22] : memref<1x32xf32, #tpu.memory_space<vmem>>, vector<1x32xf32>
    %c0_23 = arith.constant 0 : index
    %c0_24 = arith.constant 0 : index
    %15 = vector.load %arg13[%c0_23, %c0_24] : memref<32x32xf32, #tpu.memory_space<vmem>>, vector<32x32xf32>
    %c0_25 = arith.constant 0 : index
    %c0_26 = arith.constant 0 : index
    %16 = vector.load %arg14[%c0_25, %c0_26] : memref<1x32xf32, #tpu.memory_space<vmem>>, vector<1x32xf32>
    %cst_27 = arith.constant 0.000000e+00 : f32
    %17 = vector.broadcast %cst_27 : f32 to vector<2x16xf32>
    %c0_i32_28 = arith.constant 0 : i32
    %c8_i32_29 = arith.constant 8 : i32
    %18 = arith.addi %c0_i32_28, %c8_i32_29 : i32
    %c1_i32_30 = arith.constant 1 : i32
    %19 = scf.for %arg17 = %c0_i32_28 to %18 step %c1_i32_30 iter_args(%arg18 = %17) -> (vector<2x16xf32>)  : i32 {
      %cst_32 = arith.constant dense<0.000000e+00> : vector<2x32xf32>
      %20 = tpu.matmul %arg18, %5, %cst_32 {dimension_numbers = #tpu.dot_dimension_numbers<[1], [0], [0], [1], [0, 0, 1, 1], [], []>} : vector<2x16xf32>, vector<16x32xf32>, vector<2x32xf32> -> vector<2x32xf32>
      %21 = vector.broadcast %8 : vector<1x32xf32> to vector<2x32xf32>
      %22 = arith.addf %20, %21 : vector<2x32xf32>
      %23 = math.tanh %22 : vector<2x32xf32>
      %cst_33 = arith.constant dense<0.000000e+00> : vector<2x64xf32>
      %24 = tpu.matmul %23, %6, %cst_33 {dimension_numbers = #tpu.dot_dimension_numbers<[1], [0], [0], [1], [0, 0, 1, 1], [], []>} : vector<2x32xf32>, vector<32x64xf32>, vector<2x64xf32> -> vector<2x64xf32>
      %25 = vector.broadcast %9 : vector<1x64xf32> to vector<2x64xf32>
      %26 = arith.addf %24, %25 : vector<2x64xf32>
      %27 = math.tanh %26 : vector<2x64xf32>
      %cst_34 = arith.constant dense<0.000000e+00> : vector<2x128xf32>
      %28 = tpu.matmul %27, %7, %cst_34 {dimension_numbers = #tpu.dot_dimension_numbers<[1], [0], [0], [1], [0, 0, 1, 1], [], []>} : vector<2x64xf32>, vector<64x128xf32>, vector<2x128xf32> -> vector<2x128xf32>
      %29 = vector.broadcast %10 : vector<1x128xf32> to vector<2x128xf32>
      %30 = arith.addf %28, %29 : vector<2x128xf32>
      %31 = math.tanh %30 : vector<2x128xf32>
      %32 = arith.index_cast %arg17 : i32 to index
      %c0_35 = arith.constant 0 : index
      %c0_36 = arith.constant 0 : index
      %33 = vector.load %arg16[%32, %c0_35, %c0_36] : memref<8x2x128xf32, #tpu.memory_space<vmem>>, vector<1x2x128xf32>
      %34 = vector.shape_cast %33 : vector<1x2x128xf32> to vector<2x128xf32>
      %35 = arith.addf %31, %34 : vector<2x128xf32>
      %cst_37 = arith.constant 5.000000e-01 : f32
      %36 = vector.broadcast %cst_37 : f32 to vector<2x128xf32>
      %37 = arith.mulf %35, %36 : vector<2x128xf32>
      %cst_38 = arith.constant dense<0.000000e+00> : vector<2x64xf32>
      %38 = tpu.matmul %37, %11, %cst_38 {dimension_numbers = #tpu.dot_dimension_numbers<[1], [0], [0], [1], [0, 0, 1, 1], [], []>} : vector<2x128xf32>, vector<128x64xf32>, vector<2x64xf32> -> vector<2x64xf32>
      %39 = vector.broadcast %13 : vector<1x64xf32> to vector<2x64xf32>
      %40 = arith.addf %38, %39 : vector<2x64xf32>
      %41 = math.tanh %40 : vector<2x64xf32>
      %cst_39 = arith.constant dense<0.000000e+00> : vector<2x32xf32>
      %42 = tpu.matmul %41, %12, %cst_39 {dimension_numbers = #tpu.dot_dimension_numbers<[1], [0], [0], [1], [0, 0, 1, 1], [], []>} : vector<2x64xf32>, vector<64x32xf32>, vector<2x32xf32> -> vector<2x32xf32>
      %43 = vector.broadcast %14 : vector<1x32xf32> to vector<2x32xf32>
      %44 = arith.addf %42, %43 : vector<2x32xf32>
      %45 = math.tanh %44 : vector<2x32xf32>
      %cst_40 = arith.constant dense<0.000000e+00> : vector<2x32xf32>
      %46 = tpu.matmul %45, %15, %cst_40 {dimension_numbers = #tpu.dot_dimension_numbers<[1], [0], [0], [1], [0, 0, 1, 1], [], []>} : vector<2x32xf32>, vector<32x32xf32>, vector<2x32xf32> -> vector<2x32xf32>
      %47 = vector.broadcast %16 : vector<1x32xf32> to vector<2x32xf32>
      %48 = arith.addf %46, %47 : vector<2x32xf32>
      %49 = vector.extract_strided_slice %48 {offsets = [0, 0], sizes = [2, 16], strides = [1, 1]} : vector<2x32xf32> to vector<2x16xf32>
      %50 = vector.extract_strided_slice %48 {offsets = [0, 16], sizes = [2, 16], strides = [1, 1]} : vector<2x32xf32> to vector<2x16xf32>
      %51 = arith.index_cast %arg17 : i32 to index
      %c0_41 = arith.constant 0 : index
      %c0_42 = arith.constant 0 : index
      %52 = vector.load %arg1[%51, %c0_41, %c0_42] : memref<8x2x16xf32, #tpu.memory_space<vmem>>, vector<1x2x16xf32>
      %53 = vector.shape_cast %52 : vector<1x2x16xf32> to vector<2x16xf32>
      %cst_43 = arith.constant 5.000000e-01 : f32
      %54 = vector.broadcast %cst_43 : f32 to vector<2x16xf32>
      %55 = arith.mulf %54, %50 : vector<2x16xf32>
      %56 = math.exp %55 : vector<2x16xf32>
      %57 = arith.mulf %53, %56 : vector<2x16xf32>
      %58 = arith.addf %49, %57 : vector<2x16xf32>
      %59 = tpu.concatenate %58, %arg18, %48 in 1 : vector<2x16xf32>, vector<2x16xf32>, vector<2x32xf32> -> vector<2x64xf32>
      %60 = arith.index_cast %arg17 : i32 to index
      %c0_44 = arith.constant 0 : index
      %c0_45 = arith.constant 0 : index
      %61 = vector.load %arg15[%60, %c0_44, %c0_45] : memref<8x2x64xf32, #tpu.memory_space<vmem>>, vector<1x2x64xf32>
      %62 = vector.shape_cast %61 : vector<1x2x64xf32> to vector<2x64xf32>
      %63 = vector.shape_cast %59 : vector<2x64xf32> to vector<1x2x64xf32>
      tpu.vector_store %arg15[%60, %c0_44, %c0_45], %63 {strides = array<i32>} : memref<8x2x64xf32, #tpu.memory_space<vmem>>, vector<1x2x64xf32>,
      scf.yield %58 : vector<2x16xf32>
    }
    %c8_i32_31 = arith.constant 8 : i32
    return
  }
}

module attributes {stable_mosaic.version = 11 : i64} {
  func.func @_generation_kernel(%arg0: i32, %arg1: memref<16x16xf32, #tpu.memory_space<vmem>>, %arg2: memref<16x16xf32, #tpu.memory_space<vmem>>, %arg3: memref<16x48xf32, #tpu.memory_space<vmem>>, %arg4: memref<1x48xf32, #tpu.memory_space<vmem>>, %arg5: memref<16x16xf32, #tpu.memory_space<vmem>>, %arg6: memref<1x16xf32, #tpu.memory_space<vmem>>, %arg7: memref<16x16xf32, #tpu.memory_space<vmem>>, %arg8: memref<1x16xf32, #tpu.memory_space<vmem>>, %arg9: memref<16x16xf32, #tpu.memory_space<vmem>>, %arg10: memref<1x16xf32, #tpu.memory_space<vmem>>, %arg11: memref<16x32xf32, #tpu.memory_space<vmem>>, %arg12: memref<1x32xf32, #tpu.memory_space<vmem>>, %arg13: memref<32x64xf32, #tpu.memory_space<vmem>>, %arg14: memref<1x64xf32, #tpu.memory_space<vmem>>, %arg15: memref<64x128xf32, #tpu.memory_space<vmem>>, %arg16: memref<1x128xf32, #tpu.memory_space<vmem>>, %arg17: memref<128x256xf32, #tpu.memory_space<vmem>>, %arg18: memref<1x256xf32, #tpu.memory_space<vmem>>, %arg19: memref<256x64xf32, #tpu.memory_space<vmem>>, %arg20: memref<1x64xf32, #tpu.memory_space<vmem>>, %arg21: memref<16x64xf32, #tpu.memory_space<vmem>>, %arg22: memref<16x32xf32, #tpu.memory_space<vmem>>) attributes {dimension_semantics = [#tpu.dimension_semantics<parallel>], iteration_bounds = array<i64: 1>, scalar_prefetch = 0 : i64, scratch_operands = 0 : i64, tpu.core_type = #tpu.core_type<tc>, window_params = [{transform_indices = @transform_0, window_bounds = array<i64: 16, 16>}, {transform_indices = @transform_1, window_bounds = array<i64: 16, 16>}, {pipeline_mode = #tpu.pipeline_mode<synchronous>, transform_indices = @transform_2, window_bounds = array<i64: 16, 48>}, {pipeline_mode = #tpu.pipeline_mode<synchronous>, transform_indices = @transform_3, window_bounds = array<i64: 1, 48>}, {pipeline_mode = #tpu.pipeline_mode<synchronous>, transform_indices = @transform_4, window_bounds = array<i64: 16, 16>}, {pipeline_mode = #tpu.pipeline_mode<synchronous>, transform_indices = @transform_5, window_bounds = array<i64: 1, 16>}, {pipeline_mode = #tpu.pipeline_mode<synchronous>, transform_indices = @transform_6, window_bounds = array<i64: 16, 16>}, {pipeline_mode = #tpu.pipeline_mode<synchronous>, transform_indices = @transform_7, window_bounds = array<i64: 1, 16>}, {pipeline_mode = #tpu.pipeline_mode<synchronous>, transform_indices = @transform_8, window_bounds = array<i64: 16, 16>}, {pipeline_mode = #tpu.pipeline_mode<synchronous>, transform_indices = @transform_9, window_bounds = array<i64: 1, 16>}, {pipeline_mode = #tpu.pipeline_mode<synchronous>, transform_indices = @transform_10, window_bounds = array<i64: 16, 32>}, {pipeline_mode = #tpu.pipeline_mode<synchronous>, transform_indices = @transform_11, window_bounds = array<i64: 1, 32>}, {pipeline_mode = #tpu.pipeline_mode<synchronous>, transform_indices = @transform_12, window_bounds = array<i64: 32, 64>}, {pipeline_mode = #tpu.pipeline_mode<synchronous>, transform_indices = @transform_13, window_bounds = array<i64: 1, 64>}, {pipeline_mode = #tpu.pipeline_mode<synchronous>, transform_indices = @transform_14, window_bounds = array<i64: 64, 128>}, {pipeline_mode = #tpu.pipeline_mode<synchronous>, transform_indices = @transform_15, window_bounds = array<i64: 1, 128>}, {pipeline_mode = #tpu.pipeline_mode<synchronous>, transform_indices = @transform_16, window_bounds = array<i64: 128, 256>}, {pipeline_mode = #tpu.pipeline_mode<synchronous>, transform_indices = @transform_17, window_bounds = array<i64: 1, 256>}, {pipeline_mode = #tpu.pipeline_mode<synchronous>, transform_indices = @transform_18, window_bounds = array<i64: 256, 64>}, {pipeline_mode = #tpu.pipeline_mode<synchronous>, transform_indices = @transform_19, window_bounds = array<i64: 1, 64>}, {transform_indices = @transform_20, window_bounds = array<i64: 16, 64>}, {transform_indices = @transform_21, window_bounds = array<i64: 16, 32>}]} {
    %c0 = arith.constant 0 : index
    %c0_0 = arith.constant 0 : index
    %0 = vector.load %arg2[%c0, %c0_0] : memref<16x16xf32, #tpu.memory_space<vmem>>, vector<16x16xf32>
    %c0_1 = arith.constant 0 : index
    %c0_2 = arith.constant 0 : index
    %1 = vector.load %arg3[%c0_1, %c0_2] : memref<16x48xf32, #tpu.memory_space<vmem>>, vector<16x48xf32>
    %cst = arith.constant dense<0.000000e+00> : vector<16x48xf32>
    %2 = tpu.matmul %0, %1, %cst {dimension_numbers = #tpu.dot_dimension_numbers<[1], [0], [0], [1], [0, 0, 1, 1], [], []>} : vector<16x16xf32>, vector<16x48xf32>, vector<16x48xf32> -> vector<16x48xf32>
    %c0_3 = arith.constant 0 : index
    %c0_4 = arith.constant 0 : index
    %3 = vector.load %arg4[%c0_3, %c0_4] : memref<1x48xf32, #tpu.memory_space<vmem>>, vector<1x48xf32>
    %4 = vector.broadcast %3 : vector<1x48xf32> to vector<16x48xf32>
    %5 = arith.addf %2, %4 : vector<16x48xf32>
    %6 = vector.extract_strided_slice %5 {offsets = [0, 0], sizes = [16, 16], strides = [1, 1]} : vector<16x48xf32> to vector<16x16xf32>
    %cst_5 = arith.constant 0.000000e+00 : f32
    %7 = vector.broadcast %cst_5 : f32 to vector<16x16xf32>
    %8 = arith.maximumf %6, %7 : vector<16x16xf32>
    %9 = vector.extract_strided_slice %5 {offsets = [0, 16], sizes = [16, 16], strides = [1, 1]} : vector<16x48xf32> to vector<16x16xf32>
    %cst_6 = arith.constant 0.000000e+00 : f32
    %10 = vector.broadcast %cst_6 : f32 to vector<16x16xf32>
    %11 = arith.maximumf %9, %10 : vector<16x16xf32>
    %12 = vector.extract_strided_slice %5 {offsets = [0, 32], sizes = [16, 16], strides = [1, 1]} : vector<16x48xf32> to vector<16x16xf32>
    %c0_7 = arith.constant 0 : index
    %c0_8 = arith.constant 0 : index
    %13 = vector.load %arg5[%c0_7, %c0_8] : memref<16x16xf32, #tpu.memory_space<vmem>>, vector<16x16xf32>
    %cst_9 = arith.constant dense<0.000000e+00> : vector<16x16xf32>
    %14 = tpu.matmul %8, %13, %cst_9 {dimension_numbers = #tpu.dot_dimension_numbers<[1], [0], [0], [1], [0, 0, 1, 1], [], []>} : vector<16x16xf32>, vector<16x16xf32>, vector<16x16xf32> -> vector<16x16xf32>
    %c0_10 = arith.constant 0 : index
    %c0_11 = arith.constant 0 : index
    %15 = vector.load %arg6[%c0_10, %c0_11] : memref<1x16xf32, #tpu.memory_space<vmem>>, vector<1x16xf32>
    %16 = vector.broadcast %15 : vector<1x16xf32> to vector<16x16xf32>
    %17 = arith.addf %14, %16 : vector<16x16xf32>
    %18 = arith.negf %17 : vector<16x16xf32>
    %19 = math.exp %18 : vector<16x16xf32>
    %cst_12 = arith.constant 1.000000e+00 : f32
    %20 = vector.broadcast %cst_12 : f32 to vector<16x16xf32>
    %21 = arith.addf %20, %19 : vector<16x16xf32>
    %22 = arith.divf %20, %21 : vector<16x16xf32>
    %c0_13 = arith.constant 0 : index
    %c0_14 = arith.constant 0 : index
    %23 = vector.load %arg7[%c0_13, %c0_14] : memref<16x16xf32, #tpu.memory_space<vmem>>, vector<16x16xf32>
    %cst_15 = arith.constant dense<0.000000e+00> : vector<16x16xf32>
    %24 = tpu.matmul %11, %23, %cst_15 {dimension_numbers = #tpu.dot_dimension_numbers<[1], [0], [0], [1], [0, 0, 1, 1], [], []>} : vector<16x16xf32>, vector<16x16xf32>, vector<16x16xf32> -> vector<16x16xf32>
    %c0_16 = arith.constant 0 : index
    %c0_17 = arith.constant 0 : index
    %25 = vector.load %arg8[%c0_16, %c0_17] : memref<1x16xf32, #tpu.memory_space<vmem>>, vector<1x16xf32>
    %26 = vector.broadcast %25 : vector<1x16xf32> to vector<16x16xf32>
    %27 = arith.addf %24, %26 : vector<16x16xf32>
    %cst_18 = arith.constant 1.000000e+00 : f32
    %28 = vector.broadcast %cst_18 : f32 to vector<16x16xf32>
    %29 = arith.subf %28, %22 : vector<16x16xf32>
    %30 = arith.mulf %29, %12 : vector<16x16xf32>
    %31 = arith.mulf %22, %27 : vector<16x16xf32>
    %32 = arith.addf %30, %31 : vector<16x16xf32>
    %cst_19 = arith.constant 0.000000e+00 : f32
    %33 = vector.broadcast %cst_19 : f32 to vector<16x16xf32>
    %34 = arith.maximumf %27, %33 : vector<16x16xf32>
    %c0_20 = arith.constant 0 : index
    %c0_21 = arith.constant 0 : index
    %35 = vector.load %arg9[%c0_20, %c0_21] : memref<16x16xf32, #tpu.memory_space<vmem>>, vector<16x16xf32>
    %cst_22 = arith.constant dense<0.000000e+00> : vector<16x16xf32>
    %36 = tpu.matmul %34, %35, %cst_22 {dimension_numbers = #tpu.dot_dimension_numbers<[1], [0], [0], [1], [0, 0, 1, 1], [], []>} : vector<16x16xf32>, vector<16x16xf32>, vector<16x16xf32> -> vector<16x16xf32>
    %c0_23 = arith.constant 0 : index
    %c0_24 = arith.constant 0 : index
    %37 = vector.load %arg10[%c0_23, %c0_24] : memref<1x16xf32, #tpu.memory_space<vmem>>, vector<1x16xf32>
    %38 = vector.broadcast %37 : vector<1x16xf32> to vector<16x16xf32>
    %39 = arith.addf %36, %38 : vector<16x16xf32>
    %cst_25 = arith.constant 0.000000e+00 : f32
    %40 = vector.broadcast %cst_25 : f32 to vector<16x16xf32>
    %41 = arith.maximumf %39, %40 : vector<16x16xf32>
    %42 = vector.broadcast %cst_25 : f32 to vector<16x16xf32>
    %43 = arith.subf %39, %42 : vector<16x16xf32>
    %44 = arith.cmpf one, %43, %43 : vector<16x16xf32>
    %45 = vector.broadcast %cst_25 : f32 to vector<16x16xf32>
    %46 = arith.addf %39, %45 : vector<16x16xf32>
    %47 = math.absf %43 : vector<16x16xf32>
    %cst_26 = arith.constant 0.000000e+00 : f32
    %48 = vector.broadcast %cst_26 : f32 to vector<16x16xf32>
    %49 = arith.subf %48, %47 : vector<16x16xf32>
    %50 = math.exp %49 : vector<16x16xf32>
    %51 = math.log1p %50 : vector<16x16xf32>
    %52 = arith.addf %41, %51 : vector<16x16xf32>
    %53 = arith.select %44, %46, %52 : vector<16x16xi1>, vector<16x16xf32>
    %cst_27 = arith.constant 9.99999991E-38 : f32
    %54 = vector.broadcast %cst_27 : f32 to vector<16x16xf32>
    %55 = arith.maximumf %53, %54 : vector<16x16xf32>
    %56 = math.log %55 : vector<16x16xf32>
    %57 = tpu.concatenate %32, %56 in 1 : vector<16x16xf32>, vector<16x16xf32> -> vector<16x32xf32>
    %c0_28 = arith.constant 0 : index
    %c0_29 = arith.constant 0 : index
    %58 = vector.load %arg22[%c0_28, %c0_29] : memref<16x32xf32, #tpu.memory_space<vmem>>, vector<16x32xf32>
    tpu.vector_store %arg22[%c0_28, %c0_29], %57 {strides = array<i32>} : memref<16x32xf32, #tpu.memory_space<vmem>>, vector<16x32xf32>,
    %c0_30 = arith.constant 0 : index
    %c0_31 = arith.constant 0 : index
    %59 = vector.load %arg1[%c0_30, %c0_31] : memref<16x16xf32, #tpu.memory_space<vmem>>, vector<16x16xf32>
    %c0_32 = arith.constant 0 : index
    %c0_33 = arith.constant 0 : index
    %60 = vector.load %arg11[%c0_32, %c0_33] : memref<16x32xf32, #tpu.memory_space<vmem>>, vector<16x32xf32>
    %cst_34 = arith.constant dense<0.000000e+00> : vector<16x32xf32>
    %61 = tpu.matmul %59, %60, %cst_34 {dimension_numbers = #tpu.dot_dimension_numbers<[1], [0], [0], [1], [0, 0, 1, 1], [], []>} : vector<16x16xf32>, vector<16x32xf32>, vector<16x32xf32> -> vector<16x32xf32>
    %c0_35 = arith.constant 0 : index
    %c0_36 = arith.constant 0 : index
    %62 = vector.load %arg12[%c0_35, %c0_36] : memref<1x32xf32, #tpu.memory_space<vmem>>, vector<1x32xf32>
    %63 = vector.broadcast %62 : vector<1x32xf32> to vector<16x32xf32>
    %64 = arith.addf %61, %63 : vector<16x32xf32>
    %65 = math.tanh %64 : vector<16x32xf32>
    %c0_37 = arith.constant 0 : index
    %c0_38 = arith.constant 0 : index
    %66 = vector.load %arg13[%c0_37, %c0_38] : memref<32x64xf32, #tpu.memory_space<vmem>>, vector<32x64xf32>
    %cst_39 = arith.constant dense<0.000000e+00> : vector<16x64xf32>
    %67 = tpu.matmul %65, %66, %cst_39 {dimension_numbers = #tpu.dot_dimension_numbers<[1], [0], [0], [1], [0, 0, 1, 1], [], []>} : vector<16x32xf32>, vector<32x64xf32>, vector<16x64xf32> -> vector<16x64xf32>
    %c0_40 = arith.constant 0 : index
    %c0_41 = arith.constant 0 : index
    %68 = vector.load %arg14[%c0_40, %c0_41] : memref<1x64xf32, #tpu.memory_space<vmem>>, vector<1x64xf32>
    %69 = vector.broadcast %68 : vector<1x64xf32> to vector<16x64xf32>
    %70 = arith.addf %67, %69 : vector<16x64xf32>
    %71 = math.tanh %70 : vector<16x64xf32>
    %c0_42 = arith.constant 0 : index
    %c0_43 = arith.constant 0 : index
    %72 = vector.load %arg15[%c0_42, %c0_43] : memref<64x128xf32, #tpu.memory_space<vmem>>, vector<64x128xf32>
    %cst_44 = arith.constant dense<0.000000e+00> : vector<16x128xf32>
    %73 = tpu.matmul %71, %72, %cst_44 {dimension_numbers = #tpu.dot_dimension_numbers<[1], [0], [0], [1], [0, 0, 1, 1], [], []>} : vector<16x64xf32>, vector<64x128xf32>, vector<16x128xf32> -> vector<16x128xf32>
    %c0_45 = arith.constant 0 : index
    %c0_46 = arith.constant 0 : index
    %74 = vector.load %arg16[%c0_45, %c0_46] : memref<1x128xf32, #tpu.memory_space<vmem>>, vector<1x128xf32>
    %75 = vector.broadcast %74 : vector<1x128xf32> to vector<16x128xf32>
    %76 = arith.addf %73, %75 : vector<16x128xf32>
    %77 = math.tanh %76 : vector<16x128xf32>
    %c0_47 = arith.constant 0 : index
    %c0_48 = arith.constant 0 : index
    %78 = vector.load %arg17[%c0_47, %c0_48] : memref<128x256xf32, #tpu.memory_space<vmem>>, vector<128x256xf32>
    %cst_49 = arith.constant dense<0.000000e+00> : vector<16x256xf32>
    %79 = tpu.matmul %77, %78, %cst_49 {dimension_numbers = #tpu.dot_dimension_numbers<[1], [0], [0], [1], [0, 0, 1, 1], [], []>} : vector<16x128xf32>, vector<128x256xf32>, vector<16x256xf32> -> vector<16x256xf32>
    %c0_50 = arith.constant 0 : index
    %c0_51 = arith.constant 0 : index
    %80 = vector.load %arg18[%c0_50, %c0_51] : memref<1x256xf32, #tpu.memory_space<vmem>>, vector<1x256xf32>
    %81 = vector.broadcast %80 : vector<1x256xf32> to vector<16x256xf32>
    %82 = arith.addf %79, %81 : vector<16x256xf32>
    %83 = math.tanh %82 : vector<16x256xf32>
    %c0_52 = arith.constant 0 : index
    %c0_53 = arith.constant 0 : index
    %84 = vector.load %arg19[%c0_52, %c0_53] : memref<256x64xf32, #tpu.memory_space<vmem>>, vector<256x64xf32>
    %cst_54 = arith.constant dense<0.000000e+00> : vector<16x64xf32>
    %85 = tpu.matmul %83, %84, %cst_54 {dimension_numbers = #tpu.dot_dimension_numbers<[1], [0], [0], [1], [0, 0, 1, 1], [], []>} : vector<16x256xf32>, vector<256x64xf32>, vector<16x64xf32> -> vector<16x64xf32>
    %c0_55 = arith.constant 0 : index
    %c0_56 = arith.constant 0 : index
    %86 = vector.load %arg20[%c0_55, %c0_56] : memref<1x64xf32, #tpu.memory_space<vmem>>, vector<1x64xf32>
    %87 = vector.broadcast %86 : vector<1x64xf32> to vector<16x64xf32>
    %88 = arith.addf %85, %87 : vector<16x64xf32>
    %89 = math.exp %88 : vector<16x64xf32>
    %c0_57 = arith.constant 0 : index
    %c0_58 = arith.constant 0 : index
    %90 = vector.load %arg21[%c0_57, %c0_58] : memref<16x64xf32, #tpu.memory_space<vmem>>, vector<16x64xf32>
    tpu.vector_store %arg21[%c0_57, %c0_58], %89 {strides = array<i32>} : memref<16x64xf32, #tpu.memory_space<vmem>>, vector<16x64xf32>,
    return
  }
  func.func @transform_0(%arg0: i32) -> (i32, i32) {
    %c0_i32 = arith.constant 0 : i32
    %c0_i32_0 = arith.constant 0 : i32
    return %arg0, %c0_i32 : i32, i32
  }
  func.func @transform_1(%arg0: i32) -> (i32, i32) {
    %c0_i32 = arith.constant 0 : i32
    %c0_i32_0 = arith.constant 0 : i32
    return %arg0, %c0_i32 : i32, i32
  }
  func.func @transform_2(%arg0: i32) -> (i32, i32) {
    %c0_i32 = arith.constant 0 : i32
    %c0_i32_0 = arith.constant 0 : i32
    %c0_i32_1 = arith.constant 0 : i32
    return %c0_i32, %c0_i32_0 : i32, i32
  }
  func.func @transform_3(%arg0: i32) -> (i32, i32) {
    %c0_i32 = arith.constant 0 : i32
    %c0_i32_0 = arith.constant 0 : i32
    %c0_i32_1 = arith.constant 0 : i32
    return %c0_i32, %c0_i32_0 : i32, i32
  }
  func.func @transform_4(%arg0: i32) -> (i32, i32) {
    %c0_i32 = arith.constant 0 : i32
    %c0_i32_0 = arith.constant 0 : i32
    %c0_i32_1 = arith.constant 0 : i32
    return %c0_i32, %c0_i32_0 : i32, i32
  }
  func.func @transform_5(%arg0: i32) -> (i32, i32) {
    %c0_i32 = arith.constant 0 : i32
    %c0_i32_0 = arith.constant 0 : i32
    %c0_i32_1 = arith.constant 0 : i32
    return %c0_i32, %c0_i32_0 : i32, i32
  }
  func.func @transform_6(%arg0: i32) -> (i32, i32) {
    %c0_i32 = arith.constant 0 : i32
    %c0_i32_0 = arith.constant 0 : i32
    %c0_i32_1 = arith.constant 0 : i32
    return %c0_i32, %c0_i32_0 : i32, i32
  }
  func.func @transform_7(%arg0: i32) -> (i32, i32) {
    %c0_i32 = arith.constant 0 : i32
    %c0_i32_0 = arith.constant 0 : i32
    %c0_i32_1 = arith.constant 0 : i32
    return %c0_i32, %c0_i32_0 : i32, i32
  }
  func.func @transform_8(%arg0: i32) -> (i32, i32) {
    %c0_i32 = arith.constant 0 : i32
    %c0_i32_0 = arith.constant 0 : i32
    %c0_i32_1 = arith.constant 0 : i32
    return %c0_i32, %c0_i32_0 : i32, i32
  }
  func.func @transform_9(%arg0: i32) -> (i32, i32) {
    %c0_i32 = arith.constant 0 : i32
    %c0_i32_0 = arith.constant 0 : i32
    %c0_i32_1 = arith.constant 0 : i32
    return %c0_i32, %c0_i32_0 : i32, i32
  }
  func.func @transform_10(%arg0: i32) -> (i32, i32) {
    %c0_i32 = arith.constant 0 : i32
    %c0_i32_0 = arith.constant 0 : i32
    %c0_i32_1 = arith.constant 0 : i32
    return %c0_i32, %c0_i32_0 : i32, i32
  }
  func.func @transform_11(%arg0: i32) -> (i32, i32) {
    %c0_i32 = arith.constant 0 : i32
    %c0_i32_0 = arith.constant 0 : i32
    %c0_i32_1 = arith.constant 0 : i32
    return %c0_i32, %c0_i32_0 : i32, i32
  }
  func.func @transform_12(%arg0: i32) -> (i32, i32) {
    %c0_i32 = arith.constant 0 : i32
    %c0_i32_0 = arith.constant 0 : i32
    %c0_i32_1 = arith.constant 0 : i32
    return %c0_i32, %c0_i32_0 : i32, i32
  }
  func.func @transform_13(%arg0: i32) -> (i32, i32) {
    %c0_i32 = arith.constant 0 : i32
    %c0_i32_0 = arith.constant 0 : i32
    %c0_i32_1 = arith.constant 0 : i32
    return %c0_i32, %c0_i32_0 : i32, i32
  }
  func.func @transform_14(%arg0: i32) -> (i32, i32) {
    %c0_i32 = arith.constant 0 : i32
    %c0_i32_0 = arith.constant 0 : i32
    %c0_i32_1 = arith.constant 0 : i32
    return %c0_i32, %c0_i32_0 : i32, i32
  }
  func.func @transform_15(%arg0: i32) -> (i32, i32) {
    %c0_i32 = arith.constant 0 : i32
    %c0_i32_0 = arith.constant 0 : i32
    %c0_i32_1 = arith.constant 0 : i32
    return %c0_i32, %c0_i32_0 : i32, i32
  }
  func.func @transform_16(%arg0: i32) -> (i32, i32) {
    %c0_i32 = arith.constant 0 : i32
    %c0_i32_0 = arith.constant 0 : i32
    %c0_i32_1 = arith.constant 0 : i32
    return %c0_i32, %c0_i32_0 : i32, i32
  }
  func.func @transform_17(%arg0: i32) -> (i32, i32) {
    %c0_i32 = arith.constant 0 : i32
    %c0_i32_0 = arith.constant 0 : i32
    %c0_i32_1 = arith.constant 0 : i32
    return %c0_i32, %c0_i32_0 : i32, i32
  }
  func.func @transform_18(%arg0: i32) -> (i32, i32) {
    %c0_i32 = arith.constant 0 : i32
    %c0_i32_0 = arith.constant 0 : i32
    %c0_i32_1 = arith.constant 0 : i32
    return %c0_i32, %c0_i32_0 : i32, i32
  }
  func.func @transform_19(%arg0: i32) -> (i32, i32) {
    %c0_i32 = arith.constant 0 : i32
    %c0_i32_0 = arith.constant 0 : i32
    %c0_i32_1 = arith.constant 0 : i32
    return %c0_i32, %c0_i32_0 : i32, i32
  }
  func.func @transform_20(%arg0: i32) -> (i32, i32) {
    %c0_i32 = arith.constant 0 : i32
    %c0_i32_0 = arith.constant 0 : i32
    return %arg0, %c0_i32 : i32, i32
  }
  func.func @transform_21(%arg0: i32) -> (i32, i32) {
    %c0_i32 = arith.constant 0 : i32
    %c0_i32_0 = arith.constant 0 : i32
    return %arg0, %c0_i32 : i32, i32
  }
}

</mosaic_0001>

<llo_original>
// kernel: dkf_v_forward.3
$region0: #{dkf_v_forward.3}
  #allocation0 [shape = 'u32[]', space=smem, size = 0x4, offset = 0x4, fixed_abs, tag = 'smem constant byte address 0x4 - core index']
  #allocation1 [shape = 'u32[144,128]{1,0:T(1,128)}', space=vmem, size = 0x12000, scoped, tag = 'internal scratch']
  %s0 = inlined_call_operand.vmem [shape: f32[16,512], index: 0, kind: input, shape index: {}]
  %s1 = inlined_call_operand.hbm [shape: f32[512,256], index: 1, kind: input, shape index: {}]
  %s2 = inlined_call_operand.vmem [shape: f32[1,256], index: 2, kind: input, shape index: {}]
  %s3 = inlined_call_operand.hbm [shape: f32[256,512], index: 3, kind: input, shape index: {}]
  %s4 = inlined_call_operand.vmem [shape: f32[1,512], index: 4, kind: input, shape index: {}]
  %s5 = inlined_call_operand.vmem [shape: f32[16,512], index: 5, kind: output, shape index: {}]
  %s6 = sld [smem:[#allocation0]]
  $region38: #{dkf_v_forward.3} parent=0
    _
  %s8 = ssub.s32 1, %s6
  %s9 = scalar_select 0, %s8, %s6
  $region1: #{dkf_v_forward.3} parent=0
    #allocation2 [shape = 'u8[524288]{0}', space=vmem, size = 0x80000, scoped, tag = 'input window, operand 1, single buffered']
    #allocation3 [shape = 's32[1]{0}', space=sflag, size = 0x4, scoped, tag = 'scoped memory for dkf_v_forward.3']
    #allocation4 [shape = 'u8[524288]{0}', space=vmem, size = 0x80000, scoped, tag = 'input window, operand 3, single buffered']
    #allocation5 [shape = 's32[1]{0}', space=sflag, size = 0x4, scoped, tag = 'scoped memory for dkf_v_forward.3']
    %10 = vsyncpa [#allocation3], 0
    %11 = vsyncpa [#allocation5], 0
    // Predicated region
    $region2: #{dkf_v_forward.3} parent=1 // pred_check
      _
    $region3: #{dkf_v_forward.3} parent=1 // pred_check_branch
      %13 = sbr.rel (0) target = $region5
    $region4: #{dkf_v_forward.3} parent=1 // pred_region
      _
    $region5: #{dkf_v_forward.3} parent=1 // pred_fallthru
      _
    // Predicated region
    $region6: #{dkf_v_forward.3} parent=1 // pred_check
      _
    $region7: #{dkf_v_forward.3} parent=1 // pred_check_branch
      %15 = sbr.rel (0) target = $region9
    $region8: #{dkf_v_forward.3} parent=1 // pred_region
      %s17 = ssub.s32 16384, 16384
      %18 = vsyncadd [#allocation3], %s17
      %s19 = sshll.u32 [#allocation2], 4
      %s20 = int_to_ptr.vmem [resolvable:$true] %s19
      %25 = dma.hbm_to_vmem [thread:$0]  %s1, 16384, %s20, [#allocation3], 256, 256, 16
    $region9: #{dkf_v_forward.3} parent=1 // pred_fallthru
      _
    // Predicated region
    $region10: #{dkf_v_forward.3} parent=1 // pred_check
      _
    $region11: #{dkf_v_forward.3} parent=1 // pred_check_branch
      %27 = sbr.rel (0) target = $region13
    $region12: #{dkf_v_forward.3} parent=1 // pred_region
      _
    $region13: #{dkf_v_forward.3} parent=1 // pred_fallthru
      _
    // Predicated region
    $region14: #{dkf_v_forward.3} parent=1 // pred_check
      _
    $region15: #{dkf_v_forward.3} parent=1 // pred_check_branch
      %29 = sbr.rel (0) target = $region17
    $region16: #{dkf_v_forward.3} parent=1 // pred_region
      %s31 = ssub.s32 16384, 16384
      %32 = vsyncadd [#allocation5], %s31
      %s33 = sshll.u32 [#allocation4], 4
      %s34 = int_to_ptr.vmem [resolvable:$true] %s33
      %39 = dma.hbm_to_vmem [thread:$0]  %s3, 16384, %s34, [#allocation5], 512, 512, 32
    $region17: #{dkf_v_forward.3} parent=1 // pred_fallthru
      _
    // Predicated region
    $region18: #{dkf_v_forward.3} parent=1 // pred_check
      _
    $region19: #{dkf_v_forward.3} parent=1 // pred_check_branch
      %41 = sbr.rel (0) target = $region21
    $region20: #{dkf_v_forward.3} parent=1 // pred_region
      _
    $region21: #{dkf_v_forward.3} parent=1 // pred_fallthru
      _
    // Predicated region
    $region22: #{dkf_v_forward.3} parent=1 // pred_check
      _
    $region23: #{dkf_v_forward.3} parent=1 // pred_check_branch
      %43 = sbr.rel (0) target = $region25
    $region24: #{dkf_v_forward.3} parent=1 // pred_region
      %44 = dma.done [#allocation3], 16384
    $region25: #{dkf_v_forward.3} parent=1 // pred_fallthru
      _
    // Predicated region
    $region26: #{dkf_v_forward.3} parent=1 // pred_check
      _
    $region27: #{dkf_v_forward.3} parent=1 // pred_check_branch
      %46 = sbr.rel (0) target = $region29
    $region28: #{dkf_v_forward.3} parent=1 // pred_region
      %47 = dma.done [#allocation5], 16384
    $region29: #{dkf_v_forward.3} parent=1 // pred_fallthru
      _
    %v48 = vld [vmem:[%s0] sm:$0xff]
    %v49 = vld [vmem:[%s0 + $0x8] sm:$0xff]
    %v50 = vld [vmem:[%s0 + $0x10] sm:$0xff]
    %v51 = vld [vmem:[%s0 + $0x18] sm:$0xff]
    %v52 = vld [vmem:[%s0 + $0x20] sm:$0xff]
    %v53 = vld [vmem:[%s0 + $0x28] sm:$0xff]
    %v54 = vld [vmem:[%s0 + $0x30] sm:$0xff]
    %v55 = vld [vmem:[%s0 + $0x38] sm:$0xff]
    %v56 = vld [vmem:[#allocation2] sm:$0xff]
    %v57 = vld [vmem:[#allocation2 + $0x8] sm:$0xff]
    %v58 = vld [vmem:[#allocation2 + $0x10] sm:$0xff]
    %v59 = vld [vmem:[#allocation2 + $0x18] sm:$0xff]
    %v60 = vld [vmem:[#allocation2 + $0x20] sm:$0xff]
    %v61 = vld [vmem:[#allocation2 + $0x28] sm:$0xff]
    %v62 = vld [vmem:[#allocation2 + $0x30] sm:$0xff]
    %v63 = vld [vmem:[#allocation2 + $0x38] sm:$0xff]
    %v64 = vld [vmem:[#allocation2 + $0x40] sm:$0xff]
    %v65 = vld [vmem:[#allocation2 + $0x48] sm:$0xff]
    %v66 = vld [vmem:[#allocation2 + $0x50] sm:$0xff]
    %v67 = vld [vmem:[#allocation2 + $0x58] sm:$0xff]
    %v68 = vld [vmem:[#allocation2 + $0x60] sm:$0xff]
    %v69 = vld [vmem:[#allocation2 + $0x68] sm:$0xff]
    %v70 = vld [vmem:[#allocation2 + $0x70] sm:$0xff]
    %v71 = vld [vmem:[#allocation2 + $0x78] sm:$0xff]
    %v72 = vld [vmem:[#allocation2 + $0x80] sm:$0xff]
    %v73 = vld [vmem:[#allocation2 + $0x88] sm:$0xff]
    %v74 = vld [vmem:[#allocation2 + $0x90] sm:$0xff]
    %v75 = vld [vmem:[#allocation2 + $0x98] sm:$0xff]
    %v76 = vld [vmem:[#allocation2 + $0xa0] sm:$0xff]
    %v77 = vld [vmem:[#allocation2 + $0xa8] sm:$0xff]
    %v78 = vld [vmem:[#allocation2 + $0xb0] sm:$0xff]
    %v79 = vld [vmem:[#allocation2 + $0xb8] sm:$0xff]
    %v80 = vld [vmem:[#allocation2 + $0xc0] sm:$0xff]
    %v81 = vld [vmem:[#allocation2 + $0xc8] sm:$0xff]
    %v82 = vld [vmem:[#allocation2 + $0xd0] sm:$0xff]
    %v83 = vld [vmem:[#allocation2 + $0xd8] sm:$0xff]
    %v84 = vld [vmem:[#allocation2 + $0xe0] sm:$0xff]
    %v85 = vld [vmem:[#allocation2 + $0xe8] sm:$0xff]
    %v86 = vld [vmem:[#allocation2 + $0xf0] sm:$0xff]
    %v87 = vld [vmem:[#allocation2 + $0xf8] sm:$0xff]
    %v88 = vld [vmem:[#allocation2 + $0x100] sm:$0xff]
    %v89 = vld [vmem:[#allocation2 + $0x108] sm:$0xff]
    %v90 = vld [vmem:[#allocation2 + $0x110] sm:$0xff]
    %v91 = vld [vmem:[#allocation2 + $0x118] sm:$0xff]
    %v92 = vld [vmem:[#allocation2 + $0x120] sm:$0xff]
    %v93 = vld [vmem:[#allocation2 + $0x128] sm:$0xff]
    %v94 = vld [vmem:[#allocation2 + $0x130] sm:$0xff]
    %v95 = vld [vmem:[#allocation2 + $0x138] sm:$0xff]
    %v96 = vld [vmem:[#allocation2 + $0x140] sm:$0xff]
    %v97 = vld [vmem:[#allocation2 + $0x148] sm:$0xff]
    %v98 = vld [vmem:[#allocation2 + $0x150] sm:$0xff]
    %v99 = vld [vmem:[#allocation2 + $0x158] sm:$0xff]
    %v100 = vld [vmem:[#allocation2 + $0x160] sm:$0xff]
    %v101 = vld [vmem:[#allocation2 + $0x168] sm:$0xff]
    %v102 = vld [vmem:[#allocation2 + $0x170] sm:$0xff]
    %v103 = vld [vmem:[#allocation2 + $0x178] sm:$0xff]
    %v104 = vld [vmem:[#allocation2 + $0x180] sm:$0xff]
    %v105 = vld [vmem:[#allocation2 + $0x188] sm:$0xff]
    %v106 = vld [vmem:[#allocation2 + $0x190] sm:$0xff]
    %v107 = vld [vmem:[#allocation2 + $0x198] sm:$0xff]
    %v108 = vld [vmem:[#allocation2 + $0x1a0] sm:$0xff]
    %v109 = vld [vmem:[#allocation2 + $0x1a8] sm:$0xff]
    %v110 = vld [vmem:[#allocation2 + $0x1b0] sm:$0xff]
    %v111 = vld [vmem:[#allocation2 + $0x1b8] sm:$0xff]
    %v112 = vld [vmem:[#allocation2 + $0x1c0] sm:$0xff]
    %v113 = vld [vmem:[#allocation2 + $0x1c8] sm:$0xff]
    %v114 = vld [vmem:[#allocation2 + $0x1d0] sm:$0xff]
    %v115 = vld [vmem:[#allocation2 + $0x1d8] sm:$0xff]
    %v116 = vld [vmem:[#allocation2 + $0x1e0] sm:$0xff]
    %v117 = vld [vmem:[#allocation2 + $0x1e8] sm:$0xff]
    %v118 = vld [vmem:[#allocation2 + $0x1f0] sm:$0xff]
    %v119 = vld [vmem:[#allocation2 + $0x1f8] sm:$0xff]
    %v120 = vld [vmem:[#allocation2 + $0x200] sm:$0xff]
    %v121 = vld [vmem:[#allocation2 + $0x208] sm:$0xff]
    %v122 = vld [vmem:[#allocation2 + $0x210] sm:$0xff]
    %v123 = vld [vmem:[#allocation2 + $0x218] sm:$0xff]
    %v124 = vld [vmem:[#allocation2 + $0x220] sm:$0xff]
    %v125 = vld [vmem:[#allocation2 + $0x228] sm:$0xff]
    %v126 = vld [vmem:[#allocation2 + $0x230] sm:$0xff]
    %v127 = vld [vmem:[#allocation2 + $0x238] sm:$0xff]
    %v128 = vld [vmem:[#allocation2 + $0x240] sm:$0xff]
    %v129 = vld [vmem:[#allocation2 + $0x248] sm:$0xff]
    %v130 = vld [vmem:[#allocation2 + $0x250] sm:$0xff]
    %v131 = vld [vmem:[#allocation2 + $0x258] sm:$0xff]
    %v132 = vld [vmem:[#allocation2 + $0x260] sm:$0xff]
    %v133 = vld [vmem:[#allocation2 + $0x268] sm:$0xff]
    %v134 = vld [vmem:[#allocation2 + $0x270] sm:$0xff]
    %v135 = vld [vmem:[#allocation2 + $0x278] sm:$0xff]
    %v136 = vld [vmem:[#allocation2 + $0x280] sm:$0xff]
    %v137 = vld [vmem:[#allocation2 + $0x288] sm:$0xff]
    %v138 = vld [vmem:[#allocation2 + $0x290] sm:$0xff]
    %v139 = vld [vmem:[#allocation2 + $0x298] sm:$0xff]
    %v140 = vld [vmem:[#allocation2 + $0x2a0] sm:$0xff]
    %v141 = vld [vmem:[#allocation2 + $0x2a8] sm:$0xff]
    %v142 = vld [vmem:[#allocation2 + $0x2b0] sm:$0xff]
    %v143 = vld [vmem:[#allocation2 + $0x2b8] sm:$0xff]
    %v144 = vld [vmem:[#allocation2 + $0x2c0] sm:$0xff]
    %v145 = vld [vmem:[#allocation2 + $0x2c8] sm:$0xff]
    %v146 = vld [vmem:[#allocation2 + $0x2d0] sm:$0xff]
    %v147 = vld [vmem:[#allocation2 + $0x2d8] sm:$0xff]
    %v148 = vld [vmem:[#allocation2 + $0x2e0] sm:$0xff]
    %v149 = vld [vmem:[#allocation2 + $0x2e8] sm:$0xff]
    %v150 = vld [vmem:[#allocation2 + $0x2f0] sm:$0xff]
    %v151 = vld [vmem:[#allocation2 + $0x2f8] sm:$0xff]
    %v152 = vld [vmem:[#allocation2 + $0x300] sm:$0xff]
    %v153 = vld [vmem:[#allocation2 + $0x308] sm:$0xff]
    %v154 = vld [vmem:[#allocation2 + $0x310] sm:$0xff]
    %v155 = vld [vmem:[#allocation2 + $0x318] sm:$0xff]
    %v156 = vld [vmem:[#allocation2 + $0x320] sm:$0xff]
    %v157 = vld [vmem:[#allocation2 + $0x328] sm:$0xff]
    %v158 = vld [vmem:[#allocation2 + $0x330] sm:$0xff]
    %v159 = vld [vmem:[#allocation2 + $0x338] sm:$0xff]
    %v160 = vld [vmem:[#allocation2 + $0x340] sm:$0xff]
    %v161 = vld [vmem:[#allocation2 + $0x348] sm:$0xff]
    %v162 = vld [vmem:[#allocation2 + $0x350] sm:$0xff]
    %v163 = vld [vmem:[#allocation2 + $0x358] sm:$0xff]
    %v164 = vld [vmem:[#allocation2 + $0x360] sm:$0xff]
    %v165 = vld [vmem:[#allocation2 + $0x368] sm:$0xff]
    %v166 = vld [vmem:[#allocation2 + $0x370] sm:$0xff]
    %v167 = vld [vmem:[#allocation2 + $0x378] sm:$0xff]
    %v168 = vld [vmem:[#allocation2 + $0x380] sm:$0xff]
    %v169 = vld [vmem:[#allocation2 + $0x388] sm:$0xff]
    %v170 = vld [vmem:[#allocation2 + $0x390] sm:$0xff]
    %v171 = vld [vmem:[#allocation2 + $0x398] sm:$0xff]
    %v172 = vld [vmem:[#allocation2 + $0x3a0] sm:$0xff]
    %v173 = vld [vmem:[#allocation2 + $0x3a8] sm:$0xff]
    %v174 = vld [vmem:[#allocation2 + $0x3b0] sm:$0xff]
    %v175 = vld [vmem:[#allocation2 + $0x3b8] sm:$0xff]
    %v176 = vld [vmem:[#allocation2 + $0x3c0] sm:$0xff]
    %v177 = vld [vmem:[#allocation2 + $0x3c8] sm:$0xff]
    %v178 = vld [vmem:[#allocation2 + $0x3d0] sm:$0xff]
    %v179 = vld [vmem:[#allocation2 + $0x3d8] sm:$0xff]
    %v180 = vld [vmem:[#allocation2 + $0x3e0] sm:$0xff]
    %v181 = vld [vmem:[#allocation2 + $0x3e8] sm:$0xff]
    %v182 = vld [vmem:[#allocation2 + $0x3f0] sm:$0xff]
    %v183 = vld [vmem:[#allocation2 + $0x3f8] sm:$0xff]
    %v184 = vld [vmem:[%s2] sm:$0x3]
    %v186 = vlaneseq
    %v187 = vshrl.u32 %v186, 7
    %v188 = vsub.s32 0, %v187
    %v189 = vrot.slane %v184, %v188
    %v190 = vlaneseq
    %v191 = vshrl.u32 %v190, 7
    %v192 = vsub.s32 1, %v191
    %v193 = vrot.slane %v184, %v192
    %196 = vmatprep.subr.mxu0 %v57
    %197 = vmatpush1.msra.mxu0 %v56
    %198 = vmatprep.subr.mxu0 %v59
    %199 = vmatpush1.msra.mxu0 %v58
    %200 = vmatprep.subr.mxu0 %v61
    %201 = vmatpush1.msra.mxu0 %v60
    %202 = vmatprep.subr.mxu0 %v63
    %203 = vmatpush1.msra.mxu0 %v62
    %204 = vmatprep.subr.mxu0 %v65
    %205 = vmatpush1.msra.mxu0 %v64
    %206 = vmatprep.subr.mxu0 %v67
    %207 = vmatpush1.msra.mxu0 %v66
    %208 = vmatprep.subr.mxu0 %v69
    %209 = vmatpush1.msra.mxu0 %v68
    %210 = vmatprep.subr.mxu0 %v71
    %211 = vmatpush1.msra.mxu0 %v70
    %212 = vmatprep.subr.mxu0 %v73
    %213 = vmatpush1.msra.mxu0 %v72
    %214 = vmatprep.subr.mxu0 %v75
    %215 = vmatpush1.msra.mxu0 %v74
    %216 = vmatprep.subr.mxu0 %v77
    %217 = vmatpush1.msra.mxu0 %v76
    %218 = vmatprep.subr.mxu0 %v79
    %219 = vmatpush1.msra.mxu0 %v78
    %220 = vmatprep.subr.mxu0 %v81
    %221 = vmatpush1.msra.mxu0 %v80
    %222 = vmatprep.subr.mxu0 %v83
    %223 = vmatpush1.msra.mxu0 %v82
    %224 = vmatprep.subr.mxu0 %v85
    %225 = vmatpush1.msra.mxu0 %v84
    %226 = vmatprep.subr.mxu0 %v87
    %227 = vmatpush1.msra.mxu0 %v86
    %228 = vmatprep.subr.mxu0 %v89
    %229 = vmatpush1.msra.mxu0 %v88
    %230 = vmatprep.subr.mxu0 %v91
    %231 = vmatpush1.msra.mxu0 %v90
    %232 = vmatprep.subr.mxu0 %v93
    %233 = vmatpush1.msra.mxu0 %v92
    %234 = vmatprep.subr.mxu0 %v95
    %235 = vmatpush1.msra.mxu0 %v94
    %236 = vmatprep.subr.mxu0 %v97
    %237 = vmatpush1.msra.mxu0 %v96
    %238 = vmatprep.subr.mxu0 %v99
    %239 = vmatpush1.msra.mxu0 %v98
    %240 = vmatprep.subr.mxu0 %v101
    %241 = vmatpush1.msra.mxu0 %v100
    %242 = vmatprep.subr.mxu0 %v103
    %243 = vmatpush1.msra.mxu0 %v102
    %244 = vmatprep.subr.mxu0 %v105
    %245 = vmatpush1.msra.mxu0 %v104
    %246 = vmatprep.subr.mxu0 %v107
    %247 = vmatpush1.msra.mxu0 %v106
    %248 = vmatprep.subr.mxu0 %v109
    %249 = vmatpush1.msra.mxu0 %v108
    %250 = vmatprep.subr.mxu0 %v111
    %251 = vmatpush1.msra.mxu0 %v110
    %252 = vmatprep.subr.mxu0 %v113
    %253 = vmatpush1.msra.mxu0 %v112
    %254 = vmatprep.subr.mxu0 %v115
    %255 = vmatpush1.msra.mxu0 %v114
    %256 = vmatprep.subr.mxu0 %v117
    %257 = vmatpush1.msra.mxu0 %v116
    %258 = vmatprep.subr.mxu0 %v119
    %259 = vmatpush1.msra.mxu0 %v118
    %260 = vmatprep.mubr.f32.mxu0 %v49
    %261 = vmatmul.mubr.f32.gmra.mrb[0].mxu0 %v48
    %v262 = vpop.f32.mrb[0].mxu0
    %v263 = vadd.f32 %v189, %v262
    %v264 = vpop.f32.mrb[0].mxu0
    %v265 = vadd.f32 %v193, %v264
    %266 = vmatprep.mubr.f32.mxu0 %v53
    %267 = vmatmul.mubr.f32.gmra.mrb[0].mxu0 %v52
    %v268 = vpop.f32.mrb[0].mxu0
    %v269 = vadd.f32 %v189, %v268
    %v270 = vpop.f32.mrb[0].mxu0
    %v271 = vadd.f32 %v193, %v270
    %272 = vdwg.mxu0
    %273 = vmatprep.subr.mxu0 %v121
    %274 = vmatpush1.msra.mxu0 %v120
    %275 = vmatprep.subr.mxu0 %v123
    %276 = vmatpush1.msra.mxu0 %v122
    %277 = vmatprep.subr.mxu0 %v125
    %278 = vmatpush1.msra.mxu0 %v124
    %279 = vmatprep.subr.mxu0 %v127
    %280 = vmatpush1.msra.mxu0 %v126
    %281 = vmatprep.subr.mxu0 %v129
    %282 = vmatpush1.msra.mxu0 %v128
    %283 = vmatprep.subr.mxu0 %v131
    %284 = vmatpush1.msra.mxu0 %v130
    %285 = vmatprep.subr.mxu0 %v133
    %286 = vmatpush1.msra.mxu0 %v132
    %287 = vmatprep.subr.mxu0 %v135
    %288 = vmatpush1.msra.mxu0 %v134
    %289 = vmatprep.subr.mxu0 %v137
    %290 = vmatpush1.msra.mxu0 %v136
    %291 = vmatprep.subr.mxu0 %v139
    %292 = vmatpush1.msra.mxu0 %v138
    %293 = vmatprep.subr.mxu0 %v141
    %294 = vmatpush1.msra.mxu0 %v140
    %295 = vmatprep.subr.mxu0 %v143
    %296 = vmatpush1.msra.mxu0 %v142
    %297 = vmatprep.subr.mxu0 %v145
    %298 = vmatpush1.msra.mxu0 %v144
    %299 = vmatprep.subr.mxu0 %v147
    %300 = vmatpush1.msra.mxu0 %v146
    %301 = vmatprep.subr.mxu0 %v149
    %302 = vmatpush1.msra.mxu0 %v148
    %303 = vmatprep.subr.mxu0 %v151
    %304 = vmatpush1.msra.mxu0 %v150
    %305 = vmatprep.subr.mxu0 %v153
    %306 = vmatpush1.msra.mxu0 %v152
    %307 = vmatprep.subr.mxu0 %v155
    %308 = vmatpush1.msra.mxu0 %v154
    %309 = vmatprep.subr.mxu0 %v157
    %310 = vmatpush1.msra.mxu0 %v156
    %311 = vmatprep.subr.mxu0 %v159
    %312 = vmatpush1.msra.mxu0 %v158
    %313 = vmatprep.subr.mxu0 %v161
    %314 = vmatpush1.msra.mxu0 %v160
    %315 = vmatprep.subr.mxu0 %v163
    %316 = vmatpush1.msra.mxu0 %v162
    %317 = vmatprep.subr.mxu0 %v165
    %318 = vmatpush1.msra.mxu0 %v164
    %319 = vmatprep.subr.mxu0 %v167
    %320 = vmatpush1.msra.mxu0 %v166
    %321 = vmatprep.subr.mxu0 %v169
    %322 = vmatpush1.msra.mxu0 %v168
    %323 = vmatprep.subr.mxu0 %v171
    %324 = vmatpush1.msra.mxu0 %v170
    %325 = vmatprep.subr.mxu0 %v173
    %326 = vmatpush1.msra.mxu0 %v172
    %327 = vmatprep.subr.mxu0 %v175
    %328 = vmatpush1.msra.mxu0 %v174
    %329 = vmatprep.subr.mxu0 %v177
    %330 = vmatpush1.msra.mxu0 %v176
    %331 = vmatprep.subr.mxu0 %v179
    %332 = vmatpush1.msra.mxu0 %v178
    %333 = vmatprep.subr.mxu0 %v181
    %334 = vmatpush1.msra.mxu0 %v180
    %335 = vmatprep.subr.mxu0 %v183
    %336 = vmatpush1.msra.mxu0 %v182
    %337 = vmatprep.mubr.f32.mxu0 %v51
    %338 = vmatmul.mubr.f32.gmra.mrb[0].mxu0 %v50
    %v339 = vpop.f32.mrb[0].mxu0
    %v340 = vadd.f32 %v263, %v339
    %v341 = vpop.f32.mrb[0].mxu0
    %v342 = vadd.f32 %v265, %v341
    %343 = vmatprep.mubr.f32.mxu0 %v55
    %344 = vmatmul.mubr.f32.gmra.mrb[0].mxu0 %v54
    %v345 = vpop.f32.mrb[0].mxu0
    %v346 = vadd.f32 %v269, %v345
    %v347 = vpop.f32.mrb[0].mxu0
    %v348 = vadd.f32 %v271, %v347
    %349 = vdwg.mxu0
    %v350 = vtanh.pop %v340
    %v351 = vtanh.pop %v342
    %v352 = vtanh.pop %v346
    %v353 = vtanh.pop %v348
    %v354 = vld [vmem:[#allocation4] sm:$0xff]
    %v355 = vld [vmem:[#allocation4 + $0x8] sm:$0xff]
    %v356 = vld [vmem:[#allocation4 + $0x10] sm:$0xff]
    %v357 = vld [vmem:[#allocation4 + $0x18] sm:$0xff]
    %v358 = vld [vmem:[#allocation4 + $0x20] sm:$0xff]
    %v359 = vld [vmem:[#allocation4 + $0x28] sm:$0xff]
    %v360 = vld [vmem:[#allocation4 + $0x30] sm:$0xff]
    %v361 = vld [vmem:[#allocation4 + $0x38] sm:$0xff]
    %v362 = vld [vmem:[#allocation4 + $0x40] sm:$0xff]
    %v363 = vld [vmem:[#allocation4 + $0x48] sm:$0xff]
    %v364 = vld [vmem:[#allocation4 + $0x50] sm:$0xff]
    %v365 = vld [vmem:[#allocation4 + $0x58] sm:$0xff]
    %v366 = vld [vmem:[#allocation4 + $0x60] sm:$0xff]
    %v367 = vld [vmem:[#allocation4 + $0x68] sm:$0xff]
    %v368 = vld [vmem:[#allocation4 + $0x70] sm:$0xff]
    %v369 = vld [vmem:[#allocation4 + $0x78] sm:$0xff]
    %v370 = vld [vmem:[#allocation4 + $0x80] sm:$0xff]
    %v371 = vld [vmem:[#allocation4 + $0x88] sm:$0xff]
    %v372 = vld [vmem:[#allocation4 + $0x90] sm:$0xff]
    %v373 = vld [vmem:[#allocation4 + $0x98] sm:$0xff]
    %v374 = vld [vmem:[#allocation4 + $0xa0] sm:$0xff]
    %v375 = vld [vmem:[#allocation4 + $0xa8] sm:$0xff]
    %v376 = vld [vmem:[#allocation4 + $0xb0] sm:$0xff]
    %v377 = vld [vmem:[#allocation4 + $0xb8] sm:$0xff]
    %v378 = vld [vmem:[#allocation4 + $0xc0] sm:$0xff]
    %v379 = vld [vmem:[#allocation4 + $0xc8] sm:$0xff]
    %v380 = vld [vmem:[#allocation4 + $0xd0] sm:$0xff]
    %v381 = vld [vmem:[#allocation4 + $0xd8] sm:$0xff]
    %v382 = vld [vmem:[#allocation4 + $0xe0] sm:$0xff]
    %v383 = vld [vmem:[#allocation4 + $0xe8] sm:$0xff]
    %v384 = vld [vmem:[#allocation4 + $0xf0] sm:$0xff]
    %v385 = vld [vmem:[#allocation4 + $0xf8] sm:$0xff]
    %v386 = vld [vmem:[#allocation4 + $0x100] sm:$0xff]
    %v387 = vld [vmem:[#allocation4 + $0x108] sm:$0xff]
    %v388 = vld [vmem:[#allocation4 + $0x110] sm:$0xff]
    %v389 = vld [vmem:[#allocation4 + $0x118] sm:$0xff]
    %v390 = vld [vmem:[#allocation4 + $0x120] sm:$0xff]
    %v391 = vld [vmem:[#allocation4 + $0x128] sm:$0xff]
    %v392 = vld [vmem:[#allocation4 + $0x130] sm:$0xff]
    %v393 = vld [vmem:[#allocation4 + $0x138] sm:$0xff]
    %v394 = vld [vmem:[#allocation4 + $0x140] sm:$0xff]
    %v395 = vld [vmem:[#allocation4 + $0x148] sm:$0xff]
    %v396 = vld [vmem:[#allocation4 + $0x150] sm:$0xff]
    %v397 = vld [vmem:[#allocation4 + $0x158] sm:$0xff]
    %v398 = vld [vmem:[#allocation4 + $0x160] sm:$0xff]
    %v399 = vld [vmem:[#allocation4 + $0x168] sm:$0xff]
    %v400 = vld [vmem:[#allocation4 + $0x170] sm:$0xff]
    %v401 = vld [vmem:[#allocation4 + $0x178] sm:$0xff]
    %v402 = vld [vmem:[#allocation4 + $0x180] sm:$0xff]
    %v403 = vld [vmem:[#allocation4 + $0x188] sm:$0xff]
    %v404 = vld [vmem:[#allocation4 + $0x190] sm:$0xff]
    %v405 = vld [vmem:[#allocation4 + $0x198] sm:$0xff]
    %v406 = vld [vmem:[#allocation4 + $0x1a0] sm:$0xff]
    %v407 = vld [vmem:[#allocation4 + $0x1a8] sm:$0xff]
    %v408 = vld [vmem:[#allocation4 + $0x1b0] sm:$0xff]
    %v409 = vld [vmem:[#allocation4 + $0x1b8] sm:$0xff]
    %v410 = vld [vmem:[#allocation4 + $0x1c0] sm:$0xff]
    %v411 = vld [vmem:[#allocation4 + $0x1c8] sm:$0xff]
    %v412 = vld [vmem:[#allocation4 + $0x1d0] sm:$0xff]
    %v413 = vld [vmem:[#allocation4 + $0x1d8] sm:$0xff]
    %v414 = vld [vmem:[#allocation4 + $0x1e0] sm:$0xff]
    %v415 = vld [vmem:[#allocation4 + $0x1e8] sm:$0xff]
    %v416 = vld [vmem:[#allocation4 + $0x1f0] sm:$0xff]
    %v417 = vld [vmem:[#allocation4 + $0x1f8] sm:$0xff]
    %v418 = vld [vmem:[#allocation4 + $0x200] sm:$0xff]
    %v419 = vld [vmem:[#allocation4 + $0x208] sm:$0xff]
    %v420 = vld [vmem:[#allocation4 + $0x210] sm:$0xff]
    %v421 = vld [vmem:[#allocation4 + $0x218] sm:$0xff]
    %v422 = vld [vmem:[#allocation4 + $0x220] sm:$0xff]
    %v423 = vld [vmem:[#allocation4 + $0x228] sm:$0xff]
    %v424 = vld [vmem:[#allocation4 + $0x230] sm:$0xff]
    %v425 = vld [vmem:[#allocation4 + $0x238] sm:$0xff]
    %v426 = vld [vmem:[#allocation4 + $0x240] sm:$0xff]
    %v427 = vld [vmem:[#allocation4 + $0x248] sm:$0xff]
    %v428 = vld [vmem:[#allocation4 + $0x250] sm:$0xff]
    %v429 = vld [vmem:[#allocation4 + $0x258] sm:$0xff]
    %v430 = vld [vmem:[#allocation4 + $0x260] sm:$0xff]
    %v431 = vld [vmem:[#allocation4 + $0x268] sm:$0xff]
    %v432 = vld [vmem:[#allocation4 + $0x270] sm:$0xff]
    %v433 = vld [vmem:[#allocation4 + $0x278] sm:$0xff]
    %v434 = vld [vmem:[#allocation4 + $0x280] sm:$0xff]
    %v435 = vld [vmem:[#allocation4 + $0x288] sm:$0xff]
    %v436 = vld [vmem:[#allocation4 + $0x290] sm:$0xff]
    %v437 = vld [vmem:[#allocation4 + $0x298] sm:$0xff]
    %v438 = vld [vmem:[#allocation4 + $0x2a0] sm:$0xff]
    %v439 = vld [vmem:[#allocation4 + $0x2a8] sm:$0xff]
    %v440 = vld [vmem:[#allocation4 + $0x2b0] sm:$0xff]
    %v441 = vld [vmem:[#allocation4 + $0x2b8] sm:$0xff]
    %v442 = vld [vmem:[#allocation4 + $0x2c0] sm:$0xff]
    %v443 = vld [vmem:[#allocation4 + $0x2c8] sm:$0xff]
    %v444 = vld [vmem:[#allocation4 + $0x2d0] sm:$0xff]
    %v445 = vld [vmem:[#allocation4 + $0x2d8] sm:$0xff]
    %v446 = vld [vmem:[#allocation4 + $0x2e0] sm:$0xff]
    %v447 = vld [vmem:[#allocation4 + $0x2e8] sm:$0xff]
    %v448 = vld [vmem:[#allocation4 + $0x2f0] sm:$0xff]
    %v449 = vld [vmem:[#allocation4 + $0x2f8] sm:$0xff]
    %v450 = vld [vmem:[#allocation4 + $0x300] sm:$0xff]
    %v451 = vld [vmem:[#allocation4 + $0x308] sm:$0xff]
    %v452 = vld [vmem:[#allocation4 + $0x310] sm:$0xff]
    %v453 = vld [vmem:[#allocation4 + $0x318] sm:$0xff]
    %v454 = vld [vmem:[#allocation4 + $0x320] sm:$0xff]
    %v455 = vld [vmem:[#allocation4 + $0x328] sm:$0xff]
    %v456 = vld [vmem:[#allocation4 + $0x330] sm:$0xff]
    %v457 = vld [vmem:[#allocation4 + $0x338] sm:$0xff]
    %v458 = vld [vmem:[#allocation4 + $0x340] sm:$0xff]
    %v459 = vld [vmem:[#allocation4 + $0x348] sm:$0xff]
    %v460 = vld [vmem:[#allocation4 + $0x350] sm:$0xff]
    %v461 = vld [vmem:[#allocation4 + $0x358] sm:$0xff]
    %v462 = vld [vmem:[#allocation4 + $0x360] sm:$0xff]
    %v463 = vld [vmem:[#allocation4 + $0x368] sm:$0xff]
    %v464 = vld [vmem:[#allocation4 + $0x370] sm:$0xff]
    %v465 = vld [vmem:[#allocation4 + $0x378] sm:$0xff]
    %v466 = vld [vmem:[#allocation4 + $0x380] sm:$0xff]
    %v467 = vld [vmem:[#allocation4 + $0x388] sm:$0xff]
    %v468 = vld [vmem:[#allocation4 + $0x390] sm:$0xff]
    %v469 = vld [vmem:[#allocation4 + $0x398] sm:$0xff]
    %v470 = vld [vmem:[#allocation4 + $0x3a0] sm:$0xff]
    %v471 = vld [vmem:[#allocation4 + $0x3a8] sm:$0xff]
    %v472 = vld [vmem:[#allocation4 + $0x3b0] sm:$0xff]
    %v473 = vld [vmem:[#allocation4 + $0x3b8] sm:$0xff]
    %v474 = vld [vmem:[#allocation4 + $0x3c0] sm:$0xff]
    %v475 = vld [vmem:[#allocation4 + $0x3c8] sm:$0xff]
    %v476 = vld [vmem:[#allocation4 + $0x3d0] sm:$0xff]
    %v477 = vld [vmem:[#allocation4 + $0x3d8] sm:$0xff]
    %v478 = vld [vmem:[#allocation4 + $0x3e0] sm:$0xff]
    %v479 = vld [vmem:[#allocation4 + $0x3e8] sm:$0xff]
    %v480 = vld [vmem:[#allocation4 + $0x3f0] sm:$0xff]
    %v481 = vld [vmem:[#allocation4 + $0x3f8] sm:$0xff]
    %v482 = vld [vmem:[%s4] sm:$0xf]
    %v484 = vlaneseq
    %v485 = vshrl.u32 %v484, 7
    %v486 = vsub.s32 0, %v485
    %v487 = vrot.slane %v482, %v486
    %v488 = vlaneseq
    %v489 = vshrl.u32 %v488, 7
    %v490 = vsub.s32 1, %v489
    %v491 = vrot.slane %v482, %v490
    %v492 = vlaneseq
    %v493 = vshrl.u32 %v492, 7
    %v494 = vsub.s32 2, %v493
    %v495 = vrot.slane %v482, %v494
    %v496 = vlaneseq
    %v497 = vshrl.u32 %v496, 7
    %v498 = vsub.s32 3, %v497
    %v499 = vrot.slane %v482, %v498
    %504 = vmatprep.subr.mxu0 %v355
    %505 = vmatpush1.msra.mxu0 %v354
    %506 = vmatprep.subr.mxu0 %v359
    %507 = vmatpush1.msra.mxu0 %v358
    %508 = vmatprep.subr.mxu0 %v363
    %509 = vmatpush1.msra.mxu0 %v362
    %510 = vmatprep.subr.mxu0 %v367
    %511 = vmatpush1.msra.mxu0 %v366
    %512 = vmatprep.subr.mxu0 %v371
    %513 = vmatpush1.msra.mxu0 %v370
    %514 = vmatprep.subr.mxu0 %v375
    %515 = vmatpush1.msra.mxu0 %v374
    %516 = vmatprep.subr.mxu0 %v379
    %517 = vmatpush1.msra.mxu0 %v378
    %518 = vmatprep.subr.mxu0 %v383
    %519 = vmatpush1.msra.mxu0 %v382
    %520 = vmatprep.subr.mxu0 %v387
    %521 = vmatpush1.msra.mxu0 %v386
    %522 = vmatprep.subr.mxu0 %v391
    %523 = vmatpush1.msra.mxu0 %v390
    %524 = vmatprep.subr.mxu0 %v395
    %525 = vmatpush1.msra.mxu0 %v394
    %526 = vmatprep.subr.mxu0 %v399
    %527 = vmatpush1.msra.mxu0 %v398
    %528 = vmatprep.subr.mxu0 %v403
    %529 = vmatpush1.msra.mxu0 %v402
    %530 = vmatprep.subr.mxu0 %v407
    %531 = vmatpush1.msra.mxu0 %v406
    %532 = vmatprep.subr.mxu0 %v411
    %533 = vmatpush1.msra.mxu0 %v410
    %534 = vmatprep.subr.mxu0 %v415
    %535 = vmatpush1.msra.mxu0 %v414
    %536 = vmatprep.subr.mxu0 %v419
    %537 = vmatpush1.msra.mxu0 %v418
    %538 = vmatprep.subr.mxu0 %v423
    %539 = vmatpush1.msra.mxu0 %v422
    %540 = vmatprep.subr.mxu0 %v427
    %541 = vmatpush1.msra.mxu0 %v426
    %542 = vmatprep.subr.mxu0 %v431
    %543 = vmatpush1.msra.mxu0 %v430
    %544 = vmatprep.subr.mxu0 %v435
    %545 = vmatpush1.msra.mxu0 %v434
    %546 = vmatprep.subr.mxu0 %v439
    %547 = vmatpush1.msra.mxu0 %v438
    %548 = vmatprep.subr.mxu0 %v443
    %549 = vmatpush1.msra.mxu0 %v442
    %550 = vmatprep.subr.mxu0 %v447
    %551 = vmatpush1.msra.mxu0 %v446
    %552 = vmatprep.subr.mxu0 %v451
    %553 = vmatpush1.msra.mxu0 %v450
    %554 = vmatprep.subr.mxu0 %v455
    %555 = vmatpush1.msra.mxu0 %v454
    %556 = vmatprep.subr.mxu0 %v459
    %557 = vmatpush1.msra.mxu0 %v458
    %558 = vmatprep.subr.mxu0 %v463
    %559 = vmatpush1.msra.mxu0 %v462
    %560 = vmatprep.subr.mxu0 %v467
    %561 = vmatpush1.msra.mxu0 %v466
    %562 = vmatprep.subr.mxu0 %v471
    %563 = vmatpush1.msra.mxu0 %v470
    %564 = vmatprep.subr.mxu0 %v475
    %565 = vmatpush1.msra.mxu0 %v474
    %566 = vmatprep.subr.mxu0 %v479
    %567 = vmatpush1.msra.mxu0 %v478
    %568 = vmatprep.mubr.f32.mxu0 %v351
    %569 = vmatmul.mubr.f32.gmra.mrb[0].mxu0 %v350
    %v570 = vpop.f32.mrb[0].mxu0
    %v571 = vadd.f32 %v487, %v570
    %v572 = vpop.f32.mrb[0].mxu0
    %v573 = vadd.f32 %v491, %v572
    %574 = vmatprep.mubr.f32.mxu0 %v353
    %575 = vmatmul.mubr.f32.gmra.mrb[0].mxu0 %v352
    %v576 = vpop.f32.mrb[0].mxu0
    %v577 = vadd.f32 %v487, %v576
    %v578 = vpop.f32.mrb[0].mxu0
    %v579 = vadd.f32 %v491, %v578
    %580 = vdwg.mxu0
    %581 = vmatprep.subr.mxu0 %v357
    %582 = vmatpush1.msra.mxu0 %v356
    %583 = vmatprep.subr.mxu0 %v361
    %584 = vmatpush1.msra.mxu0 %v360
    %585 = vmatprep.subr.mxu0 %v365
    %586 = vmatpush1.msra.mxu0 %v364
    %587 = vmatprep.subr.mxu0 %v369
    %588 = vmatpush1.msra.mxu0 %v368
    %589 = vmatprep.subr.mxu0 %v373
    %590 = vmatpush1.msra.mxu0 %v372
    %591 = vmatprep.subr.mxu0 %v377
    %592 = vmatpush1.msra.mxu0 %v376
    %593 = vmatprep.subr.mxu0 %v381
    %594 = vmatpush1.msra.mxu0 %v380
    %595 = vmatprep.subr.mxu0 %v385
    %596 = vmatpush1.msra.mxu0 %v384
    %597 = vmatprep.subr.mxu0 %v389
    %598 = vmatpush1.msra.mxu0 %v388
    %599 = vmatprep.subr.mxu0 %v393
    %600 = vmatpush1.msra.mxu0 %v392
    %601 = vmatprep.subr.mxu0 %v397
    %602 = vmatpush1.msra.mxu0 %v396
    %603 = vmatprep.subr.mxu0 %v401
    %604 = vmatpush1.msra.mxu0 %v400
    %605 = vmatprep.subr.mxu0 %v405
    %606 = vmatpush1.msra.mxu0 %v404
    %607 = vmatprep.subr.mxu0 %v409
    %608 = vmatpush1.msra.mxu0 %v408
    %609 = vmatprep.subr.mxu0 %v413
    %610 = vmatpush1.msra.mxu0 %v412
    %611 = vmatprep.subr.mxu0 %v417
    %612 = vmatpush1.msra.mxu0 %v416
    %613 = vmatprep.subr.mxu0 %v421
    %614 = vmatpush1.msra.mxu0 %v420
    %615 = vmatprep.subr.mxu0 %v425
    %616 = vmatpush1.msra.mxu0 %v424
    %617 = vmatprep.subr.mxu0 %v429
    %618 = vmatpush1.msra.mxu0 %v428
    %619 = vmatprep.subr.mxu0 %v433
    %620 = vmatpush1.msra.mxu0 %v432
    %621 = vmatprep.subr.mxu0 %v437
    %622 = vmatpush1.msra.mxu0 %v436
    %623 = vmatprep.subr.mxu0 %v441
    %624 = vmatpush1.msra.mxu0 %v440
    %625 = vmatprep.subr.mxu0 %v445
    %626 = vmatpush1.msra.mxu0 %v444
    %627 = vmatprep.subr.mxu0 %v449
    %628 = vmatpush1.msra.mxu0 %v448
    %629 = vmatprep.subr.mxu0 %v453
    %630 = vmatpush1.msra.mxu0 %v452
    %631 = vmatprep.subr.mxu0 %v457
    %632 = vmatpush1.msra.mxu0 %v456
    %633 = vmatprep.subr.mxu0 %v461
    %634 = vmatpush1.msra.mxu0 %v460
    %635 = vmatprep.subr.mxu0 %v465
    %636 = vmatpush1.msra.mxu0 %v464
    %637 = vmatprep.subr.mxu0 %v469
    %638 = vmatpush1.msra.mxu0 %v468
    %639 = vmatprep.subr.mxu0 %v473
    %640 = vmatpush1.msra.mxu0 %v472
    %641 = vmatprep.subr.mxu0 %v477
    %642 = vmatpush1.msra.mxu0 %v476
    %643 = vmatprep.subr.mxu0 %v481
    %644 = vmatpush1.msra.mxu0 %v480
    %645 = vmatprep.mubr.f32.mxu0 %v351
    %646 = vmatmul.mubr.f32.gmra.mrb[0].mxu0 %v350
    %v647 = vpop.f32.mrb[0].mxu0
    %v648 = vadd.f32 %v495, %v647
    %v649 = vpop.f32.mrb[0].mxu0
    %v650 = vadd.f32 %v499, %v649
    %651 = vmatprep.mubr.f32.mxu0 %v353
    %652 = vmatmul.mubr.f32.gmra.mrb[0].mxu0 %v352
    %v653 = vpop.f32.mrb[0].mxu0
    %v654 = vadd.f32 %v495, %v653
    %v655 = vpop.f32.mrb[0].mxu0
    %v656 = vadd.f32 %v499, %v655
    %657 = vdwg.mxu0
    %658 = vst [vmem:[%s5] sm:$0xff] %v571
    %659 = vst [vmem:[%s5 + $0x8] sm:$0xff] %v573
    %660 = vst [vmem:[%s5 + $0x10] sm:$0xff] %v648
    %661 = vst [vmem:[%s5 + $0x18] sm:$0xff] %v650
    %662 = vst [vmem:[%s5 + $0x20] sm:$0xff] %v577
    %663 = vst [vmem:[%s5 + $0x28] sm:$0xff] %v579
    %664 = vst [vmem:[%s5 + $0x30] sm:$0xff] %v654
    %665 = vst [vmem:[%s5 + $0x38] sm:$0xff] %v656
    // Predicated region
    $region30: #{dkf_v_forward.3} parent=1 // pred_check
      _
    $region31: #{dkf_v_forward.3} parent=1 // pred_check_branch
      %667 = sbr.rel (0) target = $region33
    $region32: #{dkf_v_forward.3} parent=1 // pred_region
      _
    $region33: #{dkf_v_forward.3} parent=1 // pred_fallthru
      _
    // Predicated region
    $region34: #{dkf_v_forward.3} parent=1 // pred_check
      _
    $region35: #{dkf_v_forward.3} parent=1 // pred_check_branch
      %669 = sbr.rel (0) target = $region37
    $region36: #{dkf_v_forward.3} parent=1 // pred_region
      _
    $region37: #{dkf_v_forward.3} parent=1 // pred_fallthru
      _
    %670 = vsyncpa [#allocation3], 1
    %671 = vsyncpa [#allocation5], 1

// kernel: dkf_v_forward.4
$region0: #{dkf_v_forward.4}
  #allocation0 [shape = 'u32[]', space=smem, size = 0x4, offset = 0x4, fixed_abs, tag = 'smem constant byte address 0x4 - core index']
  #allocation1 [shape = 'u32[144,128]{1,0:T(1,128)}', space=vmem, size = 0x12000, scoped, tag = 'internal scratch']
  #allocation2 [shape = 'f32[8,2,128]{2,1,0:T(2,128)}', space=vmem, size = 0x2000, scoped, tag = 'scratch operand']
  %s0 = inlined_call_operand.vmem [shape: f32[8,2,512], index: 0, kind: input, shape index: {}]
  %s1 = inlined_call_operand.vmem [shape: f32[8,2,16], index: 1, kind: input, shape index: {}]
  %s2 = inlined_call_operand.vmem [shape: f32[128,512], index: 2, kind: input, shape index: {}]
  %s3 = inlined_call_operand.vmem [shape: f32[16,32], index: 3, kind: input, shape index: {}]
  %s4 = inlined_call_operand.vmem [shape: f32[1,32], index: 4, kind: input, shape index: {}]
  %s5 = inlined_call_operand.vmem [shape: f32[32,64], index: 5, kind: input, shape index: {}]
  %s6 = inlined_call_operand.vmem [shape: f32[1,64], index: 6, kind: input, shape index: {}]
  %s7 = inlined_call_operand.vmem [shape: f32[64,128], index: 7, kind: input, shape index: {}]
  %s8 = inlined_call_operand.vmem [shape: f32[1,128], index: 8, kind: input, shape index: {}]
  %s9 = inlined_call_operand.vmem [shape: f32[128,64], index: 9, kind: input, shape index: {}]
  %s10 = inlined_call_operand.vmem [shape: f32[1,64], index: 10, kind: input, shape index: {}]
  %s11 = inlined_call_operand.vmem [shape: f32[64,32], index: 11, kind: input, shape index: {}]
  %s12 = inlined_call_operand.vmem [shape: f32[1,32], index: 12, kind: input, shape index: {}]
  %s13 = inlined_call_operand.vmem [shape: f32[32,32], index: 13, kind: input, shape index: {}]
  %s14 = inlined_call_operand.vmem [shape: f32[1,32], index: 14, kind: input, shape index: {}]
  %s15 = inlined_call_operand.vmem [shape: f32[8,2,64], index: 15, kind: output, shape index: {}]
  %s16 = sld [smem:[#allocation0]]
  $region84: #{dkf_v_forward.4} parent=0
    _
  %s18 = ssub.s32 1, %s16
  %s19 = scalar_select 0, %s18, %s16
  // Predicated region
  $region2: #{dkf_v_forward.4} parent=0 // pred_check
    _
  $region3: #{dkf_v_forward.4} parent=0 // pred_check_branch
    %21 = sbr.rel (0) target = $region5
  $region4: #{dkf_v_forward.4} parent=0 // pred_region
    _
  $region5: #{dkf_v_forward.4} parent=0 // pred_fallthru
    _
  // Predicated region
  $region6: #{dkf_v_forward.4} parent=0 // pred_check
    _
  $region7: #{dkf_v_forward.4} parent=0 // pred_check_branch
    %23 = sbr.rel (0) target = $region9
  $region8: #{dkf_v_forward.4} parent=0 // pred_region
    _
  $region9: #{dkf_v_forward.4} parent=0 // pred_fallthru
    _
  // Predicated region
  $region10: #{dkf_v_forward.4} parent=0 // pred_check
    _
  $region11: #{dkf_v_forward.4} parent=0 // pred_check_branch
    %25 = sbr.rel (0) target = $region13
  $region12: #{dkf_v_forward.4} parent=0 // pred_region
    _
  $region13: #{dkf_v_forward.4} parent=0 // pred_fallthru
    _
  // Predicated region
  $region14: #{dkf_v_forward.4} parent=0 // pred_check
    _
  $region15: #{dkf_v_forward.4} parent=0 // pred_check_branch
    %27 = sbr.rel (0) target = $region17
  $region16: #{dkf_v_forward.4} parent=0 // pred_region
    _
  $region17: #{dkf_v_forward.4} parent=0 // pred_fallthru
    _
  // Predicated region
  $region18: #{dkf_v_forward.4} parent=0 // pred_check
    _
  $region19: #{dkf_v_forward.4} parent=0 // pred_check_branch
    %29 = sbr.rel (0) target = $region21
  $region20: #{dkf_v_forward.4} parent=0 // pred_region
    _
  $region21: #{dkf_v_forward.4} parent=0 // pred_fallthru
    _
  // Predicated region
  $region22: #{dkf_v_forward.4} parent=0 // pred_check
    _
  $region23: #{dkf_v_forward.4} parent=0 // pred_check_branch
    %31 = sbr.rel (0) target = $region25
  $region24: #{dkf_v_forward.4} parent=0 // pred_region
    _
  $region25: #{dkf_v_forward.4} parent=0 // pred_fallthru
    _
  // Predicated region
  $region26: #{dkf_v_forward.4} parent=0 // pred_check
    _
  $region27: #{dkf_v_forward.4} parent=0 // pred_check_branch
    %33 = sbr.rel (0) target = $region29
  $region28: #{dkf_v_forward.4} parent=0 // pred_region
    _
  $region29: #{dkf_v_forward.4} parent=0 // pred_fallthru
    _
  // Predicated region
  $region30: #{dkf_v_forward.4} parent=0 // pred_check
    _
  $region31: #{dkf_v_forward.4} parent=0 // pred_check_branch
    %35 = sbr.rel (0) target = $region33
  $region32: #{dkf_v_forward.4} parent=0 // pred_region
    _
  $region33: #{dkf_v_forward.4} parent=0 // pred_fallthru
    _
  // Predicated region
  $region34: #{dkf_v_forward.4} parent=0 // pred_check
    _
  $region35: #{dkf_v_forward.4} parent=0 // pred_check_branch
    %37 = sbr.rel (0) target = $region37
  $region36: #{dkf_v_forward.4} parent=0 // pred_region
    _
  $region37: #{dkf_v_forward.4} parent=0 // pred_fallthru
    _
  // Predicated region
  $region38: #{dkf_v_forward.4} parent=0 // pred_check
    _
  $region39: #{dkf_v_forward.4} parent=0 // pred_check_branch
    %39 = sbr.rel (0) target = $region41
  $region40: #{dkf_v_forward.4} parent=0 // pred_region
    _
  $region41: #{dkf_v_forward.4} parent=0 // pred_fallthru
    _
  // Predicated region
  $region42: #{dkf_v_forward.4} parent=0 // pred_check
    _
  $region43: #{dkf_v_forward.4} parent=0 // pred_check_branch
    %41 = sbr.rel (0) target = $region45
  $region44: #{dkf_v_forward.4} parent=0 // pred_region
    _
  $region45: #{dkf_v_forward.4} parent=0 // pred_fallthru
    _
  // Predicated region
  $region46: #{dkf_v_forward.4} parent=0 // pred_check
    _
  $region47: #{dkf_v_forward.4} parent=0 // pred_check_branch
    %43 = sbr.rel (0) target = $region49
  $region48: #{dkf_v_forward.4} parent=0 // pred_region
    _
  $region49: #{dkf_v_forward.4} parent=0 // pred_fallthru
    _
  // Predicated region
  $region50: #{dkf_v_forward.4} parent=0 // pred_check
    _
  $region51: #{dkf_v_forward.4} parent=0 // pred_check_branch
    %45 = sbr.rel (0) target = $region53
  $region52: #{dkf_v_forward.4} parent=0 // pred_region
    _
  $region53: #{dkf_v_forward.4} parent=0 // pred_fallthru
    _
  // Predicated region
  $region54: #{dkf_v_forward.4} parent=0 // pred_check
    _
  $region55: #{dkf_v_forward.4} parent=0 // pred_check_branch
    %47 = sbr.rel (0) target = $region57
  $region56: #{dkf_v_forward.4} parent=0 // pred_region
    _
  $region57: #{dkf_v_forward.4} parent=0 // pred_fallthru
    _
  // Predicated region
  $region58: #{dkf_v_forward.4} parent=0 // pred_check
    _
  $region59: #{dkf_v_forward.4} parent=0 // pred_check_branch
    %49 = sbr.rel (0) target = $region61
  $region60: #{dkf_v_forward.4} parent=0 // pred_region
    _
  $region61: #{dkf_v_forward.4} parent=0 // pred_fallthru
    _
  %v50 = vld [vmem:[%s2] sm:$0xff]
  %v51 = vld [vmem:[%s2 + $0x8] sm:$0xff]
  %v52 = vld [vmem:[%s2 + $0x10] sm:$0xff]
  %v53 = vld [vmem:[%s2 + $0x18] sm:$0xff]
  %v54 = vld [vmem:[%s2 + $0x20] sm:$0xff]
  %v55 = vld [vmem:[%s2 + $0x28] sm:$0xff]
  %v56 = vld [vmem:[%s2 + $0x30] sm:$0xff]
  %v57 = vld [vmem:[%s2 + $0x38] sm:$0xff]
  %v58 = vld [vmem:[%s2 + $0x40] sm:$0xff]
  %v59 = vld [vmem:[%s2 + $0x48] sm:$0xff]
  %v60 = vld [vmem:[%s2 + $0x50] sm:$0xff]
  %v61 = vld [vmem:[%s2 + $0x58] sm:$0xff]
  %v62 = vld [vmem:[%s2 + $0x60] sm:$0xff]
  %v63 = vld [vmem:[%s2 + $0x68] sm:$0xff]
  %v64 = vld [vmem:[%s2 + $0x70] sm:$0xff]
  %v65 = vld [vmem:[%s2 + $0x78] sm:$0xff]
  %v66 = vld [vmem:[%s2 + $0x80] sm:$0xff]
  %v67 = vld [vmem:[%s2 + $0x88] sm:$0xff]
  %v68 = vld [vmem:[%s2 + $0x90] sm:$0xff]
  %v69 = vld [vmem:[%s2 + $0x98] sm:$0xff]
  %v70 = vld [vmem:[%s2 + $0xa0] sm:$0xff]
  %v71 = vld [vmem:[%s2 + $0xa8] sm:$0xff]
  %v72 = vld [vmem:[%s2 + $0xb0] sm:$0xff]
  %v73 = vld [vmem:[%s2 + $0xb8] sm:$0xff]
  %v74 = vld [vmem:[%s2 + $0xc0] sm:$0xff]
  %v75 = vld [vmem:[%s2 + $0xc8] sm:$0xff]
  %v76 = vld [vmem:[%s2 + $0xd0] sm:$0xff]
  %v77 = vld [vmem:[%s2 + $0xd8] sm:$0xff]
  %v78 = vld [vmem:[%s2 + $0xe0] sm:$0xff]
  %v79 = vld [vmem:[%s2 + $0xe8] sm:$0xff]
  %v80 = vld [vmem:[%s2 + $0xf0] sm:$0xff]
  %v81 = vld [vmem:[%s2 + $0xf8] sm:$0xff]
  %v82 = vld [vmem:[%s2 + $0x100] sm:$0xff]
  %v83 = vld [vmem:[%s2 + $0x108] sm:$0xff]
  %v84 = vld [vmem:[%s2 + $0x110] sm:$0xff]
  %v85 = vld [vmem:[%s2 + $0x118] sm:$0xff]
  %v86 = vld [vmem:[%s2 + $0x120] sm:$0xff]
  %v87 = vld [vmem:[%s2 + $0x128] sm:$0xff]
  %v88 = vld [vmem:[%s2 + $0x130] sm:$0xff]
  %v89 = vld [vmem:[%s2 + $0x138] sm:$0xff]
  %v90 = vld [vmem:[%s2 + $0x140] sm:$0xff]
  %v91 = vld [vmem:[%s2 + $0x148] sm:$0xff]
  %v92 = vld [vmem:[%s2 + $0x150] sm:$0xff]
  %v93 = vld [vmem:[%s2 + $0x158] sm:$0xff]
  %v94 = vld [vmem:[%s2 + $0x160] sm:$0xff]
  %v95 = vld [vmem:[%s2 + $0x168] sm:$0xff]
  %v96 = vld [vmem:[%s2 + $0x170] sm:$0xff]
  %v97 = vld [vmem:[%s2 + $0x178] sm:$0xff]
  %v98 = vld [vmem:[%s2 + $0x180] sm:$0xff]
  %v99 = vld [vmem:[%s2 + $0x188] sm:$0xff]
  %v100 = vld [vmem:[%s2 + $0x190] sm:$0xff]
  %v101 = vld [vmem:[%s2 + $0x198] sm:$0xff]
  %v102 = vld [vmem:[%s2 + $0x1a0] sm:$0xff]
  %v103 = vld [vmem:[%s2 + $0x1a8] sm:$0xff]
  %v104 = vld [vmem:[%s2 + $0x1b0] sm:$0xff]
  %v105 = vld [vmem:[%s2 + $0x1b8] sm:$0xff]
  %v106 = vld [vmem:[%s2 + $0x1c0] sm:$0xff]
  %v107 = vld [vmem:[%s2 + $0x1c8] sm:$0xff]
  %v108 = vld [vmem:[%s2 + $0x1d0] sm:$0xff]
  %v109 = vld [vmem:[%s2 + $0x1d8] sm:$0xff]
  %v110 = vld [vmem:[%s2 + $0x1e0] sm:$0xff]
  %v111 = vld [vmem:[%s2 + $0x1e8] sm:$0xff]
  %v112 = vld [vmem:[%s2 + $0x1f0] sm:$0xff]
  %v113 = vld [vmem:[%s2 + $0x1f8] sm:$0xff]
  loop: start=0, step=1, limit=8
  $region62: #{dkf_v_forward.4} parent=0 // loop_pre_header
    _
  $region63: #{dkf_v_forward.4} parent=0 // loop_header
    %s115 = sphi 0, %s119
    %p116 = scmp.ge.s32.totalorder %s115, 8
    %v120 = vphi 0.0, %v322
    %v121 = vphi 0.0, %v320
  $region64: #{dkf_v_forward.4} parent=0 // loop_header_branch
    %118 = sbr.rel (%p116) target = $region68
  $region65: #{dkf_v_forward.4} parent=0 // loop_body
    %s122 = ssub.s32 7, %s115
    %s123 = smul.u32 %s122, 4
    %s124 = smul.addr %s123, 2
    %s125 = scalar_lea.vmem %s0, %s124
    %v126 = vld [vmem:[%s125] sm:$0xff]
    %127 = vmatprep.subr.mxu0 %v51
    %128 = vmatpush1.msra.mxu0 %v50
    %129 = vmatprep.subr.mxu0 %v55
    %130 = vmatpush1.msra.mxu0 %v54
    %131 = vmatprep.subr.mxu0 %v59
    %132 = vmatpush1.msra.mxu0 %v58
    %133 = vmatprep.subr.mxu0 %v63
    %134 = vmatpush1.msra.mxu0 %v62
    %135 = vmatprep.subr.mxu0 %v67
    %136 = vmatpush1.msra.mxu0 %v66
    %137 = vmatprep.subr.mxu0 %v71
    %138 = vmatpush1.msra.mxu0 %v70
    %139 = vmatprep.subr.mxu0 %v75
    %140 = vmatpush1.msra.mxu0 %v74
    %141 = vmatprep.subr.mxu0 %v79
    %142 = vmatpush1.msra.mxu0 %v78
    %143 = vmatprep.subr.mxu0 %v83
    %144 = vmatpush1.msra.mxu0 %v82
    %145 = vmatprep.subr.mxu0 %v87
    %146 = vmatpush1.msra.mxu0 %v86
    %147 = vmatprep.subr.mxu0 %v91
    %148 = vmatpush1.msra.mxu0 %v90
    %149 = vmatprep.subr.mxu0 %v95
    %150 = vmatpush1.msra.mxu0 %v94
    %151 = vmatprep.subr.mxu0 %v99
    %152 = vmatpush1.msra.mxu0 %v98
    %153 = vmatprep.subr.mxu0 %v103
    %154 = vmatpush1.msra.mxu0 %v102
    %155 = vmatprep.subr.mxu0 %v107
    %156 = vmatpush1.msra.mxu0 %v106
    %157 = vmatprep.subr.mxu0 %v111
    %158 = vmatpush1.msra.mxu0 %v110
    %159 = vmatprep.subr.mxu0 0.0
    %160 = vmatpush1.msra.mxu0 0.0
    %161 = vmatprep.subr.mxu0 0.0
    %162 = vmatpush1.msra.mxu0 0.0
    %163 = vmatprep.subr.mxu0 0.0
    %164 = vmatpush1.msra.mxu0 0.0
    %165 = vmatprep.subr.mxu0 0.0
    %166 = vmatpush1.msra.mxu0 0.0
    %167 = vmatprep.subr.mxu0 0.0
    %168 = vmatpush1.msra.mxu0 0.0
    %169 = vmatprep.subr.mxu0 0.0
    %170 = vmatpush1.msra.mxu0 0.0
    %171 = vmatprep.subr.mxu0 0.0
    %172 = vmatpush1.msra.mxu0 0.0
    %173 = vmatprep.subr.mxu0 0.0
    %174 = vmatpush1.msra.mxu0 0.0
    %175 = vmatprep.subr.mxu0 0.0
    %176 = vmatpush1.msra.mxu0 0.0
    %177 = vmatprep.subr.mxu0 0.0
    %178 = vmatpush1.msra.mxu0 0.0
    %179 = vmatprep.subr.mxu0 0.0
    %180 = vmatpush1.msra.mxu0 0.0
    %181 = vmatprep.subr.mxu0 0.0
    %182 = vmatpush1.msra.mxu0 0.0
    %183 = vmatprep.subr.mxu0 0.0
    %184 = vmatpush1.msra.mxu0 0.0
    %185 = vmatprep.subr.mxu0 0.0
    %186 = vmatpush1.msra.mxu0 0.0
    %187 = vmatprep.subr.mxu0 0.0
    %188 = vmatpush1.msra.mxu0 0.0
    %189 = vmatprep.subr.mxu0 0.0
    %190 = vmatpush1.msra.mxu0 0.0
    %191 = vmatprep.mubr.f32.mxu0 0.0
    %192 = vmatmul.mubr.f32.gmra.mrb[0].mxu0 %v120
    %v193 = vpop.f32.mrb[0].mxu0
    %v194 = vadd.f32 0.0, %v193
    %v195 = vpop.f32.mrb[0].mxu0
    %v196 = vadd.f32 0.0, %v195
    %197 = vdwg.mxu0
    %198 = vmatprep.subr.mxu0 %v53
    %199 = vmatpush1.msra.mxu0 %v52
    %200 = vmatprep.subr.mxu0 %v57
    %201 = vmatpush1.msra.mxu0 %v56
    %202 = vmatprep.subr.mxu0 %v61
    %203 = vmatpush1.msra.mxu0 %v60
    %204 = vmatprep.subr.mxu0 %v65
    %205 = vmatpush1.msra.mxu0 %v64
    %206 = vmatprep.subr.mxu0 %v69
    %207 = vmatpush1.msra.mxu0 %v68
    %208 = vmatprep.subr.mxu0 %v73
    %209 = vmatpush1.msra.mxu0 %v72
    %210 = vmatprep.subr.mxu0 %v77
    %211 = vmatpush1.msra.mxu0 %v76
    %212 = vmatprep.subr.mxu0 %v81
    %213 = vmatpush1.msra.mxu0 %v80
    %214 = vmatprep.subr.mxu0 %v85
    %215 = vmatpush1.msra.mxu0 %v84
    %216 = vmatprep.subr.mxu0 %v89
    %217 = vmatpush1.msra.mxu0 %v88
    %218 = vmatprep.subr.mxu0 %v93
    %219 = vmatpush1.msra.mxu0 %v92
    %220 = vmatprep.subr.mxu0 %v97
    %221 = vmatpush1.msra.mxu0 %v96
    %222 = vmatprep.subr.mxu0 %v101
    %223 = vmatpush1.msra.mxu0 %v100
    %224 = vmatprep.subr.mxu0 %v105
    %225 = vmatpush1.msra.mxu0 %v104
    %226 = vmatprep.subr.mxu0 %v109
    %227 = vmatpush1.msra.mxu0 %v108
    %228 = vmatprep.subr.mxu0 %v113
    %229 = vmatpush1.msra.mxu0 %v112
    %230 = vmatprep.subr.mxu0 0.0
    %231 = vmatpush1.msra.mxu0 0.0
    %232 = vmatprep.subr.mxu0 0.0
    %233 = vmatpush1.msra.mxu0 0.0
    %234 = vmatprep.subr.mxu0 0.0
    %235 = vmatpush1.msra.mxu0 0.0
    %236 = vmatprep.subr.mxu0 0.0
    %237 = vmatpush1.msra.mxu0 0.0
    %238 = vmatprep.subr.mxu0 0.0
    %239 = vmatpush1.msra.mxu0 0.0
    %240 = vmatprep.subr.mxu0 0.0
    %241 = vmatpush1.msra.mxu0 0.0
    %242 = vmatprep.subr.mxu0 0.0
    %243 = vmatpush1.msra.mxu0 0.0
    %244 = vmatprep.subr.mxu0 0.0
    %245 = vmatpush1.msra.mxu0 0.0
    %246 = vmatprep.subr.mxu0 0.0
    %247 = vmatpush1.msra.mxu0 0.0
    %248 = vmatprep.subr.mxu0 0.0
    %249 = vmatpush1.msra.mxu0 0.0
    %250 = vmatprep.subr.mxu0 0.0
    %251 = vmatpush1.msra.mxu0 0.0
    %252 = vmatprep.subr.mxu0 0.0
    %253 = vmatpush1.msra.mxu0 0.0
    %254 = vmatprep.subr.mxu0 0.0
    %255 = vmatpush1.msra.mxu0 0.0
    %256 = vmatprep.subr.mxu0 0.0
    %257 = vmatpush1.msra.mxu0 0.0
    %258 = vmatprep.subr.mxu0 0.0
    %259 = vmatpush1.msra.mxu0 0.0
    %260 = vmatprep.subr.mxu0 0.0
    %261 = vmatpush1.msra.mxu0 0.0
    %262 = vmatprep.mubr.f32.mxu0 0.0
    %263 = vmatmul.mubr.f32.gmra.mrb[0].mxu0 %v120
    %v264 = vpop.f32.mrb[0].mxu0
    %v265 = vadd.f32 0.0, %v264
    %v266 = vpop.f32.mrb[0].mxu0
    %v267 = vadd.f32 0.0, %v266
    %268 = vdwg.mxu0
    %v273 = vcombine.low %v194, %v196
    %v274 = vcombine.low %v265, %v267
    %v276 = vunpack.c.l.s4 1983009808
    %v277 = vunpack.c.0.s8 %v276
    %v278 = vlaneseq
    %v279 = vshrl.u32 %v278, 7
    %v280 = vsub.s32 %v277, %v279
    %v281 = vrot.slane %v273, %v280
    %v283 = vunpack.c.l.s4 1983009808
    %v284 = vunpack.c.0.s8 %v283
    %v285 = vlaneseq
    %v286 = vshrl.u32 %v285, 7
    %v287 = vsub.s32 %v284, %v286
    %v288 = vrot.slane %v274, %v287
    %v289 = vcombine.low %v281, %v288
    %v291 = vadd.f32 %v126, %v289
    %v292 = vxor.u32 %v291, 2147483648
    %v293 = vmul.f32 %v292, 1.442695
    %v294 = vpow.pop %v293
    %v295 = vadd.f32 %v294, 1.0
    %v296 = vrcp.pop %v295
    %v297 = vmul.f32 1.0, %v296
    %v299 = vrot.slane %v291, 2
    %v301 = vxor.u32 %v299, 2147483648
    %v302 = vmul.f32 %v301, 1.442695
    %v303 = vpow.pop %v302
    %v304 = vadd.f32 %v303, 1.0
    %v305 = vrcp.pop %v304
    %v306 = vmul.f32 1.0, %v305
    %v307 = vrot.slane %v291, 4
    %v309 = vtanh.pop %v307
    %v310 = vrot.slane %v291, 6
    %v312 = vxor.u32 %v310, 2147483648
    %v313 = vmul.f32 %v312, 1.442695
    %v314 = vpow.pop %v313
    %v315 = vadd.f32 %v314, 1.0
    %v316 = vrcp.pop %v315
    %v317 = vmul.f32 1.0, %v316
    %v318 = vmul.f32 %v306, %v121
    %v319 = vmul.f32 %v297, %v309
    %v320 = vadd.f32 %v318, %v319
    %v321 = vtanh.pop %v320
    %v322 = vmul.f32 %v317, %v321
    %s323 = smul.u32 %s122, 2
    %s324 = scalar_lea.vmem [#allocation2], %s323
    %325 = vst [vmem:[%s324] sm:$0x3] %v322
  $region66: #{dkf_v_forward.4} parent=0 // loop_footer
    %s119 = sadd.s32 1, %s115
  $region67: #{dkf_v_forward.4} parent=0 // loop_footer_branch
    %114 = sbr.rel target = $region63
  $region68: #{dkf_v_forward.4} parent=0 // loop_exit
    _
  %v326 = vld [vmem:[%s3] sm:$0xff]
  %v327 = vld [vmem:[%s3 + $0x8] sm:$0xff]
  %v328 = vld [vmem:[%s5] sm:$0xff]
  %v329 = vld [vmem:[%s5 + $0x8] sm:$0xff]
  %v330 = vld [vmem:[%s5 + $0x10] sm:$0xff]
  %v331 = vld [vmem:[%s5 + $0x18] sm:$0xff]
  %v332 = vld [vmem:[%s7] sm:$0xff]
  %v333 = vld [vmem:[%s7 + $0x8] sm:$0xff]
  %v334 = vld [vmem:[%s7 + $0x10] sm:$0xff]
  %v335 = vld [vmem:[%s7 + $0x18] sm:$0xff]
  %v336 = vld [vmem:[%s7 + $0x20] sm:$0xff]
  %v337 = vld [vmem:[%s7 + $0x28] sm:$0xff]
  %v338 = vld [vmem:[%s7 + $0x30] sm:$0xff]
  %v339 = vld [vmem:[%s7 + $0x38] sm:$0xff]
  %v340 = vld [vmem:[%s4] sm:$0x1]
  %v341 = vld [vmem:[%s6] sm:$0x1]
  %v342 = vld [vmem:[%s8] sm:$0x1]
  %v343 = vld [vmem:[%s9] sm:$0xff]
  %v344 = vld [vmem:[%s9 + $0x8] sm:$0xff]
  %v345 = vld [vmem:[%s9 + $0x10] sm:$0xff]
  %v346 = vld [vmem:[%s9 + $0x18] sm:$0xff]
  %v347 = vld [vmem:[%s9 + $0x20] sm:$0xff]
  %v348 = vld [vmem:[%s9 + $0x28] sm:$0xff]
  %v349 = vld [vmem:[%s9 + $0x30] sm:$0xff]
  %v350 = vld [vmem:[%s9 + $0x38] sm:$0xff]
  %v351 = vld [vmem:[%s9 + $0x40] sm:$0xff]
  %v352 = vld [vmem:[%s9 + $0x48] sm:$0xff]
  %v353 = vld [vmem:[%s9 + $0x50] sm:$0xff]
  %v354 = vld [vmem:[%s9 + $0x58] sm:$0xff]
  %v355 = vld [vmem:[%s9 + $0x60] sm:$0xff]
  %v356 = vld [vmem:[%s9 + $0x68] sm:$0xff]
  %v357 = vld [vmem:[%s9 + $0x70] sm:$0xff]
  %v358 = vld [vmem:[%s9 + $0x78] sm:$0xff]
  %v359 = vld [vmem:[%s11] sm:$0xff]
  %v360 = vld [vmem:[%s11 + $0x8] sm:$0xff]
  %v361 = vld [vmem:[%s11 + $0x10] sm:$0xff]
  %v362 = vld [vmem:[%s11 + $0x18] sm:$0xff]
  %v363 = vld [vmem:[%s11 + $0x20] sm:$0xff]
  %v364 = vld [vmem:[%s11 + $0x28] sm:$0xff]
  %v365 = vld [vmem:[%s11 + $0x30] sm:$0xff]
  %v366 = vld [vmem:[%s11 + $0x38] sm:$0xff]
  %v367 = vld [vmem:[%s10] sm:$0x1]
  %v368 = vld [vmem:[%s12] sm:$0x1]
  %v369 = vld [vmem:[%s13] sm:$0xff]
  %v370 = vld [vmem:[%s13 + $0x8] sm:$0xff]
  %v371 = vld [vmem:[%s13 + $0x10] sm:$0xff]
  %v372 = vld [vmem:[%s13 + $0x18] sm:$0xff]
  %v373 = vld [vmem:[%s14] sm:$0x1]
  loop: start=0, step=1, limit=8
  $region69: #{dkf_v_forward.4} parent=0 // loop_pre_header
    _
  $region70: #{dkf_v_forward.4} parent=0 // loop_header
    %s375 = sphi 0, %s379
    %p376 = scmp.ge.s32.totalorder %s375, 8
    %v380 = vphi 0.0, %v875
  $region71: #{dkf_v_forward.4} parent=0 // loop_header_branch
    %378 = sbr.rel (%p376) target = $region75
  $region72: #{dkf_v_forward.4} parent=0 // loop_body
    %v382 = vlaneseq
    %v383 = vshrl.u32 %v382, 7
    %v384 = vsub.s32 0, %v383
    %v385 = vrot.slane %v340, %v384
    %vm387 = vcmask 130048
    %v389 = vsel %vm387, %v380, 0
    %391 = vmatprep.subr.mxu0 0.0
    %392 = vmatpush1.msra.mxu0 %v326
    %393 = vmatprep.subr.mxu0 0.0
    %394 = vmatpush1.msra.mxu0 %v327
    %395 = vmatprep.subr.mxu0 0.0
    %396 = vmatpush1.msra.mxu0 0.0
    %397 = vmatprep.subr.mxu0 0.0
    %398 = vmatpush1.msra.mxu0 0.0
    %399 = vmatprep.subr.mxu0 0.0
    %400 = vmatpush1.msra.mxu0 0.0
    %401 = vmatprep.subr.mxu0 0.0
    %402 = vmatpush1.msra.mxu0 0.0
    %403 = vmatprep.subr.mxu0 0.0
    %404 = vmatpush1.msra.mxu0 0.0
    %405 = vmatprep.subr.mxu0 0.0
    %406 = vmatpush1.msra.mxu0 0.0
    %407 = vmatprep.subr.mxu0 0.0
    %408 = vmatpush1.msra.mxu0 0.0
    %409 = vmatprep.subr.mxu0 0.0
    %410 = vmatpush1.msra.mxu0 0.0
    %411 = vmatprep.subr.mxu0 0.0
    %412 = vmatpush1.msra.mxu0 0.0
    %413 = vmatprep.subr.mxu0 0.0
    %414 = vmatpush1.msra.mxu0 0.0
    %415 = vmatprep.subr.mxu0 0.0
    %416 = vmatpush1.msra.mxu0 0.0
    %417 = vmatprep.subr.mxu0 0.0
    %418 = vmatpush1.msra.mxu0 0.0
    %419 = vmatprep.subr.mxu0 0.0
    %420 = vmatpush1.msra.mxu0 0.0
    %421 = vmatprep.subr.mxu0 0.0
    %422 = vmatpush1.msra.mxu0 0.0
    %423 = vmatprep.subr.mxu0 0.0
    %424 = vmatpush1.msra.mxu0 0.0
    %425 = vmatprep.subr.mxu0 0.0
    %426 = vmatpush1.msra.mxu0 0.0
    %427 = vmatprep.subr.mxu0 0.0
    %428 = vmatpush1.msra.mxu0 0.0
    %429 = vmatprep.subr.mxu0 0.0
    %430 = vmatpush1.msra.mxu0 0.0
    %431 = vmatprep.subr.mxu0 0.0
    %432 = vmatpush1.msra.mxu0 0.0
    %433 = vmatprep.subr.mxu0 0.0
    %434 = vmatpush1.msra.mxu0 0.0
    %435 = vmatprep.subr.mxu0 0.0
    %436 = vmatpush1.msra.mxu0 0.0
    %437 = vmatprep.subr.mxu0 0.0
    %438 = vmatpush1.msra.mxu0 0.0
    %439 = vmatprep.subr.mxu0 0.0
    %440 = vmatpush1.msra.mxu0 0.0
    %441 = vmatprep.subr.mxu0 0.0
    %442 = vmatpush1.msra.mxu0 0.0
    %443 = vmatprep.subr.mxu0 0.0
    %444 = vmatpush1.msra.mxu0 0.0
    %445 = vmatprep.subr.mxu0 0.0
    %446 = vmatpush1.msra.mxu0 0.0
    %447 = vmatprep.subr.mxu0 0.0
    %448 = vmatpush1.msra.mxu0 0.0
    %449 = vmatprep.subr.mxu0 0.0
    %450 = vmatpush1.msra.mxu0 0.0
    %451 = vmatprep.subr.mxu0 0.0
    %452 = vmatpush1.msra.mxu0 0.0
    %453 = vmatprep.subr.mxu0 0.0
    %454 = vmatpush1.msra.mxu0 0.0
    %455 = vmatprep.mubr.f32.mxu0 0.0
    %456 = vmatmul.mubr.f32.gmra.mrb[0].mxu0 %v389
    %v457 = vpop.f32.mrb[0].mxu0
    %v458 = vadd.f32 %v385, %v457
    %v459 = vpop.f32.mrb[0].mxu0
    %460 = vdwg.mxu0
    %v461 = vtanh.pop %v458
    %v463 = vlaneseq
    %v464 = vshrl.u32 %v463, 7
    %v465 = vsub.s32 0, %v464
    %v466 = vrot.slane %v341, %v465
    %vm468 = vcmask 261120
    %v470 = vsel %vm468, %v461, 0
    %472 = vmatprep.subr.mxu0 0.0
    %473 = vmatpush1.msra.mxu0 %v328
    %474 = vmatprep.subr.mxu0 0.0
    %475 = vmatpush1.msra.mxu0 %v329
    %476 = vmatprep.subr.mxu0 0.0
    %477 = vmatpush1.msra.mxu0 %v330
    %478 = vmatprep.subr.mxu0 0.0
    %479 = vmatpush1.msra.mxu0 %v331
    %480 = vmatprep.subr.mxu0 0.0
    %481 = vmatpush1.msra.mxu0 0.0
    %482 = vmatprep.subr.mxu0 0.0
    %483 = vmatpush1.msra.mxu0 0.0
    %484 = vmatprep.subr.mxu0 0.0
    %485 = vmatpush1.msra.mxu0 0.0
    %486 = vmatprep.subr.mxu0 0.0
    %487 = vmatpush1.msra.mxu0 0.0
    %488 = vmatprep.subr.mxu0 0.0
    %489 = vmatpush1.msra.mxu0 0.0
    %490 = vmatprep.subr.mxu0 0.0
    %491 = vmatpush1.msra.mxu0 0.0
    %492 = vmatprep.subr.mxu0 0.0
    %493 = vmatpush1.msra.mxu0 0.0
    %494 = vmatprep.subr.mxu0 0.0
    %495 = vmatpush1.msra.mxu0 0.0
    %496 = vmatprep.subr.mxu0 0.0
    %497 = vmatpush1.msra.mxu0 0.0
    %498 = vmatprep.subr.mxu0 0.0
    %499 = vmatpush1.msra.mxu0 0.0
    %500 = vmatprep.subr.mxu0 0.0
    %501 = vmatpush1.msra.mxu0 0.0
    %502 = vmatprep.subr.mxu0 0.0
    %503 = vmatpush1.msra.mxu0 0.0
    %504 = vmatprep.subr.mxu0 0.0
    %505 = vmatpush1.msra.mxu0 0.0
    %506 = vmatprep.subr.mxu0 0.0
    %507 = vmatpush1.msra.mxu0 0.0
    %508 = vmatprep.subr.mxu0 0.0
    %509 = vmatpush1.msra.mxu0 0.0
    %510 = vmatprep.subr.mxu0 0.0
    %511 = vmatpush1.msra.mxu0 0.0
    %512 = vmatprep.subr.mxu0 0.0
    %513 = vmatpush1.msra.mxu0 0.0
    %514 = vmatprep.subr.mxu0 0.0
    %515 = vmatpush1.msra.mxu0 0.0
    %516 = vmatprep.subr.mxu0 0.0
    %517 = vmatpush1.msra.mxu0 0.0
    %518 = vmatprep.subr.mxu0 0.0
    %519 = vmatpush1.msra.mxu0 0.0
    %520 = vmatprep.subr.mxu0 0.0
    %521 = vmatpush1.msra.mxu0 0.0
    %522 = vmatprep.subr.mxu0 0.0
    %523 = vmatpush1.msra.mxu0 0.0
    %524 = vmatprep.subr.mxu0 0.0
    %525 = vmatpush1.msra.mxu0 0.0
    %526 = vmatprep.subr.mxu0 0.0
    %527 = vmatpush1.msra.mxu0 0.0
    %528 = vmatprep.subr.mxu0 0.0
    %529 = vmatpush1.msra.mxu0 0.0
    %530 = vmatprep.subr.mxu0 0.0
    %531 = vmatpush1.msra.mxu0 0.0
    %532 = vmatprep.subr.mxu0 0.0
    %533 = vmatpush1.msra.mxu0 0.0
    %534 = vmatprep.subr.mxu0 0.0
    %535 = vmatpush1.msra.mxu0 0.0
    %536 = vmatprep.mubr.f32.mxu0 0.0
    %537 = vmatmul.mubr.f32.gmra.mrb[0].mxu0 %v470
    %v538 = vpop.f32.mrb[0].mxu0
    %v539 = vadd.f32 %v466, %v538
    %v540 = vpop.f32.mrb[0].mxu0
    %541 = vdwg.mxu0
    %v542 = vtanh.pop %v539
    %v544 = vlaneseq
    %v545 = vshrl.u32 %v544, 7
    %v546 = vsub.s32 0, %v545
    %v547 = vrot.slane %v342, %v546
    %vm549 = vcmask 523264
    %v551 = vsel %vm549, %v542, 0
    %553 = vmatprep.subr.mxu0 0.0
    %554 = vmatpush1.msra.mxu0 %v332
    %555 = vmatprep.subr.mxu0 0.0
    %556 = vmatpush1.msra.mxu0 %v333
    %557 = vmatprep.subr.mxu0 0.0
    %558 = vmatpush1.msra.mxu0 %v334
    %559 = vmatprep.subr.mxu0 0.0
    %560 = vmatpush1.msra.mxu0 %v335
    %561 = vmatprep.subr.mxu0 0.0
    %562 = vmatpush1.msra.mxu0 %v336
    %563 = vmatprep.subr.mxu0 0.0
    %564 = vmatpush1.msra.mxu0 %v337
    %565 = vmatprep.subr.mxu0 0.0
    %566 = vmatpush1.msra.mxu0 %v338
    %567 = vmatprep.subr.mxu0 0.0
    %568 = vmatpush1.msra.mxu0 %v339
    %569 = vmatprep.subr.mxu0 0.0
    %570 = vmatpush1.msra.mxu0 0.0
    %571 = vmatprep.subr.mxu0 0.0
    %572 = vmatpush1.msra.mxu0 0.0
    %573 = vmatprep.subr.mxu0 0.0
    %574 = vmatpush1.msra.mxu0 0.0
    %575 = vmatprep.subr.mxu0 0.0
    %576 = vmatpush1.msra.mxu0 0.0
    %577 = vmatprep.subr.mxu0 0.0
    %578 = vmatpush1.msra.mxu0 0.0
    %579 = vmatprep.subr.mxu0 0.0
    %580 = vmatpush1.msra.mxu0 0.0
    %581 = vmatprep.subr.mxu0 0.0
    %582 = vmatpush1.msra.mxu0 0.0
    %583 = vmatprep.subr.mxu0 0.0
    %584 = vmatpush1.msra.mxu0 0.0
    %585 = vmatprep.subr.mxu0 0.0
    %586 = vmatpush1.msra.mxu0 0.0
    %587 = vmatprep.subr.mxu0 0.0
    %588 = vmatpush1.msra.mxu0 0.0
    %589 = vmatprep.subr.mxu0 0.0
    %590 = vmatpush1.msra.mxu0 0.0
    %591 = vmatprep.subr.mxu0 0.0
    %592 = vmatpush1.msra.mxu0 0.0
    %593 = vmatprep.subr.mxu0 0.0
    %594 = vmatpush1.msra.mxu0 0.0
    %595 = vmatprep.subr.mxu0 0.0
    %596 = vmatpush1.msra.mxu0 0.0
    %597 = vmatprep.subr.mxu0 0.0
    %598 = vmatpush1.msra.mxu0 0.0
    %599 = vmatprep.subr.mxu0 0.0
    %600 = vmatpush1.msra.mxu0 0.0
    %601 = vmatprep.subr.mxu0 0.0
    %602 = vmatpush1.msra.mxu0 0.0
    %603 = vmatprep.subr.mxu0 0.0
    %604 = vmatpush1.msra.mxu0 0.0
    %605 = vmatprep.subr.mxu0 0.0
    %606 = vmatpush1.msra.mxu0 0.0
    %607 = vmatprep.subr.mxu0 0.0
    %608 = vmatpush1.msra.mxu0 0.0
    %609 = vmatprep.subr.mxu0 0.0
    %610 = vmatpush1.msra.mxu0 0.0
    %611 = vmatprep.subr.mxu0 0.0
    %612 = vmatpush1.msra.mxu0 0.0
    %613 = vmatprep.subr.mxu0 0.0
    %614 = vmatpush1.msra.mxu0 0.0
    %615 = vmatprep.subr.mxu0 0.0
    %616 = vmatpush1.msra.mxu0 0.0
    %617 = vmatprep.mubr.f32.mxu0 0.0
    %618 = vmatmul.mubr.f32.gmra.mrb[0].mxu0 %v551
    %v619 = vpop.f32.mrb[0].mxu0
    %v620 = vadd.f32 %v547, %v619
    %v621 = vpop.f32.mrb[0].mxu0
    %622 = vdwg.mxu0
    %v623 = vtanh.pop %v620
    %s624 = smul.u32 %s375, 2
    %s625 = scalar_lea.vmem [#allocation2], %s624
    %v626 = vld [vmem:[%s625] sm:$0x3]
    %v627 = vadd.f32 %v623, %v626
    %v628 = vmul.f32 %v627, 0.5
    %v630 = vlaneseq
    %v631 = vshrl.u32 %v630, 7
    %v632 = vsub.s32 0, %v631
    %v633 = vrot.slane %v367, %v632
    %635 = vmatprep.subr.mxu0 0.0
    %636 = vmatpush1.msra.mxu0 %v343
    %637 = vmatprep.subr.mxu0 0.0
    %638 = vmatpush1.msra.mxu0 %v344
    %639 = vmatprep.subr.mxu0 0.0
    %640 = vmatpush1.msra.mxu0 %v345
    %641 = vmatprep.subr.mxu0 0.0
    %642 = vmatpush1.msra.mxu0 %v346
    %643 = vmatprep.subr.mxu0 0.0
    %644 = vmatpush1.msra.mxu0 %v347
    %645 = vmatprep.subr.mxu0 0.0
    %646 = vmatpush1.msra.mxu0 %v348
    %647 = vmatprep.subr.mxu0 0.0
    %648 = vmatpush1.msra.mxu0 %v349
    %649 = vmatprep.subr.mxu0 0.0
    %650 = vmatpush1.msra.mxu0 %v350
    %651 = vmatprep.subr.mxu0 0.0
    %652 = vmatpush1.msra.mxu0 %v351
    %653 = vmatprep.subr.mxu0 0.0
    %654 = vmatpush1.msra.mxu0 %v352
    %655 = vmatprep.subr.mxu0 0.0
    %656 = vmatpush1.msra.mxu0 %v353
    %657 = vmatprep.subr.mxu0 0.0
    %658 = vmatpush1.msra.mxu0 %v354
    %659 = vmatprep.subr.mxu0 0.0
    %660 = vmatpush1.msra.mxu0 %v355
    %661 = vmatprep.subr.mxu0 0.0
    %662 = vmatpush1.msra.mxu0 %v356
    %663 = vmatprep.subr.mxu0 0.0
    %664 = vmatpush1.msra.mxu0 %v357
    %665 = vmatprep.subr.mxu0 0.0
    %666 = vmatpush1.msra.mxu0 %v358
    %667 = vmatprep.subr.mxu0 0.0
    %668 = vmatpush1.msra.mxu0 0.0
    %669 = vmatprep.subr.mxu0 0.0
    %670 = vmatpush1.msra.mxu0 0.0
    %671 = vmatprep.subr.mxu0 0.0
    %672 = vmatpush1.msra.mxu0 0.0
    %673 = vmatprep.subr.mxu0 0.0
    %674 = vmatpush1.msra.mxu0 0.0
    %675 = vmatprep.subr.mxu0 0.0
    %676 = vmatpush1.msra.mxu0 0.0
    %677 = vmatprep.subr.mxu0 0.0
    %678 = vmatpush1.msra.mxu0 0.0
    %679 = vmatprep.subr.mxu0 0.0
    %680 = vmatpush1.msra.mxu0 0.0
    %681 = vmatprep.subr.mxu0 0.0
    %682 = vmatpush1.msra.mxu0 0.0
    %683 = vmatprep.subr.mxu0 0.0
    %684 = vmatpush1.msra.mxu0 0.0
    %685 = vmatprep.subr.mxu0 0.0
    %686 = vmatpush1.msra.mxu0 0.0
    %687 = vmatprep.subr.mxu0 0.0
    %688 = vmatpush1.msra.mxu0 0.0
    %689 = vmatprep.subr.mxu0 0.0
    %690 = vmatpush1.msra.mxu0 0.0
    %691 = vmatprep.subr.mxu0 0.0
    %692 = vmatpush1.msra.mxu0 0.0
    %693 = vmatprep.subr.mxu0 0.0
    %694 = vmatpush1.msra.mxu0 0.0
    %695 = vmatprep.subr.mxu0 0.0
    %696 = vmatpush1.msra.mxu0 0.0
    %697 = vmatprep.subr.mxu0 0.0
    %698 = vmatpush1.msra.mxu0 0.0
    %699 = vmatprep.mubr.f32.mxu0 0.0
    %700 = vmatmul.mubr.f32.gmra.mrb[0].mxu0 %v628
    %v701 = vpop.f32.mrb[0].mxu0
    %v702 = vadd.f32 %v633, %v701
    %v703 = vpop.f32.mrb[0].mxu0
    %704 = vdwg.mxu0
    %v705 = vtanh.pop %v702
    %v707 = vlaneseq
    %v708 = vshrl.u32 %v707, 7
    %v709 = vsub.s32 0, %v708
    %v710 = vrot.slane %v368, %v709
    %v713 = vsel %vm549, %v705, 0
    %715 = vmatprep.subr.mxu0 0.0
    %716 = vmatpush1.msra.mxu0 %v359
    %717 = vmatprep.subr.mxu0 0.0
    %718 = vmatpush1.msra.mxu0 %v360
    %719 = vmatprep.subr.mxu0 0.0
    %720 = vmatpush1.msra.mxu0 %v361
    %721 = vmatprep.subr.mxu0 0.0
    %722 = vmatpush1.msra.mxu0 %v362
    %723 = vmatprep.subr.mxu0 0.0
    %724 = vmatpush1.msra.mxu0 %v363
    %725 = vmatprep.subr.mxu0 0.0
    %726 = vmatpush1.msra.mxu0 %v364
    %727 = vmatprep.subr.mxu0 0.0
    %728 = vmatpush1.msra.mxu0 %v365
    %729 = vmatprep.subr.mxu0 0.0
    %730 = vmatpush1.msra.mxu0 %v366
    %731 = vmatprep.subr.mxu0 0.0
    %732 = vmatpush1.msra.mxu0 0.0
    %733 = vmatprep.subr.mxu0 0.0
    %734 = vmatpush1.msra.mxu0 0.0
    %735 = vmatprep.subr.mxu0 0.0
    %736 = vmatpush1.msra.mxu0 0.0
    %737 = vmatprep.subr.mxu0 0.0
    %738 = vmatpush1.msra.mxu0 0.0
    %739 = vmatprep.subr.mxu0 0.0
    %740 = vmatpush1.msra.mxu0 0.0
    %741 = vmatprep.subr.mxu0 0.0
    %742 = vmatpush1.msra.mxu0 0.0
    %743 = vmatprep.subr.mxu0 0.0
    %744 = vmatpush1.msra.mxu0 0.0
    %745 = vmatprep.subr.mxu0 0.0
    %746 = vmatpush1.msra.mxu0 0.0
    %747 = vmatprep.subr.mxu0 0.0
    %748 = vmatpush1.msra.mxu0 0.0
    %749 = vmatprep.subr.mxu0 0.0
    %750 = vmatpush1.msra.mxu0 0.0
    %751 = vmatprep.subr.mxu0 0.0
    %752 = vmatpush1.msra.mxu0 0.0
    %753 = vmatprep.subr.mxu0 0.0
    %754 = vmatpush1.msra.mxu0 0.0
    %755 = vmatprep.subr.mxu0 0.0
    %756 = vmatpush1.msra.mxu0 0.0
    %757 = vmatprep.subr.mxu0 0.0
    %758 = vmatpush1.msra.mxu0 0.0
    %759 = vmatprep.subr.mxu0 0.0
    %760 = vmatpush1.msra.mxu0 0.0
    %761 = vmatprep.subr.mxu0 0.0
    %762 = vmatpush1.msra.mxu0 0.0
    %763 = vmatprep.subr.mxu0 0.0
    %764 = vmatpush1.msra.mxu0 0.0
    %765 = vmatprep.subr.mxu0 0.0
    %766 = vmatpush1.msra.mxu0 0.0
    %767 = vmatprep.subr.mxu0 0.0
    %768 = vmatpush1.msra.mxu0 0.0
    %769 = vmatprep.subr.mxu0 0.0
    %770 = vmatpush1.msra.mxu0 0.0
    %771 = vmatprep.subr.mxu0 0.0
    %772 = vmatpush1.msra.mxu0 0.0
    %773 = vmatprep.subr.mxu0 0.0
    %774 = vmatpush1.msra.mxu0 0.0
    %775 = vmatprep.subr.mxu0 0.0
    %776 = vmatpush1.msra.mxu0 0.0
    %777 = vmatprep.subr.mxu0 0.0
    %778 = vmatpush1.msra.mxu0 0.0
    %779 = vmatprep.mubr.f32.mxu0 0.0
    %780 = vmatmul.mubr.f32.gmra.mrb[0].mxu0 %v713
    %v781 = vpop.f32.mrb[0].mxu0
    %v782 = vadd.f32 %v710, %v781
    %v783 = vpop.f32.mrb[0].mxu0
    %784 = vdwg.mxu0
    %v785 = vtanh.pop %v782
    %v787 = vlaneseq
    %v788 = vshrl.u32 %v787, 7
    %v789 = vsub.s32 0, %v788
    %v790 = vrot.slane %v373, %v789
    %v793 = vsel %vm468, %v785, 0
    %795 = vmatprep.subr.mxu0 0.0
    %796 = vmatpush1.msra.mxu0 %v369
    %797 = vmatprep.subr.mxu0 0.0
    %798 = vmatpush1.msra.mxu0 %v370
    %799 = vmatprep.subr.mxu0 0.0
    %800 = vmatpush1.msra.mxu0 %v371
    %801 = vmatprep.subr.mxu0 0.0
    %802 = vmatpush1.msra.mxu0 %v372
    %803 = vmatprep.subr.mxu0 0.0
    %804 = vmatpush1.msra.mxu0 0.0
    %805 = vmatprep.subr.mxu0 0.0
    %806 = vmatpush1.msra.mxu0 0.0
    %807 = vmatprep.subr.mxu0 0.0
    %808 = vmatpush1.msra.mxu0 0.0
    %809 = vmatprep.subr.mxu0 0.0
    %810 = vmatpush1.msra.mxu0 0.0
    %811 = vmatprep.subr.mxu0 0.0
    %812 = vmatpush1.msra.mxu0 0.0
    %813 = vmatprep.subr.mxu0 0.0
    %814 = vmatpush1.msra.mxu0 0.0
    %815 = vmatprep.subr.mxu0 0.0
    %816 = vmatpush1.msra.mxu0 0.0
    %817 = vmatprep.subr.mxu0 0.0
    %818 = vmatpush1.msra.mxu0 0.0
    %819 = vmatprep.subr.mxu0 0.0
    %820 = vmatpush1.msra.mxu0 0.0
    %821 = vmatprep.subr.mxu0 0.0
    %822 = vmatpush1.msra.mxu0 0.0
    %823 = vmatprep.subr.mxu0 0.0
    %824 = vmatpush1.msra.mxu0 0.0
    %825 = vmatprep.subr.mxu0 0.0
    %826 = vmatpush1.msra.mxu0 0.0
    %827 = vmatprep.subr.mxu0 0.0
    %828 = vmatpush1.msra.mxu0 0.0
    %829 = vmatprep.subr.mxu0 0.0
    %830 = vmatpush1.msra.mxu0 0.0
    %831 = vmatprep.subr.mxu0 0.0
    %832 = vmatpush1.msra.mxu0 0.0
    %833 = vmatprep.subr.mxu0 0.0
    %834 = vmatpush1.msra.mxu0 0.0
    %835 = vmatprep.subr.mxu0 0.0
    %836 = vmatpush1.msra.mxu0 0.0
    %837 = vmatprep.subr.mxu0 0.0
    %838 = vmatpush1.msra.mxu0 0.0
    %839 = vmatprep.subr.mxu0 0.0
    %840 = vmatpush1.msra.mxu0 0.0
    %841 = vmatprep.subr.mxu0 0.0
    %842 = vmatpush1.msra.mxu0 0.0
    %843 = vmatprep.subr.mxu0 0.0
    %844 = vmatpush1.msra.mxu0 0.0
    %845 = vmatprep.subr.mxu0 0.0
    %846 = vmatpush1.msra.mxu0 0.0
    %847 = vmatprep.subr.mxu0 0.0
    %848 = vmatpush1.msra.mxu0 0.0
    %849 = vmatprep.subr.mxu0 0.0
    %850 = vmatpush1.msra.mxu0 0.0
    %851 = vmatprep.subr.mxu0 0.0
    %852 = vmatpush1.msra.mxu0 0.0
    %853 = vmatprep.subr.mxu0 0.0
    %854 = vmatpush1.msra.mxu0 0.0
    %855 = vmatprep.subr.mxu0 0.0
    %856 = vmatpush1.msra.mxu0 0.0
    %857 = vmatprep.subr.mxu0 0.0
    %858 = vmatpush1.msra.mxu0 0.0
    %859 = vmatprep.mubr.f32.mxu0 0.0
    %860 = vmatmul.mubr.f32.gmra.mrb[0].mxu0 %v793
    %v861 = vpop.f32.mrb[0].mxu0
    %v862 = vadd.f32 %v790, %v861
    %v863 = vpop.f32.mrb[0].mxu0
    %864 = vdwg.mxu0
    %s865 = scalar_lea.vmem %s1, %s624
    %v866 = vld [vmem:[%s865] sm:$0x3]
    %v867 = vmul.f32 %v862, 0.5
    %v868 = vmul.f32 %v867, 1.442695
    %v869 = vpow.pop %v868
    %871 = vrot.lane.b32.xlu0 %v869, 112
    %v872 = vpop.permute.xlu0 %871
    %v874 = vmul.f32 %v866, %v872
    %v875 = vadd.f32 %v862, %v874
    %876 = vrot.lane.b32.xlu0 %v380, 16
    %v877 = vpop.permute.xlu0 %876
    %880 = vrot.lane.b32.xlu0 %v862, 32
    %v881 = vpop.permute.xlu0 %880
    %v883 = vsel %vm387, %v875, %v877
    %v884 = vsel %vm468, %v883, %v881
    %s885 = scalar_lea.vmem %s15, %s624
    %vm886 = vcmask 517120
    %887 = vst.msk [vmem:[%s885] sm:$0x3] %vm886, %v884
  $region73: #{dkf_v_forward.4} parent=0 // loop_footer
    %s379 = sadd.s32 1, %s375
  $region74: #{dkf_v_forward.4} parent=0 // loop_footer_branch
    %374 = sbr.rel target = $region70
  $region75: #{dkf_v_forward.4} parent=0 // loop_exit
    _
  // Predicated region
  $region76: #{dkf_v_forward.4} parent=0 // pred_check
    _
  $region77: #{dkf_v_forward.4} parent=0 // pred_check_branch
    %889 = sbr.rel (0) target = $region79
  $region78: #{dkf_v_forward.4} parent=0 // pred_region
    _
  $region79: #{dkf_v_forward.4} parent=0 // pred_fallthru
    _
  // Predicated region
  $region80: #{dkf_v_forward.4} parent=0 // pred_check
    _
  $region81: #{dkf_v_forward.4} parent=0 // pred_check_branch
    %891 = sbr.rel (0) target = $region83
  $region82: #{dkf_v_forward.4} parent=0 // pred_region
    _
  $region83: #{dkf_v_forward.4} parent=0 // pred_fallthru
    _

// kernel: dkf_v_forward.5
$region0: #{dkf_v_forward.5}
  #allocation0 [shape = 'u32[]', space=smem, size = 0x4, offset = 0x4, fixed_abs, tag = 'smem constant byte address 0x4 - core index']
  #allocation1 [shape = 'u32[144,128]{1,0:T(1,128)}', space=vmem, size = 0x12000, scoped, tag = 'internal scratch']
  %s0 = inlined_call_operand.vmem [shape: f32[16,16], index: 0, kind: input, shape index: {}]
  %s1 = inlined_call_operand.vmem [shape: f32[16,16], index: 1, kind: input, shape index: {}]
  %s2 = inlined_call_operand.vmem [shape: f32[16,48], index: 2, kind: input, shape index: {}]
  %s3 = inlined_call_operand.vmem [shape: f32[1,48], index: 3, kind: input, shape index: {}]
  %s4 = inlined_call_operand.vmem [shape: f32[16,16], index: 4, kind: input, shape index: {}]
  %s5 = inlined_call_operand.vmem [shape: f32[1,16], index: 5, kind: input, shape index: {}]
  %s6 = inlined_call_operand.vmem [shape: f32[16,16], index: 6, kind: input, shape index: {}]
  %s7 = inlined_call_operand.vmem [shape: f32[1,16], index: 7, kind: input, shape index: {}]
  %s8 = inlined_call_operand.vmem [shape: f32[16,16], index: 8, kind: input, shape index: {}]
  %s9 = inlined_call_operand.vmem [shape: f32[1,16], index: 9, kind: input, shape index: {}]
  %s10 = inlined_call_operand.vmem [shape: f32[16,32], index: 10, kind: input, shape index: {}]
  %s11 = inlined_call_operand.vmem [shape: f32[1,32], index: 11, kind: input, shape index: {}]
  %s12 = inlined_call_operand.vmem [shape: f32[32,64], index: 12, kind: input, shape index: {}]
  %s13 = inlined_call_operand.vmem [shape: f32[1,64], index: 13, kind: input, shape index: {}]
  %s14 = inlined_call_operand.vmem [shape: f32[64,128], index: 14, kind: input, shape index: {}]
  %s15 = inlined_call_operand.vmem [shape: f32[1,128], index: 15, kind: input, shape index: {}]
  %s16 = inlined_call_operand.vmem [shape: f32[128,256], index: 16, kind: input, shape index: {}]
  %s17 = inlined_call_operand.vmem [shape: f32[1,256], index: 17, kind: input, shape index: {}]
  %s18 = inlined_call_operand.vmem [shape: f32[256,64], index: 18, kind: input, shape index: {}]
  %s19 = inlined_call_operand.vmem [shape: f32[1,64], index: 19, kind: input, shape index: {}]
  %s20 = inlined_call_operand.vmem [shape: f32[16,64], index: 20, kind: output, shape index: {0}]
  %s21 = inlined_call_operand.vmem [shape: f32[16,32], index: 21, kind: output, shape index: {1}]
  %22 = xla_tuple %s20, %s21
  %s23 = sld [smem:[#allocation0]]
  $region98: #{dkf_v_forward.5} parent=0
    _
  %s25 = ssub.s32 1, %s23
  %s26 = scalar_select 0, %s25, %s23
  // Predicated region
  $region2: #{dkf_v_forward.5} parent=0 // pred_check
    _
  $region3: #{dkf_v_forward.5} parent=0 // pred_check_branch
    %28 = sbr.rel (0) target = $region5
  $region4: #{dkf_v_forward.5} parent=0 // pred_region
    _
  $region5: #{dkf_v_forward.5} parent=0 // pred_fallthru
    _
  // Predicated region
  $region6: #{dkf_v_forward.5} parent=0 // pred_check
    _
  $region7: #{dkf_v_forward.5} parent=0 // pred_check_branch
    %30 = sbr.rel (0) target = $region9
  $region8: #{dkf_v_forward.5} parent=0 // pred_region
    _
  $region9: #{dkf_v_forward.5} parent=0 // pred_fallthru
    _
  // Predicated region
  $region10: #{dkf_v_forward.5} parent=0 // pred_check
    _
  $region11: #{dkf_v_forward.5} parent=0 // pred_check_branch
    %32 = sbr.rel (0) target = $region13
  $region12: #{dkf_v_forward.5} parent=0 // pred_region
    _
  $region13: #{dkf_v_forward.5} parent=0 // pred_fallthru
    _
  // Predicated region
  $region14: #{dkf_v_forward.5} parent=0 // pred_check
    _
  $region15: #{dkf_v_forward.5} parent=0 // pred_check_branch
    %34 = sbr.rel (0) target = $region17
  $region16: #{dkf_v_forward.5} parent=0 // pred_region
    _
  $region17: #{dkf_v_forward.5} parent=0 // pred_fallthru
    _
  // Predicated region
  $region18: #{dkf_v_forward.5} parent=0 // pred_check
    _
  $region19: #{dkf_v_forward.5} parent=0 // pred_check_branch
    %36 = sbr.rel (0) target = $region21
  $region20: #{dkf_v_forward.5} parent=0 // pred_region
    _
  $region21: #{dkf_v_forward.5} parent=0 // pred_fallthru
    _
  // Predicated region
  $region22: #{dkf_v_forward.5} parent=0 // pred_check
    _
  $region23: #{dkf_v_forward.5} parent=0 // pred_check_branch
    %38 = sbr.rel (0) target = $region25
  $region24: #{dkf_v_forward.5} parent=0 // pred_region
    _
  $region25: #{dkf_v_forward.5} parent=0 // pred_fallthru
    _
  // Predicated region
  $region26: #{dkf_v_forward.5} parent=0 // pred_check
    _
  $region27: #{dkf_v_forward.5} parent=0 // pred_check_branch
    %40 = sbr.rel (0) target = $region29
  $region28: #{dkf_v_forward.5} parent=0 // pred_region
    _
  $region29: #{dkf_v_forward.5} parent=0 // pred_fallthru
    _
  // Predicated region
  $region30: #{dkf_v_forward.5} parent=0 // pred_check
    _
  $region31: #{dkf_v_forward.5} parent=0 // pred_check_branch
    %42 = sbr.rel (0) target = $region33
  $region32: #{dkf_v_forward.5} parent=0 // pred_region
    _
  $region33: #{dkf_v_forward.5} parent=0 // pred_fallthru
    _
  // Predicated region
  $region34: #{dkf_v_forward.5} parent=0 // pred_check
    _
  $region35: #{dkf_v_forward.5} parent=0 // pred_check_branch
    %44 = sbr.rel (0) target = $region37
  $region36: #{dkf_v_forward.5} parent=0 // pred_region
    _
  $region37: #{dkf_v_forward.5} parent=0 // pred_fallthru
    _
  // Predicated region
  $region38: #{dkf_v_forward.5} parent=0 // pred_check
    _
  $region39: #{dkf_v_forward.5} parent=0 // pred_check_branch
    %46 = sbr.rel (0) target = $region41
  $region40: #{dkf_v_forward.5} parent=0 // pred_region
    _
  $region41: #{dkf_v_forward.5} parent=0 // pred_fallthru
    _
  // Predicated region
  $region42: #{dkf_v_forward.5} parent=0 // pred_check
    _
  $region43: #{dkf_v_forward.5} parent=0 // pred_check_branch
    %48 = sbr.rel (0) target = $region45
  $region44: #{dkf_v_forward.5} parent=0 // pred_region
    _
  $region45: #{dkf_v_forward.5} parent=0 // pred_fallthru
    _
  // Predicated region
  $region46: #{dkf_v_forward.5} parent=0 // pred_check
    _
  $region47: #{dkf_v_forward.5} parent=0 // pred_check_branch
    %50 = sbr.rel (0) target = $region49
  $region48: #{dkf_v_forward.5} parent=0 // pred_region
    _
  $region49: #{dkf_v_forward.5} parent=0 // pred_fallthru
    _
  // Predicated region
  $region50: #{dkf_v_forward.5} parent=0 // pred_check
    _
  $region51: #{dkf_v_forward.5} parent=0 // pred_check_branch
    %52 = sbr.rel (0) target = $region53
  $region52: #{dkf_v_forward.5} parent=0 // pred_region
    _
  $region53: #{dkf_v_forward.5} parent=0 // pred_fallthru
    _
  // Predicated region
  $region54: #{dkf_v_forward.5} parent=0 // pred_check
    _
  $region55: #{dkf_v_forward.5} parent=0 // pred_check_branch
    %54 = sbr.rel (0) target = $region57
  $region56: #{dkf_v_forward.5} parent=0 // pred_region
    _
  $region57: #{dkf_v_forward.5} parent=0 // pred_fallthru
    _
  // Predicated region
  $region58: #{dkf_v_forward.5} parent=0 // pred_check
    _
  $region59: #{dkf_v_forward.5} parent=0 // pred_check_branch
    %56 = sbr.rel (0) target = $region61
  $region60: #{dkf_v_forward.5} parent=0 // pred_region
    _
  $region61: #{dkf_v_forward.5} parent=0 // pred_fallthru
    _
  // Predicated region
  $region62: #{dkf_v_forward.5} parent=0 // pred_check
    _
  $region63: #{dkf_v_forward.5} parent=0 // pred_check_branch
    %58 = sbr.rel (0) target = $region65
  $region64: #{dkf_v_forward.5} parent=0 // pred_region
    _
  $region65: #{dkf_v_forward.5} parent=0 // pred_fallthru
    _
  // Predicated region
  $region66: #{dkf_v_forward.5} parent=0 // pred_check
    _
  $region67: #{dkf_v_forward.5} parent=0 // pred_check_branch
    %60 = sbr.rel (0) target = $region69
  $region68: #{dkf_v_forward.5} parent=0 // pred_region
    _
  $region69: #{dkf_v_forward.5} parent=0 // pred_fallthru
    _
  // Predicated region
  $region70: #{dkf_v_forward.5} parent=0 // pred_check
    _
  $region71: #{dkf_v_forward.5} parent=0 // pred_check_branch
    %62 = sbr.rel (0) target = $region73
  $region72: #{dkf_v_forward.5} parent=0 // pred_region
    _
  $region73: #{dkf_v_forward.5} parent=0 // pred_fallthru
    _
  // Predicated region
  $region74: #{dkf_v_forward.5} parent=0 // pred_check
    _
  $region75: #{dkf_v_forward.5} parent=0 // pred_check_branch
    %64 = sbr.rel (0) target = $region77
  $region76: #{dkf_v_forward.5} parent=0 // pred_region
    _
  $region77: #{dkf_v_forward.5} parent=0 // pred_fallthru
    _
  // Predicated region
  $region78: #{dkf_v_forward.5} parent=0 // pred_check
    _
  $region79: #{dkf_v_forward.5} parent=0 // pred_check_branch
    %66 = sbr.rel (0) target = $region81
  $region80: #{dkf_v_forward.5} parent=0 // pred_region
    _
  $region81: #{dkf_v_forward.5} parent=0 // pred_fallthru
    _
  %v67 = vld [vmem:[%s1] sm:$0xff]
  %v68 = vld [vmem:[%s1 + $0x8] sm:$0xff]
  %v69 = vld [vmem:[%s2] sm:$0xff]
  %v70 = vld [vmem:[%s2 + $0x8] sm:$0xff]
  %v71 = vld [vmem:[%s3] sm:$0x1]
  %v73 = vlaneseq
  %v74 = vshrl.u32 %v73, 7
  %v75 = vsub.s32 0, %v74
  %v76 = vrot.slane %v71, %v75
  %vm78 = vcmask 130048
  %v80 = vsel %vm78, %v67, 0
  %v83 = vsel %vm78, %v68, 0
  %85 = vmatprep.subr.mxu0 0.0
  %86 = vmatpush1.msra.mxu0 %v69
  %87 = vmatprep.subr.mxu0 0.0
  %88 = vmatpush1.msra.mxu0 %v70
  %89 = vmatprep.subr.mxu0 0.0
  %90 = vmatpush1.msra.mxu0 0.0
  %91 = vmatprep.subr.mxu0 0.0
  %92 = vmatpush1.msra.mxu0 0.0
  %93 = vmatprep.subr.mxu0 0.0
  %94 = vmatpush1.msra.mxu0 0.0
  %95 = vmatprep.subr.mxu0 0.0
  %96 = vmatpush1.msra.mxu0 0.0
  %97 = vmatprep.subr.mxu0 0.0
  %98 = vmatpush1.msra.mxu0 0.0
  %99 = vmatprep.subr.mxu0 0.0
  %100 = vmatpush1.msra.mxu0 0.0
  %101 = vmatprep.subr.mxu0 0.0
  %102 = vmatpush1.msra.mxu0 0.0
  %103 = vmatprep.subr.mxu0 0.0
  %104 = vmatpush1.msra.mxu0 0.0
  %105 = vmatprep.subr.mxu0 0.0
  %106 = vmatpush1.msra.mxu0 0.0
  %107 = vmatprep.subr.mxu0 0.0
  %108 = vmatpush1.msra.mxu0 0.0
  %109 = vmatprep.subr.mxu0 0.0
  %110 = vmatpush1.msra.mxu0 0.0
  %111 = vmatprep.subr.mxu0 0.0
  %112 = vmatpush1.msra.mxu0 0.0
  %113 = vmatprep.subr.mxu0 0.0
  %114 = vmatpush1.msra.mxu0 0.0
  %115 = vmatprep.subr.mxu0 0.0
  %116 = vmatpush1.msra.mxu0 0.0
  %117 = vmatprep.subr.mxu0 0.0
  %118 = vmatpush1.msra.mxu0 0.0
  %119 = vmatprep.subr.mxu0 0.0
  %120 = vmatpush1.msra.mxu0 0.0
  %121 = vmatprep.subr.mxu0 0.0
  %122 = vmatpush1.msra.mxu0 0.0
  %123 = vmatprep.subr.mxu0 0.0
  %124 = vmatpush1.msra.mxu0 0.0
  %125 = vmatprep.subr.mxu0 0.0
  %126 = vmatpush1.msra.mxu0 0.0
  %127 = vmatprep.subr.mxu0 0.0
  %128 = vmatpush1.msra.mxu0 0.0
  %129 = vmatprep.subr.mxu0 0.0
  %130 = vmatpush1.msra.mxu0 0.0
  %131 = vmatprep.subr.mxu0 0.0
  %132 = vmatpush1.msra.mxu0 0.0
  %133 = vmatprep.subr.mxu0 0.0
  %134 = vmatpush1.msra.mxu0 0.0
  %135 = vmatprep.subr.mxu0 0.0
  %136 = vmatpush1.msra.mxu0 0.0
  %137 = vmatprep.subr.mxu0 0.0
  %138 = vmatpush1.msra.mxu0 0.0
  %139 = vmatprep.subr.mxu0 0.0
  %140 = vmatpush1.msra.mxu0 0.0
  %141 = vmatprep.subr.mxu0 0.0
  %142 = vmatpush1.msra.mxu0 0.0
  %143 = vmatprep.subr.mxu0 0.0
  %144 = vmatpush1.msra.mxu0 0.0
  %145 = vmatprep.subr.mxu0 0.0
  %146 = vmatpush1.msra.mxu0 0.0
  %147 = vmatprep.subr.mxu0 0.0
  %148 = vmatpush1.msra.mxu0 0.0
  %149 = vmatprep.mubr.f32.mxu0 0.0
  %150 = vmatmul.mubr.f32.gmra.mrb[0].mxu0 %v80
  %v151 = vpop.f32.mrb[0].mxu0
  %v152 = vadd.f32 %v76, %v151
  %v153 = vpop.f32.mrb[0].mxu0
  %154 = vmatprep.mubr.f32.mxu0 0.0
  %155 = vmatmul.mubr.f32.gmra.mrb[0].mxu0 %v83
  %v156 = vpop.f32.mrb[0].mxu0
  %v157 = vadd.f32 %v76, %v156
  %v158 = vpop.f32.mrb[0].mxu0
  %159 = vdwg.mxu0
  %v160 = vmax.f32 %v152, 0.0
  %v161 = vmax.f32 %v157, 0.0
  %v162 = vld [vmem:[%s4] sm:$0xff]
  %v163 = vld [vmem:[%s4 + $0x8] sm:$0xff]
  %v164 = vld [vmem:[%s5] sm:$0x1]
  %v166 = vlaneseq
  %v167 = vshrl.u32 %v166, 7
  %v168 = vsub.s32 0, %v167
  %v169 = vrot.slane %v164, %v168
  %v172 = vsel %vm78, %v160, 0
  %v175 = vsel %vm78, %v161, 0
  %177 = vmatprep.subr.mxu0 0.0
  %178 = vmatpush1.msra.mxu0 %v162
  %179 = vmatprep.subr.mxu0 0.0
  %180 = vmatpush1.msra.mxu0 %v163
  %181 = vmatprep.subr.mxu0 0.0
  %182 = vmatpush1.msra.mxu0 0.0
  %183 = vmatprep.subr.mxu0 0.0
  %184 = vmatpush1.msra.mxu0 0.0
  %185 = vmatprep.subr.mxu0 0.0
  %186 = vmatpush1.msra.mxu0 0.0
  %187 = vmatprep.subr.mxu0 0.0
  %188 = vmatpush1.msra.mxu0 0.0
  %189 = vmatprep.subr.mxu0 0.0
  %190 = vmatpush1.msra.mxu0 0.0
  %191 = vmatprep.subr.mxu0 0.0
  %192 = vmatpush1.msra.mxu0 0.0
  %193 = vmatprep.subr.mxu0 0.0
  %194 = vmatpush1.msra.mxu0 0.0
  %195 = vmatprep.subr.mxu0 0.0
  %196 = vmatpush1.msra.mxu0 0.0
  %197 = vmatprep.subr.mxu0 0.0
  %198 = vmatpush1.msra.mxu0 0.0
  %199 = vmatprep.subr.mxu0 0.0
  %200 = vmatpush1.msra.mxu0 0.0
  %201 = vmatprep.subr.mxu0 0.0
  %202 = vmatpush1.msra.mxu0 0.0
  %203 = vmatprep.subr.mxu0 0.0
  %204 = vmatpush1.msra.mxu0 0.0
  %205 = vmatprep.subr.mxu0 0.0
  %206 = vmatpush1.msra.mxu0 0.0
  %207 = vmatprep.subr.mxu0 0.0
  %208 = vmatpush1.msra.mxu0 0.0
  %209 = vmatprep.subr.mxu0 0.0
  %210 = vmatpush1.msra.mxu0 0.0
  %211 = vmatprep.subr.mxu0 0.0
  %212 = vmatpush1.msra.mxu0 0.0
  %213 = vmatprep.subr.mxu0 0.0
  %214 = vmatpush1.msra.mxu0 0.0
  %215 = vmatprep.subr.mxu0 0.0
  %216 = vmatpush1.msra.mxu0 0.0
  %217 = vmatprep.subr.mxu0 0.0
  %218 = vmatpush1.msra.mxu0 0.0
  %219 = vmatprep.subr.mxu0 0.0
  %220 = vmatpush1.msra.mxu0 0.0
  %221 = vmatprep.subr.mxu0 0.0
  %222 = vmatpush1.msra.mxu0 0.0
  %223 = vmatprep.subr.mxu0 0.0
  %224 = vmatpush1.msra.mxu0 0.0
  %225 = vmatprep.subr.mxu0 0.0
  %226 = vmatpush1.msra.mxu0 0.0
  %227 = vmatprep.subr.mxu0 0.0
  %228 = vmatpush1.msra.mxu0 0.0
  %229 = vmatprep.subr.mxu0 0.0
  %230 = vmatpush1.msra.mxu0 0.0
  %231 = vmatprep.subr.mxu0 0.0
  %232 = vmatpush1.msra.mxu0 0.0
  %233 = vmatprep.subr.mxu0 0.0
  %234 = vmatpush1.msra.mxu0 0.0
  %235 = vmatprep.subr.mxu0 0.0
  %236 = vmatpush1.msra.mxu0 0.0
  %237 = vmatprep.subr.mxu0 0.0
  %238 = vmatpush1.msra.mxu0 0.0
  %239 = vmatprep.subr.mxu0 0.0
  %240 = vmatpush1.msra.mxu0 0.0
  %241 = vmatprep.mubr.f32.mxu0 0.0
  %242 = vmatmul.mubr.f32.gmra.mrb[0].mxu0 %v172
  %v243 = vpop.f32.mrb[0].mxu0
  %v244 = vadd.f32 %v169, %v243
  %v245 = vpop.f32.mrb[0].mxu0
  %246 = vmatprep.mubr.f32.mxu0 0.0
  %247 = vmatmul.mubr.f32.gmra.mrb[0].mxu0 %v175
  %v248 = vpop.f32.mrb[0].mxu0
  %v249 = vadd.f32 %v169, %v248
  %v250 = vpop.f32.mrb[0].mxu0
  %251 = vdwg.mxu0
  %v252 = vxor.u32 %v244, 2147483648
  %v253 = vxor.u32 %v249, 2147483648
  %v254 = vmul.f32 %v252, 1.442695
  %v255 = vpow.pop %v254
  %v256 = vmul.f32 %v253, 1.442695
  %v257 = vpow.pop %v256
  %v258 = vadd.f32 %v255, 1.0
  %v259 = vadd.f32 %v257, 1.0
  %v260 = vrcp.pop %v258
  %v261 = vmul.f32 1.0, %v260
  %v262 = vrcp.pop %v259
  %v263 = vmul.f32 1.0, %v262
  %v264 = vld [vmem:[%s6] sm:$0xff]
  %v265 = vld [vmem:[%s6 + $0x8] sm:$0xff]
  %v266 = vld [vmem:[%s7] sm:$0x1]
  %v268 = vlaneseq
  %v269 = vshrl.u32 %v268, 7
  %v270 = vsub.s32 0, %v269
  %v271 = vrot.slane %v266, %v270
  %273 = vrot.lane.b32.xlu0 %v160, 112
  %v274 = vpop.permute.xlu0 %273
  %275 = vrot.lane.b32.xlu0 %v161, 112
  %v276 = vpop.permute.xlu0 %275
  %v277 = vsel %vm78, %v274, 0
  %v279 = vsel %vm78, %v276, 0
  %281 = vmatprep.subr.mxu0 0.0
  %282 = vmatpush1.msra.mxu0 %v264
  %283 = vmatprep.subr.mxu0 0.0
  %284 = vmatpush1.msra.mxu0 %v265
  %285 = vmatprep.subr.mxu0 0.0
  %286 = vmatpush1.msra.mxu0 0.0
  %287 = vmatprep.subr.mxu0 0.0
  %288 = vmatpush1.msra.mxu0 0.0
  %289 = vmatprep.subr.mxu0 0.0
  %290 = vmatpush1.msra.mxu0 0.0
  %291 = vmatprep.subr.mxu0 0.0
  %292 = vmatpush1.msra.mxu0 0.0
  %293 = vmatprep.subr.mxu0 0.0
  %294 = vmatpush1.msra.mxu0 0.0
  %295 = vmatprep.subr.mxu0 0.0
  %296 = vmatpush1.msra.mxu0 0.0
  %297 = vmatprep.subr.mxu0 0.0
  %298 = vmatpush1.msra.mxu0 0.0
  %299 = vmatprep.subr.mxu0 0.0
  %300 = vmatpush1.msra.mxu0 0.0
  %301 = vmatprep.subr.mxu0 0.0
  %302 = vmatpush1.msra.mxu0 0.0
  %303 = vmatprep.subr.mxu0 0.0
  %304 = vmatpush1.msra.mxu0 0.0
  %305 = vmatprep.subr.mxu0 0.0
  %306 = vmatpush1.msra.mxu0 0.0
  %307 = vmatprep.subr.mxu0 0.0
  %308 = vmatpush1.msra.mxu0 0.0
  %309 = vmatprep.subr.mxu0 0.0
  %310 = vmatpush1.msra.mxu0 0.0
  %311 = vmatprep.subr.mxu0 0.0
  %312 = vmatpush1.msra.mxu0 0.0
  %313 = vmatprep.subr.mxu0 0.0
  %314 = vmatpush1.msra.mxu0 0.0
  %315 = vmatprep.subr.mxu0 0.0
  %316 = vmatpush1.msra.mxu0 0.0
  %317 = vmatprep.subr.mxu0 0.0
  %318 = vmatpush1.msra.mxu0 0.0
  %319 = vmatprep.subr.mxu0 0.0
  %320 = vmatpush1.msra.mxu0 0.0
  %321 = vmatprep.subr.mxu0 0.0
  %322 = vmatpush1.msra.mxu0 0.0
  %323 = vmatprep.subr.mxu0 0.0
  %324 = vmatpush1.msra.mxu0 0.0
  %325 = vmatprep.subr.mxu0 0.0
  %326 = vmatpush1.msra.mxu0 0.0
  %327 = vmatprep.subr.mxu0 0.0
  %328 = vmatpush1.msra.mxu0 0.0
  %329 = vmatprep.subr.mxu0 0.0
  %330 = vmatpush1.msra.mxu0 0.0
  %331 = vmatprep.subr.mxu0 0.0
  %332 = vmatpush1.msra.mxu0 0.0
  %333 = vmatprep.subr.mxu0 0.0
  %334 = vmatpush1.msra.mxu0 0.0
  %335 = vmatprep.subr.mxu0 0.0
  %336 = vmatpush1.msra.mxu0 0.0
  %337 = vmatprep.subr.mxu0 0.0
  %338 = vmatpush1.msra.mxu0 0.0
  %339 = vmatprep.subr.mxu0 0.0
  %340 = vmatpush1.msra.mxu0 0.0
  %341 = vmatprep.subr.mxu0 0.0
  %342 = vmatpush1.msra.mxu0 0.0
  %343 = vmatprep.subr.mxu0 0.0
  %344 = vmatpush1.msra.mxu0 0.0
  %345 = vmatprep.mubr.f32.mxu0 0.0
  %346 = vmatmul.mubr.f32.gmra.mrb[0].mxu0 %v277
  %v347 = vpop.f32.mrb[0].mxu0
  %v348 = vadd.f32 %v271, %v347
  %v349 = vpop.f32.mrb[0].mxu0
  %350 = vmatprep.mubr.f32.mxu0 0.0
  %351 = vmatmul.mubr.f32.gmra.mrb[0].mxu0 %v279
  %v352 = vpop.f32.mrb[0].mxu0
  %v353 = vadd.f32 %v271, %v352
  %v354 = vpop.f32.mrb[0].mxu0
  %355 = vdwg.mxu0
  %v356 = vsub.f32 1.0, %v261
  %v357 = vsub.f32 1.0, %v263
  %360 = vrot.lane.b32.xlu0 %v152, 96
  %v361 = vpop.permute.xlu0 %360
  %362 = vrot.lane.b32.xlu0 %v157, 96
  %v363 = vpop.permute.xlu0 %362
  %v366 = vmul.f32 %v356, %v361
  %v367 = vmul.f32 %v357, %v363
  %v368 = vmul.f32 %v261, %v348
  %v369 = vmul.f32 %v263, %v353
  %v370 = vadd.f32 %v366, %v368
  %v371 = vadd.f32 %v367, %v369
  %v372 = vmax.f32 %v348, 0.0
  %v373 = vmax.f32 %v353, 0.0
  %v374 = vld [vmem:[%s8] sm:$0xff]
  %v375 = vld [vmem:[%s8 + $0x8] sm:$0xff]
  %v376 = vld [vmem:[%s9] sm:$0x1]
  %v378 = vlaneseq
  %v379 = vshrl.u32 %v378, 7
  %v380 = vsub.s32 0, %v379
  %v381 = vrot.slane %v376, %v380
  %v384 = vsel %vm78, %v372, 0
  %v387 = vsel %vm78, %v373, 0
  %389 = vmatprep.subr.mxu0 0.0
  %390 = vmatpush1.msra.mxu0 %v374
  %391 = vmatprep.subr.mxu0 0.0
  %392 = vmatpush1.msra.mxu0 %v375
  %393 = vmatprep.subr.mxu0 0.0
  %394 = vmatpush1.msra.mxu0 0.0
  %395 = vmatprep.subr.mxu0 0.0
  %396 = vmatpush1.msra.mxu0 0.0
  %397 = vmatprep.subr.mxu0 0.0
  %398 = vmatpush1.msra.mxu0 0.0
  %399 = vmatprep.subr.mxu0 0.0
  %400 = vmatpush1.msra.mxu0 0.0
  %401 = vmatprep.subr.mxu0 0.0
  %402 = vmatpush1.msra.mxu0 0.0
  %403 = vmatprep.subr.mxu0 0.0
  %404 = vmatpush1.msra.mxu0 0.0
  %405 = vmatprep.subr.mxu0 0.0
  %406 = vmatpush1.msra.mxu0 0.0
  %407 = vmatprep.subr.mxu0 0.0
  %408 = vmatpush1.msra.mxu0 0.0
  %409 = vmatprep.subr.mxu0 0.0
  %410 = vmatpush1.msra.mxu0 0.0
  %411 = vmatprep.subr.mxu0 0.0
  %412 = vmatpush1.msra.mxu0 0.0
  %413 = vmatprep.subr.mxu0 0.0
  %414 = vmatpush1.msra.mxu0 0.0
  %415 = vmatprep.subr.mxu0 0.0
  %416 = vmatpush1.msra.mxu0 0.0
  %417 = vmatprep.subr.mxu0 0.0
  %418 = vmatpush1.msra.mxu0 0.0
  %419 = vmatprep.subr.mxu0 0.0
  %420 = vmatpush1.msra.mxu0 0.0
  %421 = vmatprep.subr.mxu0 0.0
  %422 = vmatpush1.msra.mxu0 0.0
  %423 = vmatprep.subr.mxu0 0.0
  %424 = vmatpush1.msra.mxu0 0.0
  %425 = vmatprep.subr.mxu0 0.0
  %426 = vmatpush1.msra.mxu0 0.0
  %427 = vmatprep.subr.mxu0 0.0
  %428 = vmatpush1.msra.mxu0 0.0
  %429 = vmatprep.subr.mxu0 0.0
  %430 = vmatpush1.msra.mxu0 0.0
  %431 = vmatprep.subr.mxu0 0.0
  %432 = vmatpush1.msra.mxu0 0.0
  %433 = vmatprep.subr.mxu0 0.0
  %434 = vmatpush1.msra.mxu0 0.0
  %435 = vmatprep.subr.mxu0 0.0
  %436 = vmatpush1.msra.mxu0 0.0
  %437 = vmatprep.subr.mxu0 0.0
  %438 = vmatpush1.msra.mxu0 0.0
  %439 = vmatprep.subr.mxu0 0.0
  %440 = vmatpush1.msra.mxu0 0.0
  %441 = vmatprep.subr.mxu0 0.0
  %442 = vmatpush1.msra.mxu0 0.0
  %443 = vmatprep.subr.mxu0 0.0
  %444 = vmatpush1.msra.mxu0 0.0
  %445 = vmatprep.subr.mxu0 0.0
  %446 = vmatpush1.msra.mxu0 0.0
  %447 = vmatprep.subr.mxu0 0.0
  %448 = vmatpush1.msra.mxu0 0.0
  %449 = vmatprep.subr.mxu0 0.0
  %450 = vmatpush1.msra.mxu0 0.0
  %451 = vmatprep.subr.mxu0 0.0
  %452 = vmatpush1.msra.mxu0 0.0
  %453 = vmatprep.mubr.f32.mxu0 0.0
  %454 = vmatmul.mubr.f32.gmra.mrb[0].mxu0 %v384
  %v455 = vpop.f32.mrb[0].mxu0
  %v456 = vadd.f32 %v381, %v455
  %v457 = vpop.f32.mrb[0].mxu0
  %458 = vmatprep.mubr.f32.mxu0 0.0
  %459 = vmatmul.mubr.f32.gmra.mrb[0].mxu0 %v387
  %v460 = vpop.f32.mrb[0].mxu0
  %v461 = vadd.f32 %v381, %v460
  %v462 = vpop.f32.mrb[0].mxu0
  %463 = vdwg.mxu0
  %v464 = vmax.f32 %v456, 0.0
  %v465 = vmax.f32 %v461, 0.0
  %vm466 = vcmp.ne.f32.partialorder %v456, %v456
  %vm467 = vcmp.ne.f32.partialorder %v461, %v461
  %v468 = vadd.f32 %v456, 0.0
  %v469 = vadd.f32 %v461, 0.0
  %v470 = vand.u32 2147483647, %v456
  %v471 = vand.u32 2147483647, %v461
  %v472 = vsub.f32 0.0, %v470
  %v473 = vsub.f32 0.0, %v471
  %v474 = vmul.f32 %v472, 1.442695
  %v475 = vpow.pop %v474
  %v476 = vmul.f32 %v473, 1.442695
  %v477 = vpow.pop %v476
  %v478 = vadd.f32 %v475, 1.0
  %v479 = vlog2.pop %v478
  %v480 = vmul.f32 %v479, 0.6931472
  %v481 = vmul.f32 -0.5, %v475
  %v482 = vadd.f32 %v481, 1.0
  %v483 = vmul.f32 %v482, %v475
  %v484 = vand.u32 2147483647, %v475
  %vm485 = vcmp.lt.f32.partialorder %v484, 0.0004427343
  %v486 = vsel %vm485, %v483, %v480
  %v487 = vadd.f32 %v477, 1.0
  %v488 = vlog2.pop %v487
  %v489 = vmul.f32 %v488, 0.6931472
  %v490 = vmul.f32 -0.5, %v477
  %v491 = vadd.f32 %v490, 1.0
  %v492 = vmul.f32 %v491, %v477
  %v493 = vand.u32 2147483647, %v477
  %vm494 = vcmp.lt.f32.partialorder %v493, 0.0004427343
  %v495 = vsel %vm494, %v492, %v489
  %v496 = vadd.f32 %v464, %v486
  %v497 = vadd.f32 %v465, %v495
  %v498 = vsel %vm466, %v468, %v496
  %v499 = vsel %vm467, %v469, %v497
  %v500 = vmax.f32 %v498, 1e-37
  %v501 = vmax.f32 %v499, 1e-37
  %v502 = vlog2.pop %v500
  %v503 = vmul.f32 %v502, 0.6931472
  %v504 = vlog2.pop %v501
  %v505 = vmul.f32 %v504, 0.6931472
  %508 = vrot.lane.b32.xlu0 %v503, 16
  %v509 = vpop.permute.xlu0 %508
  %510 = vrot.lane.b32.xlu0 %v505, 16
  %v511 = vpop.permute.xlu0 %510
  %v514 = vsel %vm78, %v370, %v509
  %v515 = vsel %vm78, %v371, %v511
  %vm516 = vcmask 261120
  %517 = vst.msk [vmem:[%s21] sm:$0xff] %vm516, %v514
  %518 = vst.msk [vmem:[%s21 + $0x8] sm:$0xff] %vm516, %v515
  %v519 = vld [vmem:[%s0] sm:$0xff]
  %v520 = vld [vmem:[%s0 + $0x8] sm:$0xff]
  %v521 = vld [vmem:[%s10] sm:$0xff]
  %v522 = vld [vmem:[%s10 + $0x8] sm:$0xff]
  %v523 = vld [vmem:[%s11] sm:$0x1]
  %v525 = vlaneseq
  %v526 = vshrl.u32 %v525, 7
  %v527 = vsub.s32 0, %v526
  %v528 = vrot.slane %v523, %v527
  %v531 = vsel %vm78, %v519, 0
  %v534 = vsel %vm78, %v520, 0
  %536 = vmatprep.subr.mxu0 0.0
  %537 = vmatpush1.msra.mxu0 %v521
  %538 = vmatprep.subr.mxu0 0.0
  %539 = vmatpush1.msra.mxu0 %v522
  %540 = vmatprep.subr.mxu0 0.0
  %541 = vmatpush1.msra.mxu0 0.0
  %542 = vmatprep.subr.mxu0 0.0
  %543 = vmatpush1.msra.mxu0 0.0
  %544 = vmatprep.subr.mxu0 0.0
  %545 = vmatpush1.msra.mxu0 0.0
  %546 = vmatprep.subr.mxu0 0.0
  %547 = vmatpush1.msra.mxu0 0.0
  %548 = vmatprep.subr.mxu0 0.0
  %549 = vmatpush1.msra.mxu0 0.0
  %550 = vmatprep.subr.mxu0 0.0
  %551 = vmatpush1.msra.mxu0 0.0
  %552 = vmatprep.subr.mxu0 0.0
  %553 = vmatpush1.msra.mxu0 0.0
  %554 = vmatprep.subr.mxu0 0.0
  %555 = vmatpush1.msra.mxu0 0.0
  %556 = vmatprep.subr.mxu0 0.0
  %557 = vmatpush1.msra.mxu0 0.0
  %558 = vmatprep.subr.mxu0 0.0
  %559 = vmatpush1.msra.mxu0 0.0
  %560 = vmatprep.subr.mxu0 0.0
  %561 = vmatpush1.msra.mxu0 0.0
  %562 = vmatprep.subr.mxu0 0.0
  %563 = vmatpush1.msra.mxu0 0.0
  %564 = vmatprep.subr.mxu0 0.0
  %565 = vmatpush1.msra.mxu0 0.0
  %566 = vmatprep.subr.mxu0 0.0
  %567 = vmatpush1.msra.mxu0 0.0
  %568 = vmatprep.subr.mxu0 0.0
  %569 = vmatpush1.msra.mxu0 0.0
  %570 = vmatprep.subr.mxu0 0.0
  %571 = vmatpush1.msra.mxu0 0.0
  %572 = vmatprep.subr.mxu0 0.0
  %573 = vmatpush1.msra.mxu0 0.0
  %574 = vmatprep.subr.mxu0 0.0
  %575 = vmatpush1.msra.mxu0 0.0
  %576 = vmatprep.subr.mxu0 0.0
  %577 = vmatpush1.msra.mxu0 0.0
  %578 = vmatprep.subr.mxu0 0.0
  %579 = vmatpush1.msra.mxu0 0.0
  %580 = vmatprep.subr.mxu0 0.0
  %581 = vmatpush1.msra.mxu0 0.0
  %582 = vmatprep.subr.mxu0 0.0
  %583 = vmatpush1.msra.mxu0 0.0
  %584 = vmatprep.subr.mxu0 0.0
  %585 = vmatpush1.msra.mxu0 0.0
  %586 = vmatprep.subr.mxu0 0.0
  %587 = vmatpush1.msra.mxu0 0.0
  %588 = vmatprep.subr.mxu0 0.0
  %589 = vmatpush1.msra.mxu0 0.0
  %590 = vmatprep.subr.mxu0 0.0
  %591 = vmatpush1.msra.mxu0 0.0
  %592 = vmatprep.subr.mxu0 0.0
  %593 = vmatpush1.msra.mxu0 0.0
  %594 = vmatprep.subr.mxu0 0.0
  %595 = vmatpush1.msra.mxu0 0.0
  %596 = vmatprep.subr.mxu0 0.0
  %597 = vmatpush1.msra.mxu0 0.0
  %598 = vmatprep.subr.mxu0 0.0
  %599 = vmatpush1.msra.mxu0 0.0
  %600 = vmatprep.mubr.f32.mxu0 0.0
  %601 = vmatmul.mubr.f32.gmra.mrb[0].mxu0 %v531
  %v602 = vpop.f32.mrb[0].mxu0
  %v603 = vadd.f32 %v528, %v602
  %v604 = vpop.f32.mrb[0].mxu0
  %605 = vmatprep.mubr.f32.mxu0 0.0
  %606 = vmatmul.mubr.f32.gmra.mrb[0].mxu0 %v534
  %v607 = vpop.f32.mrb[0].mxu0
  %v608 = vadd.f32 %v528, %v607
  %v609 = vpop.f32.mrb[0].mxu0
  %610 = vdwg.mxu0
  %v611 = vtanh.pop %v603
  %v612 = vtanh.pop %v608
  %v613 = vld [vmem:[%s12] sm:$0xff]
  %v614 = vld [vmem:[%s12 + $0x8] sm:$0xff]
  %v615 = vld [vmem:[%s12 + $0x10] sm:$0xff]
  %v616 = vld [vmem:[%s12 + $0x18] sm:$0xff]
  %v617 = vld [vmem:[%s13] sm:$0x1]
  %v619 = vlaneseq
  %v620 = vshrl.u32 %v619, 7
  %v621 = vsub.s32 0, %v620
  %v622 = vrot.slane %v617, %v621
  %v625 = vsel %vm516, %v611, 0
  %v628 = vsel %vm516, %v612, 0
  %630 = vmatprep.subr.mxu0 0.0
  %631 = vmatpush1.msra.mxu0 %v613
  %632 = vmatprep.subr.mxu0 0.0
  %633 = vmatpush1.msra.mxu0 %v614
  %634 = vmatprep.subr.mxu0 0.0
  %635 = vmatpush1.msra.mxu0 %v615
  %636 = vmatprep.subr.mxu0 0.0
  %637 = vmatpush1.msra.mxu0 %v616
  %638 = vmatprep.subr.mxu0 0.0
  %639 = vmatpush1.msra.mxu0 0.0
  %640 = vmatprep.subr.mxu0 0.0
  %641 = vmatpush1.msra.mxu0 0.0
  %642 = vmatprep.subr.mxu0 0.0
  %643 = vmatpush1.msra.mxu0 0.0
  %644 = vmatprep.subr.mxu0 0.0
  %645 = vmatpush1.msra.mxu0 0.0
  %646 = vmatprep.subr.mxu0 0.0
  %647 = vmatpush1.msra.mxu0 0.0
  %648 = vmatprep.subr.mxu0 0.0
  %649 = vmatpush1.msra.mxu0 0.0
  %650 = vmatprep.subr.mxu0 0.0
  %651 = vmatpush1.msra.mxu0 0.0
  %652 = vmatprep.subr.mxu0 0.0
  %653 = vmatpush1.msra.mxu0 0.0
  %654 = vmatprep.subr.mxu0 0.0
  %655 = vmatpush1.msra.mxu0 0.0
  %656 = vmatprep.subr.mxu0 0.0
  %657 = vmatpush1.msra.mxu0 0.0
  %658 = vmatprep.subr.mxu0 0.0
  %659 = vmatpush1.msra.mxu0 0.0
  %660 = vmatprep.subr.mxu0 0.0
  %661 = vmatpush1.msra.mxu0 0.0
  %662 = vmatprep.subr.mxu0 0.0
  %663 = vmatpush1.msra.mxu0 0.0
  %664 = vmatprep.subr.mxu0 0.0
  %665 = vmatpush1.msra.mxu0 0.0
  %666 = vmatprep.subr.mxu0 0.0
  %667 = vmatpush1.msra.mxu0 0.0
  %668 = vmatprep.subr.mxu0 0.0
  %669 = vmatpush1.msra.mxu0 0.0
  %670 = vmatprep.subr.mxu0 0.0
  %671 = vmatpush1.msra.mxu0 0.0
  %672 = vmatprep.subr.mxu0 0.0
  %673 = vmatpush1.msra.mxu0 0.0
  %674 = vmatprep.subr.mxu0 0.0
  %675 = vmatpush1.msra.mxu0 0.0
  %676 = vmatprep.subr.mxu0 0.0
  %677 = vmatpush1.msra.mxu0 0.0
  %678 = vmatprep.subr.mxu0 0.0
  %679 = vmatpush1.msra.mxu0 0.0
  %680 = vmatprep.subr.mxu0 0.0
  %681 = vmatpush1.msra.mxu0 0.0
  %682 = vmatprep.subr.mxu0 0.0
  %683 = vmatpush1.msra.mxu0 0.0
  %684 = vmatprep.subr.mxu0 0.0
  %685 = vmatpush1.msra.mxu0 0.0
  %686 = vmatprep.subr.mxu0 0.0
  %687 = vmatpush1.msra.mxu0 0.0
  %688 = vmatprep.subr.mxu0 0.0
  %689 = vmatpush1.msra.mxu0 0.0
  %690 = vmatprep.subr.mxu0 0.0
  %691 = vmatpush1.msra.mxu0 0.0
  %692 = vmatprep.subr.mxu0 0.0
  %693 = vmatpush1.msra.mxu0 0.0
  %694 = vmatprep.mubr.f32.mxu0 0.0
  %695 = vmatmul.mubr.f32.gmra.mrb[0].mxu0 %v625
  %v696 = vpop.f32.mrb[0].mxu0
  %v697 = vadd.f32 %v622, %v696
  %v698 = vpop.f32.mrb[0].mxu0
  %699 = vmatprep.mubr.f32.mxu0 0.0
  %700 = vmatmul.mubr.f32.gmra.mrb[0].mxu0 %v628
  %v701 = vpop.f32.mrb[0].mxu0
  %v702 = vadd.f32 %v622, %v701
  %v703 = vpop.f32.mrb[0].mxu0
  %704 = vdwg.mxu0
  %v705 = vtanh.pop %v697
  %v706 = vtanh.pop %v702
  %v707 = vld [vmem:[%s14] sm:$0xff]
  %v708 = vld [vmem:[%s14 + $0x8] sm:$0xff]
  %v709 = vld [vmem:[%s14 + $0x10] sm:$0xff]
  %v710 = vld [vmem:[%s14 + $0x18] sm:$0xff]
  %v711 = vld [vmem:[%s14 + $0x20] sm:$0xff]
  %v712 = vld [vmem:[%s14 + $0x28] sm:$0xff]
  %v713 = vld [vmem:[%s14 + $0x30] sm:$0xff]
  %v714 = vld [vmem:[%s14 + $0x38] sm:$0xff]
  %v715 = vld [vmem:[%s15] sm:$0x1]
  %v717 = vlaneseq
  %v718 = vshrl.u32 %v717, 7
  %v719 = vsub.s32 0, %v718
  %v720 = vrot.slane %v715, %v719
  %vm722 = vcmask 523264
  %v724 = vsel %vm722, %v705, 0
  %v727 = vsel %vm722, %v706, 0
  %729 = vmatprep.subr.mxu0 0.0
  %730 = vmatpush1.msra.mxu0 %v707
  %731 = vmatprep.subr.mxu0 0.0
  %732 = vmatpush1.msra.mxu0 %v708
  %733 = vmatprep.subr.mxu0 0.0
  %734 = vmatpush1.msra.mxu0 %v709
  %735 = vmatprep.subr.mxu0 0.0
  %736 = vmatpush1.msra.mxu0 %v710
  %737 = vmatprep.subr.mxu0 0.0
  %738 = vmatpush1.msra.mxu0 %v711
  %739 = vmatprep.subr.mxu0 0.0
  %740 = vmatpush1.msra.mxu0 %v712
  %741 = vmatprep.subr.mxu0 0.0
  %742 = vmatpush1.msra.mxu0 %v713
  %743 = vmatprep.subr.mxu0 0.0
  %744 = vmatpush1.msra.mxu0 %v714
  %745 = vmatprep.subr.mxu0 0.0
  %746 = vmatpush1.msra.mxu0 0.0
  %747 = vmatprep.subr.mxu0 0.0
  %748 = vmatpush1.msra.mxu0 0.0
  %749 = vmatprep.subr.mxu0 0.0
  %750 = vmatpush1.msra.mxu0 0.0
  %751 = vmatprep.subr.mxu0 0.0
  %752 = vmatpush1.msra.mxu0 0.0
  %753 = vmatprep.subr.mxu0 0.0
  %754 = vmatpush1.msra.mxu0 0.0
  %755 = vmatprep.subr.mxu0 0.0
  %756 = vmatpush1.msra.mxu0 0.0
  %757 = vmatprep.subr.mxu0 0.0
  %758 = vmatpush1.msra.mxu0 0.0
  %759 = vmatprep.subr.mxu0 0.0
  %760 = vmatpush1.msra.mxu0 0.0
  %761 = vmatprep.subr.mxu0 0.0
  %762 = vmatpush1.msra.mxu0 0.0
  %763 = vmatprep.subr.mxu0 0.0
  %764 = vmatpush1.msra.mxu0 0.0
  %765 = vmatprep.subr.mxu0 0.0
  %766 = vmatpush1.msra.mxu0 0.0
  %767 = vmatprep.subr.mxu0 0.0
  %768 = vmatpush1.msra.mxu0 0.0
  %769 = vmatprep.subr.mxu0 0.0
  %770 = vmatpush1.msra.mxu0 0.0
  %771 = vmatprep.subr.mxu0 0.0
  %772 = vmatpush1.msra.mxu0 0.0
  %773 = vmatprep.subr.mxu0 0.0
  %774 = vmatpush1.msra.mxu0 0.0
  %775 = vmatprep.subr.mxu0 0.0
  %776 = vmatpush1.msra.mxu0 0.0
  %777 = vmatprep.subr.mxu0 0.0
  %778 = vmatpush1.msra.mxu0 0.0
  %779 = vmatprep.subr.mxu0 0.0
  %780 = vmatpush1.msra.mxu0 0.0
  %781 = vmatprep.subr.mxu0 0.0
  %782 = vmatpush1.msra.mxu0 0.0
  %783 = vmatprep.subr.mxu0 0.0
  %784 = vmatpush1.msra.mxu0 0.0
  %785 = vmatprep.subr.mxu0 0.0
  %786 = vmatpush1.msra.mxu0 0.0
  %787 = vmatprep.subr.mxu0 0.0
  %788 = vmatpush1.msra.mxu0 0.0
  %789 = vmatprep.subr.mxu0 0.0
  %790 = vmatpush1.msra.mxu0 0.0
  %791 = vmatprep.subr.mxu0 0.0
  %792 = vmatpush1.msra.mxu0 0.0
  %793 = vmatprep.mubr.f32.mxu0 0.0
  %794 = vmatmul.mubr.f32.gmra.mrb[0].mxu0 %v724
  %v795 = vpop.f32.mrb[0].mxu0
  %v796 = vadd.f32 %v720, %v795
  %v797 = vpop.f32.mrb[0].mxu0
  %798 = vmatprep.mubr.f32.mxu0 0.0
  %799 = vmatmul.mubr.f32.gmra.mrb[0].mxu0 %v727
  %v800 = vpop.f32.mrb[0].mxu0
  %v801 = vadd.f32 %v720, %v800
  %v802 = vpop.f32.mrb[0].mxu0
  %803 = vdwg.mxu0
  %v804 = vtanh.pop %v796
  %v805 = vtanh.pop %v801
  %v806 = vld [vmem:[%s16] sm:$0xff]
  %v807 = vld [vmem:[%s16 + $0x8] sm:$0xff]
  %v808 = vld [vmem:[%s16 + $0x10] sm:$0xff]
  %v809 = vld [vmem:[%s16 + $0x18] sm:$0xff]
  %v810 = vld [vmem:[%s16 + $0x20] sm:$0xff]
  %v811 = vld [vmem:[%s16 + $0x28] sm:$0xff]
  %v812 = vld [vmem:[%s16 + $0x30] sm:$0xff]
  %v813 = vld [vmem:[%s16 + $0x38] sm:$0xff]
  %v814 = vld [vmem:[%s16 + $0x40] sm:$0xff]
  %v815 = vld [vmem:[%s16 + $0x48] sm:$0xff]
  %v816 = vld [vmem:[%s16 + $0x50] sm:$0xff]
  %v817 = vld [vmem:[%s16 + $0x58] sm:$0xff]
  %v818 = vld [vmem:[%s16 + $0x60] sm:$0xff]
  %v819 = vld [vmem:[%s16 + $0x68] sm:$0xff]
  %v820 = vld [vmem:[%s16 + $0x70] sm:$0xff]
  %v821 = vld [vmem:[%s16 + $0x78] sm:$0xff]
  %v822 = vld [vmem:[%s16 + $0x80] sm:$0xff]
  %v823 = vld [vmem:[%s16 + $0x88] sm:$0xff]
  %v824 = vld [vmem:[%s16 + $0x90] sm:$0xff]
  %v825 = vld [vmem:[%s16 + $0x98] sm:$0xff]
  %v826 = vld [vmem:[%s16 + $0xa0] sm:$0xff]
  %v827 = vld [vmem:[%s16 + $0xa8] sm:$0xff]
  %v828 = vld [vmem:[%s16 + $0xb0] sm:$0xff]
  %v829 = vld [vmem:[%s16 + $0xb8] sm:$0xff]
  %v830 = vld [vmem:[%s16 + $0xc0] sm:$0xff]
  %v831 = vld [vmem:[%s16 + $0xc8] sm:$0xff]
  %v832 = vld [vmem:[%s16 + $0xd0] sm:$0xff]
  %v833 = vld [vmem:[%s16 + $0xd8] sm:$0xff]
  %v834 = vld [vmem:[%s16 + $0xe0] sm:$0xff]
  %v835 = vld [vmem:[%s16 + $0xe8] sm:$0xff]
  %v836 = vld [vmem:[%s16 + $0xf0] sm:$0xff]
  %v837 = vld [vmem:[%s16 + $0xf8] sm:$0xff]
  %v838 = vld [vmem:[%s17] sm:$0x3]
  %v840 = vlaneseq
  %v841 = vshrl.u32 %v840, 7
  %v842 = vsub.s32 0, %v841
  %v843 = vrot.slane %v838, %v842
  %v844 = vlaneseq
  %v845 = vshrl.u32 %v844, 7
  %v846 = vsub.s32 1, %v845
  %v847 = vrot.slane %v838, %v846
  %850 = vmatprep.subr.mxu0 %v807
  %851 = vmatpush1.msra.mxu0 %v806
  %852 = vmatprep.subr.mxu0 %v809
  %853 = vmatpush1.msra.mxu0 %v808
  %854 = vmatprep.subr.mxu0 %v811
  %855 = vmatpush1.msra.mxu0 %v810
  %856 = vmatprep.subr.mxu0 %v813
  %857 = vmatpush1.msra.mxu0 %v812
  %858 = vmatprep.subr.mxu0 %v815
  %859 = vmatpush1.msra.mxu0 %v814
  %860 = vmatprep.subr.mxu0 %v817
  %861 = vmatpush1.msra.mxu0 %v816
  %862 = vmatprep.subr.mxu0 %v819
  %863 = vmatpush1.msra.mxu0 %v818
  %864 = vmatprep.subr.mxu0 %v821
  %865 = vmatpush1.msra.mxu0 %v820
  %866 = vmatprep.subr.mxu0 %v823
  %867 = vmatpush1.msra.mxu0 %v822
  %868 = vmatprep.subr.mxu0 %v825
  %869 = vmatpush1.msra.mxu0 %v824
  %870 = vmatprep.subr.mxu0 %v827
  %871 = vmatpush1.msra.mxu0 %v826
  %872 = vmatprep.subr.mxu0 %v829
  %873 = vmatpush1.msra.mxu0 %v828
  %874 = vmatprep.subr.mxu0 %v831
  %875 = vmatpush1.msra.mxu0 %v830
  %876 = vmatprep.subr.mxu0 %v833
  %877 = vmatpush1.msra.mxu0 %v832
  %878 = vmatprep.subr.mxu0 %v835
  %879 = vmatpush1.msra.mxu0 %v834
  %880 = vmatprep.subr.mxu0 %v837
  %881 = vmatpush1.msra.mxu0 %v836
  %882 = vmatprep.subr.mxu0 0.0
  %883 = vmatpush1.msra.mxu0 0.0
  %884 = vmatprep.subr.mxu0 0.0
  %885 = vmatpush1.msra.mxu0 0.0
  %886 = vmatprep.subr.mxu0 0.0
  %887 = vmatpush1.msra.mxu0 0.0
  %888 = vmatprep.subr.mxu0 0.0
  %889 = vmatpush1.msra.mxu0 0.0
  %890 = vmatprep.subr.mxu0 0.0
  %891 = vmatpush1.msra.mxu0 0.0
  %892 = vmatprep.subr.mxu0 0.0
  %893 = vmatpush1.msra.mxu0 0.0
  %894 = vmatprep.subr.mxu0 0.0
  %895 = vmatpush1.msra.mxu0 0.0
  %896 = vmatprep.subr.mxu0 0.0
  %897 = vmatpush1.msra.mxu0 0.0
  %898 = vmatprep.subr.mxu0 0.0
  %899 = vmatpush1.msra.mxu0 0.0
  %900 = vmatprep.subr.mxu0 0.0
  %901 = vmatpush1.msra.mxu0 0.0
  %902 = vmatprep.subr.mxu0 0.0
  %903 = vmatpush1.msra.mxu0 0.0
  %904 = vmatprep.subr.mxu0 0.0
  %905 = vmatpush1.msra.mxu0 0.0
  %906 = vmatprep.subr.mxu0 0.0
  %907 = vmatpush1.msra.mxu0 0.0
  %908 = vmatprep.subr.mxu0 0.0
  %909 = vmatpush1.msra.mxu0 0.0
  %910 = vmatprep.subr.mxu0 0.0
  %911 = vmatpush1.msra.mxu0 0.0
  %912 = vmatprep.subr.mxu0 0.0
  %913 = vmatpush1.msra.mxu0 0.0
  %914 = vmatprep.mubr.f32.mxu0 0.0
  %915 = vmatmul.mubr.f32.gmra.mrb[0].mxu0 %v804
  %v916 = vpop.f32.mrb[0].mxu0
  %v917 = vadd.f32 %v843, %v916
  %v918 = vpop.f32.mrb[0].mxu0
  %v919 = vadd.f32 %v847, %v918
  %920 = vmatprep.mubr.f32.mxu0 0.0
  %921 = vmatmul.mubr.f32.gmra.mrb[0].mxu0 %v805
  %v922 = vpop.f32.mrb[0].mxu0
  %v923 = vadd.f32 %v843, %v922
  %v924 = vpop.f32.mrb[0].mxu0
  %v925 = vadd.f32 %v847, %v924
  %926 = vdwg.mxu0
  %v927 = vtanh.pop %v917
  %v928 = vtanh.pop %v919
  %v929 = vtanh.pop %v923
  %v930 = vtanh.pop %v925
  %v931 = vld [vmem:[%s18] sm:$0xff]
  %v932 = vld [vmem:[%s18 + $0x8] sm:$0xff]
  %v933 = vld [vmem:[%s18 + $0x10] sm:$0xff]
  %v934 = vld [vmem:[%s18 + $0x18] sm:$0xff]
  %v935 = vld [vmem:[%s18 + $0x20] sm:$0xff]
  %v936 = vld [vmem:[%s18 + $0x28] sm:$0xff]
  %v937 = vld [vmem:[%s18 + $0x30] sm:$0xff]
  %v938 = vld [vmem:[%s18 + $0x38] sm:$0xff]
  %v939 = vld [vmem:[%s18 + $0x40] sm:$0xff]
  %v940 = vld [vmem:[%s18 + $0x48] sm:$0xff]
  %v941 = vld [vmem:[%s18 + $0x50] sm:$0xff]
  %v942 = vld [vmem:[%s18 + $0x58] sm:$0xff]
  %v943 = vld [vmem:[%s18 + $0x60] sm:$0xff]
  %v944 = vld [vmem:[%s18 + $0x68] sm:$0xff]
  %v945 = vld [vmem:[%s18 + $0x70] sm:$0xff]
  %v946 = vld [vmem:[%s18 + $0x78] sm:$0xff]
  %v947 = vld [vmem:[%s18 + $0x80] sm:$0xff]
  %v948 = vld [vmem:[%s18 + $0x88] sm:$0xff]
  %v949 = vld [vmem:[%s18 + $0x90] sm:$0xff]
  %v950 = vld [vmem:[%s18 + $0x98] sm:$0xff]
  %v951 = vld [vmem:[%s18 + $0xa0] sm:$0xff]
  %v952 = vld [vmem:[%s18 + $0xa8] sm:$0xff]
  %v953 = vld [vmem:[%s18 + $0xb0] sm:$0xff]
  %v954 = vld [vmem:[%s18 + $0xb8] sm:$0xff]
  %v955 = vld [vmem:[%s18 + $0xc0] sm:$0xff]
  %v956 = vld [vmem:[%s18 + $0xc8] sm:$0xff]
  %v957 = vld [vmem:[%s18 + $0xd0] sm:$0xff]
  %v958 = vld [vmem:[%s18 + $0xd8] sm:$0xff]
  %v959 = vld [vmem:[%s18 + $0xe0] sm:$0xff]
  %v960 = vld [vmem:[%s18 + $0xe8] sm:$0xff]
  %v961 = vld [vmem:[%s18 + $0xf0] sm:$0xff]
  %v962 = vld [vmem:[%s18 + $0xf8] sm:$0xff]
  %v963 = vld [vmem:[%s19] sm:$0x1]
  %v965 = vlaneseq
  %v966 = vshrl.u32 %v965, 7
  %v967 = vsub.s32 0, %v966
  %v968 = vrot.slane %v963, %v967
  %970 = vmatprep.subr.mxu0 0.0
  %971 = vmatpush1.msra.mxu0 %v931
  %972 = vmatprep.subr.mxu0 0.0
  %973 = vmatpush1.msra.mxu0 %v932
  %974 = vmatprep.subr.mxu0 0.0
  %975 = vmatpush1.msra.mxu0 %v933
  %976 = vmatprep.subr.mxu0 0.0
  %977 = vmatpush1.msra.mxu0 %v934
  %978 = vmatprep.subr.mxu0 0.0
  %979 = vmatpush1.msra.mxu0 %v935
  %980 = vmatprep.subr.mxu0 0.0
  %981 = vmatpush1.msra.mxu0 %v936
  %982 = vmatprep.subr.mxu0 0.0
  %983 = vmatpush1.msra.mxu0 %v937
  %984 = vmatprep.subr.mxu0 0.0
  %985 = vmatpush1.msra.mxu0 %v938
  %986 = vmatprep.subr.mxu0 0.0
  %987 = vmatpush1.msra.mxu0 %v939
  %988 = vmatprep.subr.mxu0 0.0
  %989 = vmatpush1.msra.mxu0 %v940
  %990 = vmatprep.subr.mxu0 0.0
  %991 = vmatpush1.msra.mxu0 %v941
  %992 = vmatprep.subr.mxu0 0.0
  %993 = vmatpush1.msra.mxu0 %v942
  %994 = vmatprep.subr.mxu0 0.0
  %995 = vmatpush1.msra.mxu0 %v943
  %996 = vmatprep.subr.mxu0 0.0
  %997 = vmatpush1.msra.mxu0 %v944
  %998 = vmatprep.subr.mxu0 0.0
  %999 = vmatpush1.msra.mxu0 %v945
  %1000 = vmatprep.subr.mxu0 0.0
  %1001 = vmatpush1.msra.mxu0 %v946
  %1002 = vmatprep.subr.mxu0 0.0
  %1003 = vmatpush1.msra.mxu0 %v947
  %1004 = vmatprep.subr.mxu0 0.0
  %1005 = vmatpush1.msra.mxu0 %v948
  %1006 = vmatprep.subr.mxu0 0.0
  %1007 = vmatpush1.msra.mxu0 %v949
  %1008 = vmatprep.subr.mxu0 0.0
  %1009 = vmatpush1.msra.mxu0 %v950
  %1010 = vmatprep.subr.mxu0 0.0
  %1011 = vmatpush1.msra.mxu0 %v951
  %1012 = vmatprep.subr.mxu0 0.0
  %1013 = vmatpush1.msra.mxu0 %v952
  %1014 = vmatprep.subr.mxu0 0.0
  %1015 = vmatpush1.msra.mxu0 %v953
  %1016 = vmatprep.subr.mxu0 0.0
  %1017 = vmatpush1.msra.mxu0 %v954
  %1018 = vmatprep.subr.mxu0 0.0
  %1019 = vmatpush1.msra.mxu0 %v955
  %1020 = vmatprep.subr.mxu0 0.0
  %1021 = vmatpush1.msra.mxu0 %v956
  %1022 = vmatprep.subr.mxu0 0.0
  %1023 = vmatpush1.msra.mxu0 %v957
  %1024 = vmatprep.subr.mxu0 0.0
  %1025 = vmatpush1.msra.mxu0 %v958
  %1026 = vmatprep.subr.mxu0 0.0
  %1027 = vmatpush1.msra.mxu0 %v959
  %1028 = vmatprep.subr.mxu0 0.0
  %1029 = vmatpush1.msra.mxu0 %v960
  %1030 = vmatprep.subr.mxu0 0.0
  %1031 = vmatpush1.msra.mxu0 %v961
  %1032 = vmatprep.subr.mxu0 0.0
  %1033 = vmatpush1.msra.mxu0 %v962
  %1034 = vmatprep.mubr.f32.mxu0 %v928
  %1035 = vmatmul.mubr.f32.gmra.mrb[0].mxu0 %v927
  %v1036 = vpop.f32.mrb[0].mxu0
  %v1037 = vadd.f32 %v968, %v1036
  %v1038 = vpop.f32.mrb[0].mxu0
  %1039 = vmatprep.mubr.f32.mxu0 %v930
  %1040 = vmatmul.mubr.f32.gmra.mrb[0].mxu0 %v929
  %v1041 = vpop.f32.mrb[0].mxu0
  %v1042 = vadd.f32 %v968, %v1041
  %v1043 = vpop.f32.mrb[0].mxu0
  %1044 = vdwg.mxu0
  %v1045 = vmul.f32 %v1037, 1.442695
  %v1046 = vpow.pop %v1045
  %v1047 = vmul.f32 %v1042, 1.442695
  %v1048 = vpow.pop %v1047
  %1049 = vst.msk [vmem:[%s20] sm:$0xff] %vm722, %v1046
  %1050 = vst.msk [vmem:[%s20 + $0x8] sm:$0xff] %vm722, %v1048
  // Predicated region
  $region82: #{dkf_v_forward.5} parent=0 // pred_check
    _
  $region83: #{dkf_v_forward.5} parent=0 // pred_check_branch
    %1052 = sbr.rel (0) target = $region85
  $region84: #{dkf_v_forward.5} parent=0 // pred_region
    _
  $region85: #{dkf_v_forward.5} parent=0 // pred_fallthru
    _
  // Predicated region
  $region86: #{dkf_v_forward.5} parent=0 // pred_check
    _
  $region87: #{dkf_v_forward.5} parent=0 // pred_check_branch
    %1054 = sbr.rel (0) target = $region89
  $region88: #{dkf_v_forward.5} parent=0 // pred_region
    _
  $region89: #{dkf_v_forward.5} parent=0 // pred_fallthru
    _
  // Predicated region
  $region90: #{dkf_v_forward.5} parent=0 // pred_check
    _
  $region91: #{dkf_v_forward.5} parent=0 // pred_check_branch
    %1056 = sbr.rel (0) target = $region93
  $region92: #{dkf_v_forward.5} parent=0 // pred_region
    _
  $region93: #{dkf_v_forward.5} parent=0 // pred_fallthru
    _
  // Predicated region
  $region94: #{dkf_v_forward.5} parent=0 // pred_check
    _
  $region95: #{dkf_v_forward.5} parent=0 // pred_check_branch
    %1058 = sbr.rel (0) target = $region97
  $region96: #{dkf_v_forward.5} parent=0 // pred_region
    _
  $region97: #{dkf_v_forward.5} parent=0 // pred_fallthru
    _

</llo_original>
